<compile_context>
chip_gen: v6e
topology: v6e:2x2x1
jax: 0.10.0
libtpu: 0.0.40
codegen_flags: <defaults>
</compile_context>

<pallas_src>
import functools

import jax
import jax.numpy as jnp
from jax import lax
from jax.experimental import pallas as pl
from jax.experimental.pallas import tpu as pltpu


_MXU_DTYPE = jnp.bfloat16  # MXU operand dtype; accumulation stays float32.


# ------------------------- fused attention branch ---------------------------

def _branch_kernel(*refs, scale, num_heads, head_dim, has_bias, has_context):
    """Whole ContextAwareAttention branch for one batch element.

    refs layout (inputs then the single output):
      x, [context], wq, wkv, wo, bo, [bias], [ctx_w1, ctx_b1, ctx_g, ctx_beta,
      ctx_w2, ctx_b2], out
    """
    o_ref = refs[-1]
    idx = 0
    x_ref = refs[idx]; idx += 1
    if has_context:
        kv_ref = refs[idx]; idx += 1
    else:
        kv_ref = x_ref
    wq_ref = refs[idx]; wkv_ref = refs[idx + 1]
    wo_ref = refs[idx + 2]; bo_ref = refs[idx + 3]
    idx += 4
    bias_ref = None
    if has_bias:
        bias_ref = refs[idx]; idx += 1
    if has_context:
        cw1, cb1, cg, cbe, cw2, cb2 = refs[idx:idx + 6]

    inner = num_heads * head_dim
    x = x_ref[0]                      # (N, dim)  bf16
    kv = kv_ref[0]                    # (Nk, dim) bf16
    n = x.shape[0]
    dim = o_ref.shape[-1]

    # Projections: q and fused k|v, f32 accumulation on the MXU.
    q_all = jnp.dot(x, wq_ref[...], preferred_element_type=jnp.float32)     # (N, inner)
    kv_all = jnp.dot(kv, wkv_ref[...], preferred_element_type=jnp.float32)  # (Nk, 2*inner)
    k_all = kv_all[:, :inner]
    v_all = kv_all[:, inner:]

    wo_full = wo_ref[...]             # (inner, dim) bf16

    acc = jnp.zeros((n, dim), jnp.float32)
    for h in range(num_heads):        # static unroll; heads amortized per grid step
        lo = h * head_dim
        q_h = q_all[:, lo:lo + head_dim] * scale           # (N, D)  f32
        k_h = k_all[:, lo:lo + head_dim]                   # (Nk, D) f32
        v_h = v_all[:, lo:lo + head_dim]                   # (Nk, D) f32

        s = lax.dot_general(q_h.astype(_MXU_DTYPE), k_h.astype(_MXU_DTYPE),
                            (((1,), (1,)), ((), ())),
                            preferred_element_type=jnp.float32)             # (N, Nk)
        if has_bias:
            s = s + bias_ref[h]

        m = jnp.max(s, axis=-1, keepdims=True)
        p = jnp.exp(s - m)
        denom = jnp.sum(p, axis=-1, keepdims=True)
        attn = p * pl.reciprocal(denom, approx=True)

        o_h = jnp.dot(attn.astype(_MXU_DTYPE), v_h.astype(_MXU_DTYPE),
                      preferred_element_type=jnp.float32)                   # (N, D)
        # Output projection, accumulated head by head.
        acc = acc + jnp.dot(o_h.astype(_MXU_DTYPE), wo_full[lo:lo + head_dim, :],
                            preferred_element_type=jnp.float32)             # (N, dim)

    out = acc + bo_ref[...]

    if has_context:
        # to_context: Linear -> LayerNorm(eps=1e-5) -> ReLU -> Linear, + residual.
        c = jnp.dot(kv, cw1[...], preferred_element_type=jnp.float32) + cb1[...]
        mu = jnp.mean(c, axis=-1, keepdims=True)
        var = jnp.mean(jnp.square(c - mu), axis=-1, keepdims=True)
        c = (c - mu) * lax.rsqrt(var + 1e-5)
        c = c * cg[...] + cbe[...]
        c = jnp.maximum(c, 0.0)
        c2 = jnp.dot(c.astype(_MXU_DTYPE), cw2[...],
                     preferred_element_type=jnp.float32) + cb2[...]
        out = out + c2

    o_ref[0] = out.astype(o_ref.dtype)


def context_aware_attention(p, x, context, bias_hnn, num_heads, head_dim):
    """Fused ContextAwareAttention forward (one pallas_call, grid over batch)."""
    B, N, dim = x.shape
    inner = num_heads * head_dim
    scale = head_dim ** (-0.5)
    has_context = context is not None
    has_bias = bias_hnn is not None

    inputs = [x.astype(_MXU_DTYPE)]
    in_specs = [pl.BlockSpec((1, N, dim), lambda b: (b, 0, 0))]
    if has_context:
        Nk = context.shape[1]
        inputs.append(context.astype(_MXU_DTYPE))
        in_specs.append(pl.BlockSpec((1, Nk, dim), lambda b: (b, 0, 0)))
    else:
        Nk = N

    wq = p["wq"].astype(_MXU_DTYPE)
    wkv = jnp.concatenate([p["wk"], p["wv"]], axis=1).astype(_MXU_DTYPE)
    wo = p["wo"].astype(_MXU_DTYPE)
    bo = p["bo"].reshape(1, dim)
    inputs += [wq, wkv, wo, bo]
    in_specs += [pl.BlockSpec((dim, inner), lambda b: (0, 0)),
                 pl.BlockSpec((dim, 2 * inner), lambda b: (0, 0)),
                 pl.BlockSpec((inner, dim), lambda b: (0, 0)),
                 pl.BlockSpec((1, dim), lambda b: (0, 0))]

    if has_bias:
        inputs.append(bias_hnn.astype(jnp.float32))
        in_specs.append(pl.BlockSpec((num_heads, N, Nk), lambda b: (0, 0, 0)))

    if has_context:
        inputs += [p["ctx_w1"].astype(_MXU_DTYPE), p["ctx_b1"].reshape(1, dim),
                   p["ctx_g"].reshape(1, dim), p["ctx_beta"].reshape(1, dim),
                   p["ctx_w2"].astype(_MXU_DTYPE), p["ctx_b2"].reshape(1, dim)]
        in_specs += [pl.BlockSpec((dim, dim), lambda b: (0, 0)),
                     pl.BlockSpec((1, dim), lambda b: (0, 0)),
                     pl.BlockSpec((1, dim), lambda b: (0, 0)),
                     pl.BlockSpec((1, dim), lambda b: (0, 0)),
                     pl.BlockSpec((dim, dim), lambda b: (0, 0)),
                     pl.BlockSpec((1, dim), lambda b: (0, 0))]

    kern = functools.partial(_branch_kernel, scale=scale, num_heads=num_heads,
                             head_dim=head_dim, has_bias=has_bias,
                             has_context=has_context)
    return pl.pallas_call(
        kern,
        grid=(B,),
        in_specs=in_specs,
        out_specs=pl.BlockSpec((1, N, dim), lambda b: (b, 0, 0)),
        out_shape=jax.ShapeDtypeStruct((B, N, dim), jnp.float32),
        compiler_params=pltpu.CompilerParams(
            dimension_semantics=("parallel",)),
    )(*inputs)


# ------------------------------ fusion head ---------------------------------

def _fusion_kernel(x_ref, w1_ref, b1_ref, g_ref, be_ref, w2_ref, b2_ref, o_ref):
    # Linear -> LayerNorm(eps=1e-5) -> ReLU -> Linear  (Dropout p=0 => identity)
    x = x_ref[...]
    h = jnp.dot(x, w1_ref[...], preferred_element_type=jnp.float32) + b1_ref[...]
    mu = jnp.mean(h, axis=-1, keepdims=True)
    var = jnp.mean(jnp.square(h - mu), axis=-1, keepdims=True)
    h = (h - mu) * lax.rsqrt(var + 1e-5)
    h = h * g_ref[...] + be_ref[...]
    h = jnp.maximum(h, 0.0)
    y = jnp.dot(h.astype(w2_ref.dtype), w2_ref[...],
                preferred_element_type=jnp.float32) + b2_ref[...]
    o_ref[...] = y.astype(o_ref.dtype)


def _pick_row_tile(m):
    for tm in (512, 256, 128, 64, 32, 16, 8):
        if m >= tm and m % tm == 0:
            return tm
    return m


def fusion_mlp_pallas(x, w1, b1, gamma, beta, w2, b2):
    M, Din = x.shape
    D1 = w1.shape[1]
    D2 = w2.shape[1]
    TM = _pick_row_tile(M)
    # TODO(synk): for very large B*N on v7x, cap TM so double-buffered blocks +
    # weights stay well under the 64 MiB VMEM and set vmem_limit_bytes.
    return pl.pallas_call(
        _fusion_kernel,
        grid=(M // TM,),
        in_specs=[pl.BlockSpec((TM, Din), lambda i: (i, 0)),
                  pl.BlockSpec((Din, D1), lambda i: (0, 0)),
                  pl.BlockSpec((1, D1), lambda i: (0, 0)),
                  pl.BlockSpec((1, D1), lambda i: (0, 0)),
                  pl.BlockSpec((1, D1), lambda i: (0, 0)),
                  pl.BlockSpec((D1, D2), lambda i: (0, 0)),
                  pl.BlockSpec((1, D2), lambda i: (0, 0))],
        out_specs=pl.BlockSpec((TM, D2), lambda i: (i, 0)),
        out_shape=jax.ShapeDtypeStruct((M, D2), jnp.float32),
        compiler_params=pltpu.CompilerParams(
            dimension_semantics=("parallel",)),
    )(x.astype(_MXU_DTYPE), w1.astype(_MXU_DTYPE), b1.reshape(1, D1),
      gamma.reshape(1, D1), beta.reshape(1, D1), w2.astype(_MXU_DTYPE),
      b2.reshape(1, D2))


# ------------------------- parameter construction ---------------------------

def init_attn_params(key, dim, num_heads, head_dim, window_size=None):
    inner = num_heads * head_dim
    ks = jax.random.split(key, 10)

    def w(k, shape):
        return 0.02 * jax.random.normal(k, shape, jnp.float32)

    p = dict(
        # weights stored pre-transposed (Din, Dout); q/k/v have no bias
        wq=w(ks[0], (dim, inner)),
        wk=w(ks[1], (dim, inner)),
        wv=w(ks[2], (dim, inner)),
        wo=w(ks[3], (inner, dim)), bo=w(ks[4], (dim,)),
        # to_context: Linear(dim,dim) + LayerNorm(dim) + ReLU + Linear(dim,dim)
        ctx_w1=w(ks[5], (dim, dim)), ctx_b1=w(ks[6], (dim,)),
        ctx_g=jnp.ones((dim,), jnp.float32),
        ctx_beta=jnp.zeros((dim,), jnp.float32),
        ctx_w2=w(ks[7], (dim, dim)), ctx_b2=w(ks[8], (dim,)),
    )
    if window_size is not None:
        p["rpb_table"] = w(ks[9], ((2 * window_size - 1) ** 2, num_heads))
    return p


def init_global_local_params(key, dim, num_heads, head_dim, window_size):
    kg, kl, k1, k2, k3, k4 = jax.random.split(key, 6)

    def w(k, shape):
        return 0.02 * jax.random.normal(k, shape, jnp.float32)

    return dict(
        global_attn=init_attn_params(kg, dim, num_heads, head_dim, None),
        local_attn=init_attn_params(kl, dim, num_heads, head_dim, window_size),
        # fusion: Linear(2*dim, dim) + LayerNorm + ReLU + Linear(dim, dim)
        fus_w1=w(k1, (2 * dim, dim)), fus_b1=w(k2, (dim,)),
        fus_g=jnp.ones((dim,), jnp.float32),
        fus_beta=jnp.zeros((dim,), jnp.float32),
        fus_w2=w(k3, (dim, dim)), fus_b2=w(k4, (dim,)),
    )


def relative_position_bias(table, window_size, num_heads):
    # Swin-style relative position bias gather (host-side JAX glue).
    ws = window_size
    coords = jnp.stack(jnp.meshgrid(jnp.arange(ws), jnp.arange(ws),
                                    indexing="ij"))            # (2, ws, ws)
    coords_flat = coords.reshape(2, -1)                         # (2, ws*ws)
    rel = coords_flat[:, :, None] - coords_flat[:, None, :]     # (2, n, n)
    rel = rel.transpose(1, 2, 0)                                # (n, n, 2)
    rel = rel + (ws - 1)
    rel = rel.at[:, :, 0].multiply(2 * ws - 1)
    idx = rel.sum(-1)                                           # (n, n)
    n = ws * ws
    bias = table[idx.reshape(-1)].reshape(n, n, num_heads)
    return bias.transpose(2, 0, 1).astype(jnp.float32)          # (H, n, n)


# ------------------------------ forward pass --------------------------------

def global_local_attention(params, x, context, num_heads, head_dim, window_size):
    B, N, dim = x.shape
    local_bias = relative_position_bias(params["local_attn"]["rpb_table"],
                                        window_size, num_heads)

    global_out = context_aware_attention(params["global_attn"], x, context,
                                         None, num_heads, head_dim)
    local_out = context_aware_attention(params["local_attn"], x, None,
                                        local_bias, num_heads, head_dim)

    fused = jnp.concatenate([global_out, local_out], axis=-1)   # (B, N, 2*dim)
    out = fusion_mlp_pallas(fused.reshape(B * N, 2 * dim),
                            params["fus_w1"], params["fus_b1"],
                            params["fus_g"], params["fus_beta"],
                            params["fus_w2"], params["fus_b2"])
    return out.reshape(B, N, dim)


# ----------------------------------- main ------------------------------------

if __name__ == "__main__":
    # Small shapes: local attention requires seq_len == window_size**2.
    batch = 2
    dim = 32
    num_heads = 4
    head_dim = 16
    window_size = 4
    seq_len = window_size * window_size    # 16

    key = jax.random.PRNGKey(0)
    kp, kx, kc = jax.random.split(key, 3)

    params = init_global_local_params(kp, dim, num_heads, head_dim, window_size)
    x = jax.random.normal(kx, (batch, seq_len, dim), jnp.float32)
    context = jax.random.normal(kc, (batch, seq_len, dim), jnp.float32)

    fwd = jax.jit(functools.partial(global_local_attention,
                                    num_heads=num_heads, head_dim=head_dim,
                                    window_size=window_size))
    out = fwd(params, x, context)
    out = jax.block_until_ready(out)

    assert out.shape == (batch, seq_len, dim), out.shape
    assert bool(jnp.all(jnp.isfinite(out)))
    print("KERNEL_OK")
</pallas_src>

<mosaic_0001>
module attributes {stable_mosaic.version = 11 : i64} {
  func.func @_fusion_kernel(%arg0: i32, %arg1: memref<32x64xbf16, #tpu.memory_space<vmem>>, %arg2: memref<64x32xbf16, #tpu.memory_space<vmem>>, %arg3: memref<1x32xf32, #tpu.memory_space<vmem>>, %arg4: memref<1x32xf32, #tpu.memory_space<vmem>>, %arg5: memref<1x32xf32, #tpu.memory_space<vmem>>, %arg6: memref<32x32xbf16, #tpu.memory_space<vmem>>, %arg7: memref<1x32xf32, #tpu.memory_space<vmem>>, %arg8: memref<32x32xf32, #tpu.memory_space<vmem>>) attributes {dimension_semantics = [#tpu.dimension_semantics<parallel>], iteration_bounds = array<i64: 1>, scalar_prefetch = 0 : i64, scratch_operands = 0 : i64, tpu.core_type = #tpu.core_type<tc>, window_params = [{transform_indices = @transform_0, window_bounds = array<i64: 32, 64>}, {pipeline_mode = #tpu.pipeline_mode<synchronous>, transform_indices = @transform_1, window_bounds = array<i64: 64, 32>}, {pipeline_mode = #tpu.pipeline_mode<synchronous>, transform_indices = @transform_2, window_bounds = array<i64: 1, 32>}, {pipeline_mode = #tpu.pipeline_mode<synchronous>, transform_indices = @transform_3, window_bounds = array<i64: 1, 32>}, {pipeline_mode = #tpu.pipeline_mode<synchronous>, transform_indices = @transform_4, window_bounds = array<i64: 1, 32>}, {pipeline_mode = #tpu.pipeline_mode<synchronous>, transform_indices = @transform_5, window_bounds = array<i64: 32, 32>}, {pipeline_mode = #tpu.pipeline_mode<synchronous>, transform_indices = @transform_6, window_bounds = array<i64: 1, 32>}, {transform_indices = @transform_7, window_bounds = array<i64: 32, 32>}]} {
    %c0 = arith.constant 0 : index
    %c0_0 = arith.constant 0 : index
    %0 = vector.load %arg1[%c0, %c0_0] : memref<32x64xbf16, #tpu.memory_space<vmem>>, vector<32x64xbf16>
    %c0_1 = arith.constant 0 : index
    %c0_2 = arith.constant 0 : index
    %1 = vector.load %arg2[%c0_1, %c0_2] : memref<64x32xbf16, #tpu.memory_space<vmem>>, vector<64x32xbf16>
    %cst = arith.constant dense<0.000000e+00> : vector<32x32xf32>
    %2 = tpu.matmul %0, %1, %cst {dimension_numbers = #tpu.dot_dimension_numbers<[1], [0], [0], [1], [0, 0, 1, 1], [], []>} : vector<32x64xbf16>, vector<64x32xbf16>, vector<32x32xf32> -> vector<32x32xf32>
    %c0_3 = arith.constant 0 : index
    %c0_4 = arith.constant 0 : index
    %3 = vector.load %arg3[%c0_3, %c0_4] : memref<1x32xf32, #tpu.memory_space<vmem>>, vector<1x32xf32>
    %4 = vector.broadcast %3 : vector<1x32xf32> to vector<32x32xf32>
    %5 = arith.addf %2, %4 : vector<32x32xf32>
    %cst_5 = arith.constant dense<0.000000e+00> : vector<32xf32>
    %6 = vector.multi_reduction <add>, %5, %cst_5 [1] : vector<32x32xf32> to vector<32xf32>
    %7 = vector.shape_cast %6 : vector<32xf32> to vector<32x1xf32>
    %cst_6 = arith.constant 3.200000e+01 : f32
    %8 = vector.broadcast %cst_6 : f32 to vector<32x1xf32>
    %9 = arith.divf %7, %8 : vector<32x1xf32>
    %10 = vector.broadcast %9 : vector<32x1xf32> to vector<32x32xf32>
    %11 = arith.subf %5, %10 : vector<32x32xf32>
    %12 = arith.mulf %11, %11 : vector<32x32xf32>
    %cst_7 = arith.constant dense<0.000000e+00> : vector<32xf32>
    %13 = vector.multi_reduction <add>, %12, %cst_7 [1] : vector<32x32xf32> to vector<32xf32>
    %14 = vector.shape_cast %13 : vector<32xf32> to vector<32x1xf32>
    %cst_8 = arith.constant 3.200000e+01 : f32
    %15 = vector.broadcast %cst_8 : f32 to vector<32x1xf32>
    %16 = arith.divf %14, %15 : vector<32x1xf32>
    %17 = vector.broadcast %9 : vector<32x1xf32> to vector<32x32xf32>
    %18 = arith.subf %5, %17 : vector<32x32xf32>
    %cst_9 = arith.constant 9.99999974E-6 : f32
    %19 = vector.broadcast %cst_9 : f32 to vector<32x1xf32>
    %20 = arith.addf %16, %19 : vector<32x1xf32>
    %21 = math.rsqrt %20 : vector<32x1xf32>
    %22 = vector.broadcast %21 : vector<32x1xf32> to vector<32x32xf32>
    %23 = arith.mulf %18, %22 : vector<32x32xf32>
    %c0_10 = arith.constant 0 : index
    %c0_11 = arith.constant 0 : index
    %24 = vector.load %arg4[%c0_10, %c0_11] : memref<1x32xf32, #tpu.memory_space<vmem>>, vector<1x32xf32>
    %25 = vector.broadcast %24 : vector<1x32xf32> to vector<32x32xf32>
    %26 = arith.mulf %23, %25 : vector<32x32xf32>
    %c0_12 = arith.constant 0 : index
    %c0_13 = arith.constant 0 : index
    %27 = vector.load %arg5[%c0_12, %c0_13] : memref<1x32xf32, #tpu.memory_space<vmem>>, vector<1x32xf32>
    %28 = vector.broadcast %27 : vector<1x32xf32> to vector<32x32xf32>
    %29 = arith.addf %26, %28 : vector<32x32xf32>
    %cst_14 = arith.constant 0.000000e+00 : f32
    %30 = vector.broadcast %cst_14 : f32 to vector<32x32xf32>
    %31 = arith.maximumf %29, %30 : vector<32x32xf32>
    %32 = arith.truncf %31 : vector<32x32xf32> to vector<32x32xbf16>
    %c0_15 = arith.constant 0 : index
    %c0_16 = arith.constant 0 : index
    %33 = vector.load %arg6[%c0_15, %c0_16] : memref<32x32xbf16, #tpu.memory_space<vmem>>, vector<32x32xbf16>
    %cst_17 = arith.constant dense<0.000000e+00> : vector<32x32xf32>
    %34 = tpu.matmul %32, %33, %cst_17 {dimension_numbers = #tpu.dot_dimension_numbers<[1], [0], [0], [1], [0, 0, 1, 1], [], []>} : vector<32x32xbf16>, vector<32x32xbf16>, vector<32x32xf32> -> vector<32x32xf32>
    %c0_18 = arith.constant 0 : index
    %c0_19 = arith.constant 0 : index
    %35 = vector.load %arg7[%c0_18, %c0_19] : memref<1x32xf32, #tpu.memory_space<vmem>>, vector<1x32xf32>
    %36 = vector.broadcast %35 : vector<1x32xf32> to vector<32x32xf32>
    %37 = arith.addf %34, %36 : vector<32x32xf32>
    %c0_20 = arith.constant 0 : index
    %c0_21 = arith.constant 0 : index
    %38 = vector.load %arg8[%c0_20, %c0_21] : memref<32x32xf32, #tpu.memory_space<vmem>>, vector<32x32xf32>
    tpu.vector_store %arg8[%c0_20, %c0_21], %37 {strides = array<i32>} : memref<32x32xf32, #tpu.memory_space<vmem>>, vector<32x32xf32>,
    return
  }
  func.func @transform_0(%arg0: i32) -> (i32, i32) {
    %c0_i32 = arith.constant 0 : i32
    %c0_i32_0 = arith.constant 0 : i32
    return %arg0, %c0_i32 : i32, i32
  }
  func.func @transform_1(%arg0: i32) -> (i32, i32) {
    %c0_i32 = arith.constant 0 : i32
    %c0_i32_0 = arith.constant 0 : i32
    %c0_i32_1 = arith.constant 0 : i32
    return %c0_i32, %c0_i32_0 : i32, i32
  }
  func.func @transform_2(%arg0: i32) -> (i32, i32) {
    %c0_i32 = arith.constant 0 : i32
    %c0_i32_0 = arith.constant 0 : i32
    %c0_i32_1 = arith.constant 0 : i32
    return %c0_i32, %c0_i32_0 : i32, i32
  }
  func.func @transform_3(%arg0: i32) -> (i32, i32) {
    %c0_i32 = arith.constant 0 : i32
    %c0_i32_0 = arith.constant 0 : i32
    %c0_i32_1 = arith.constant 0 : i32
    return %c0_i32, %c0_i32_0 : i32, i32
  }
  func.func @transform_4(%arg0: i32) -> (i32, i32) {
    %c0_i32 = arith.constant 0 : i32
    %c0_i32_0 = arith.constant 0 : i32
    %c0_i32_1 = arith.constant 0 : i32
    return %c0_i32, %c0_i32_0 : i32, i32
  }
  func.func @transform_5(%arg0: i32) -> (i32, i32) {
    %c0_i32 = arith.constant 0 : i32
    %c0_i32_0 = arith.constant 0 : i32
    %c0_i32_1 = arith.constant 0 : i32
    return %c0_i32, %c0_i32_0 : i32, i32
  }
  func.func @transform_6(%arg0: i32) -> (i32, i32) {
    %c0_i32 = arith.constant 0 : i32
    %c0_i32_0 = arith.constant 0 : i32
    %c0_i32_1 = arith.constant 0 : i32
    return %c0_i32, %c0_i32_0 : i32, i32
  }
  func.func @transform_7(%arg0: i32) -> (i32, i32) {
    %c0_i32 = arith.constant 0 : i32
    %c0_i32_0 = arith.constant 0 : i32
    return %arg0, %c0_i32 : i32, i32
  }
}

module attributes {stable_mosaic.version = 11 : i64} {
  func.func @_branch_kernel(%arg0: i32, %arg1: memref<1x16x32xbf16, #tpu.memory_space<vmem>>, %arg2: memref<32x64xbf16, #tpu.memory_space<vmem>>, %arg3: memref<32x128xbf16, #tpu.memory_space<vmem>>, %arg4: memref<64x32xbf16, #tpu.memory_space<vmem>>, %arg5: memref<1x32xf32, #tpu.memory_space<vmem>>, %arg6: memref<4x16x16xf32, #tpu.memory_space<vmem>>, %arg7: memref<1x16x32xf32, #tpu.memory_space<vmem>>) attributes {dimension_semantics = [#tpu.dimension_semantics<parallel>], iteration_bounds = array<i64: 2>, scalar_prefetch = 0 : i64, scratch_operands = 0 : i64, tpu.core_type = #tpu.core_type<tc>, window_params = [{transform_indices = @transform_0, window_bounds = array<i64: 1, 16, 32>}, {pipeline_mode = #tpu.pipeline_mode<synchronous>, transform_indices = @transform_1, window_bounds = array<i64: 32, 64>}, {pipeline_mode = #tpu.pipeline_mode<synchronous>, transform_indices = @transform_2, window_bounds = array<i64: 32, 128>}, {pipeline_mode = #tpu.pipeline_mode<synchronous>, transform_indices = @transform_3, window_bounds = array<i64: 64, 32>}, {pipeline_mode = #tpu.pipeline_mode<synchronous>, transform_indices = @transform_4, window_bounds = array<i64: 1, 32>}, {pipeline_mode = #tpu.pipeline_mode<synchronous>, transform_indices = @transform_5, window_bounds = array<i64: 4, 16, 16>}, {transform_indices = @transform_6, window_bounds = array<i64: 1, 16, 32>}]} {
    %c0 = arith.constant 0 : index
    %c0_0 = arith.constant 0 : index
    %c0_1 = arith.constant 0 : index
    %0 = vector.load %arg1[%c0, %c0_0, %c0_1] : memref<1x16x32xbf16, #tpu.memory_space<vmem>>, vector<1x16x32xbf16>
    %1 = vector.shape_cast %0 : vector<1x16x32xbf16> to vector<16x32xbf16>
    %c0_2 = arith.constant 0 : index
    %c0_3 = arith.constant 0 : index
    %c0_4 = arith.constant 0 : index
    %2 = vector.load %arg1[%c0_2, %c0_3, %c0_4] : memref<1x16x32xbf16, #tpu.memory_space<vmem>>, vector<1x16x32xbf16>
    %3 = vector.shape_cast %2 : vector<1x16x32xbf16> to vector<16x32xbf16>
    %c0_5 = arith.constant 0 : index
    %c0_6 = arith.constant 0 : index
    %4 = vector.load %arg2[%c0_5, %c0_6] : memref<32x64xbf16, #tpu.memory_space<vmem>>, vector<32x64xbf16>
    %cst = arith.constant dense<0.000000e+00> : vector<16x64xf32>
    %5 = tpu.matmul %1, %4, %cst {dimension_numbers = #tpu.dot_dimension_numbers<[1], [0], [0], [1], [0, 0, 1, 1], [], []>} : vector<16x32xbf16>, vector<32x64xbf16>, vector<16x64xf32> -> vector<16x64xf32>
    %c0_7 = arith.constant 0 : index
    %c0_8 = arith.constant 0 : index
    %6 = vector.load %arg3[%c0_7, %c0_8] : memref<32x128xbf16, #tpu.memory_space<vmem>>, vector<32x128xbf16>
    %cst_9 = arith.constant dense<0.000000e+00> : vector<16x128xf32>
    %7 = tpu.matmul %3, %6, %cst_9 {dimension_numbers = #tpu.dot_dimension_numbers<[1], [0], [0], [1], [0, 0, 1, 1], [], []>} : vector<16x32xbf16>, vector<32x128xbf16>, vector<16x128xf32> -> vector<16x128xf32>
    %8 = vector.extract_strided_slice %7 {offsets = [0, 0], sizes = [16, 64], strides = [1, 1]} : vector<16x128xf32> to vector<16x64xf32>
    %9 = vector.extract_strided_slice %7 {offsets = [0, 64], sizes = [16, 64], strides = [1, 1]} : vector<16x128xf32> to vector<16x64xf32>
    %c0_10 = arith.constant 0 : index
    %c0_11 = arith.constant 0 : index
    %10 = vector.load %arg4[%c0_10, %c0_11] : memref<64x32xbf16, #tpu.memory_space<vmem>>, vector<64x32xbf16>
    %cst_12 = arith.constant 0.000000e+00 : f32
    %11 = vector.broadcast %cst_12 : f32 to vector<16x32xf32>
    %12 = vector.extract_strided_slice %5 {offsets = [0, 0], sizes = [16, 16], strides = [1, 1]} : vector<16x64xf32> to vector<16x16xf32>
    %cst_13 = arith.constant 2.500000e-01 : f32
    %13 = vector.broadcast %cst_13 : f32 to vector<16x16xf32>
    %14 = arith.mulf %12, %13 : vector<16x16xf32>
    %15 = vector.extract_strided_slice %8 {offsets = [0, 0], sizes = [16, 16], strides = [1, 1]} : vector<16x64xf32> to vector<16x16xf32>
    %16 = vector.extract_strided_slice %9 {offsets = [0, 0], sizes = [16, 16], strides = [1, 1]} : vector<16x64xf32> to vector<16x16xf32>
    %17 = arith.truncf %14 : vector<16x16xf32> to vector<16x16xbf16>
    %18 = arith.truncf %15 : vector<16x16xf32> to vector<16x16xbf16>
    %cst_14 = arith.constant dense<0.000000e+00> : vector<16x16xf32>
    %19 = tpu.matmul %17, %18, %cst_14 {dimension_numbers = #tpu.dot_dimension_numbers<[1], [1], [0], [0], [0, 0, 1, 0], [], []>} : vector<16x16xbf16>, vector<16x16xbf16>, vector<16x16xf32> -> vector<16x16xf32>
    %c0_15 = arith.constant 0 : index
    %c0_16 = arith.constant 0 : index
    %c0_17 = arith.constant 0 : index
    %20 = vector.load %arg6[%c0_15, %c0_16, %c0_17] : memref<4x16x16xf32, #tpu.memory_space<vmem>>, vector<1x16x16xf32>
    %21 = vector.shape_cast %20 : vector<1x16x16xf32> to vector<16x16xf32>
    %22 = arith.addf %19, %21 : vector<16x16xf32>
    %cst_18 = arith.constant dense<0xFF800000> : vector<16xf32>
    %23 = vector.multi_reduction <maximumf>, %22, %cst_18 [1] : vector<16x16xf32> to vector<16xf32>
    %24 = vector.shape_cast %23 : vector<16xf32> to vector<16x1xf32>
    %25 = vector.broadcast %24 : vector<16x1xf32> to vector<16x16xf32>
    %26 = arith.subf %22, %25 : vector<16x16xf32>
    %27 = math.exp %26 : vector<16x16xf32>
    %cst_19 = arith.constant dense<0.000000e+00> : vector<16xf32>
    %28 = vector.multi_reduction <add>, %27, %cst_19 [1] : vector<16x16xf32> to vector<16xf32>
    %29 = vector.shape_cast %28 : vector<16xf32> to vector<16x1xf32>
    %30 = tpu.reciprocal %29 {approx = true} : vector<16x1xf32> -> vector<16x1xf32>
    %31 = vector.broadcast %30 : vector<16x1xf32> to vector<16x16xf32>
    %32 = arith.mulf %27, %31 : vector<16x16xf32>
    %33 = arith.truncf %32 : vector<16x16xf32> to vector<16x16xbf16>
    %34 = arith.truncf %16 : vector<16x16xf32> to vector<16x16xbf16>
    %cst_20 = arith.constant dense<0.000000e+00> : vector<16x16xf32>
    %35 = tpu.matmul %33, %34, %cst_20 {dimension_numbers = #tpu.dot_dimension_numbers<[1], [0], [0], [1], [0, 0, 1, 1], [], []>} : vector<16x16xbf16>, vector<16x16xbf16>, vector<16x16xf32> -> vector<16x16xf32>
    %36 = arith.truncf %35 : vector<16x16xf32> to vector<16x16xbf16>
    %37 = vector.extract_strided_slice %10 {offsets = [0, 0], sizes = [16, 32], strides = [1, 1]} : vector<64x32xbf16> to vector<16x32xbf16>
    %cst_21 = arith.constant dense<0.000000e+00> : vector<16x32xf32>
    %38 = tpu.matmul %36, %37, %cst_21 {dimension_numbers = #tpu.dot_dimension_numbers<[1], [0], [0], [1], [0, 0, 1, 1], [], []>} : vector<16x16xbf16>, vector<16x32xbf16>, vector<16x32xf32> -> vector<16x32xf32>
    %39 = arith.addf %11, %38 : vector<16x32xf32>
    %40 = vector.extract_strided_slice %5 {offsets = [0, 16], sizes = [16, 16], strides = [1, 1]} : vector<16x64xf32> to vector<16x16xf32>
    %cst_22 = arith.constant 2.500000e-01 : f32
    %41 = vector.broadcast %cst_22 : f32 to vector<16x16xf32>
    %42 = arith.mulf %40, %41 : vector<16x16xf32>
    %43 = vector.extract_strided_slice %8 {offsets = [0, 16], sizes = [16, 16], strides = [1, 1]} : vector<16x64xf32> to vector<16x16xf32>
    %44 = vector.extract_strided_slice %9 {offsets = [0, 16], sizes = [16, 16], strides = [1, 1]} : vector<16x64xf32> to vector<16x16xf32>
    %45 = arith.truncf %42 : vector<16x16xf32> to vector<16x16xbf16>
    %46 = arith.truncf %43 : vector<16x16xf32> to vector<16x16xbf16>
    %cst_23 = arith.constant dense<0.000000e+00> : vector<16x16xf32>
    %47 = tpu.matmul %45, %46, %cst_23 {dimension_numbers = #tpu.dot_dimension_numbers<[1], [1], [0], [0], [0, 0, 1, 0], [], []>} : vector<16x16xbf16>, vector<16x16xbf16>, vector<16x16xf32> -> vector<16x16xf32>
    %c1 = arith.constant 1 : index
    %c0_24 = arith.constant 0 : index
    %c0_25 = arith.constant 0 : index
    %48 = vector.load %arg6[%c1, %c0_24, %c0_25] : memref<4x16x16xf32, #tpu.memory_space<vmem>>, vector<1x16x16xf32>
    %49 = vector.shape_cast %48 : vector<1x16x16xf32> to vector<16x16xf32>
    %50 = arith.addf %47, %49 : vector<16x16xf32>
    %cst_26 = arith.constant dense<0xFF800000> : vector<16xf32>
    %51 = vector.multi_reduction <maximumf>, %50, %cst_26 [1] : vector<16x16xf32> to vector<16xf32>
    %52 = vector.shape_cast %51 : vector<16xf32> to vector<16x1xf32>
    %53 = vector.broadcast %52 : vector<16x1xf32> to vector<16x16xf32>
    %54 = arith.subf %50, %53 : vector<16x16xf32>
    %55 = math.exp %54 : vector<16x16xf32>
    %cst_27 = arith.constant dense<0.000000e+00> : vector<16xf32>
    %56 = vector.multi_reduction <add>, %55, %cst_27 [1] : vector<16x16xf32> to vector<16xf32>
    %57 = vector.shape_cast %56 : vector<16xf32> to vector<16x1xf32>
    %58 = tpu.reciprocal %57 {approx = true} : vector<16x1xf32> -> vector<16x1xf32>
    %59 = vector.broadcast %58 : vector<16x1xf32> to vector<16x16xf32>
    %60 = arith.mulf %55, %59 : vector<16x16xf32>
    %61 = arith.truncf %60 : vector<16x16xf32> to vector<16x16xbf16>
    %62 = arith.truncf %44 : vector<16x16xf32> to vector<16x16xbf16>
    %cst_28 = arith.constant dense<0.000000e+00> : vector<16x16xf32>
    %63 = tpu.matmul %61, %62, %cst_28 {dimension_numbers = #tpu.dot_dimension_numbers<[1], [0], [0], [1], [0, 0, 1, 1], [], []>} : vector<16x16xbf16>, vector<16x16xbf16>, vector<16x16xf32> -> vector<16x16xf32>
    %64 = arith.truncf %63 : vector<16x16xf32> to vector<16x16xbf16>
    %65 = vector.extract_strided_slice %10 {offsets = [16, 0], sizes = [16, 32], strides = [1, 1]} : vector<64x32xbf16> to vector<16x32xbf16>
    %cst_29 = arith.constant dense<0.000000e+00> : vector<16x32xf32>
    %66 = tpu.matmul %64, %65, %cst_29 {dimension_numbers = #tpu.dot_dimension_numbers<[1], [0], [0], [1], [0, 0, 1, 1], [], []>} : vector<16x16xbf16>, vector<16x32xbf16>, vector<16x32xf32> -> vector<16x32xf32>
    %67 = arith.addf %39, %66 : vector<16x32xf32>
    %68 = vector.extract_strided_slice %5 {offsets = [0, 32], sizes = [16, 16], strides = [1, 1]} : vector<16x64xf32> to vector<16x16xf32>
    %cst_30 = arith.constant 2.500000e-01 : f32
    %69 = vector.broadcast %cst_30 : f32 to vector<16x16xf32>
    %70 = arith.mulf %68, %69 : vector<16x16xf32>
    %71 = vector.extract_strided_slice %8 {offsets = [0, 32], sizes = [16, 16], strides = [1, 1]} : vector<16x64xf32> to vector<16x16xf32>
    %72 = vector.extract_strided_slice %9 {offsets = [0, 32], sizes = [16, 16], strides = [1, 1]} : vector<16x64xf32> to vector<16x16xf32>
    %73 = arith.truncf %70 : vector<16x16xf32> to vector<16x16xbf16>
    %74 = arith.truncf %71 : vector<16x16xf32> to vector<16x16xbf16>
    %cst_31 = arith.constant dense<0.000000e+00> : vector<16x16xf32>
    %75 = tpu.matmul %73, %74, %cst_31 {dimension_numbers = #tpu.dot_dimension_numbers<[1], [1], [0], [0], [0, 0, 1, 0], [], []>} : vector<16x16xbf16>, vector<16x16xbf16>, vector<16x16xf32> -> vector<16x16xf32>
    %c2 = arith.constant 2 : index
    %c0_32 = arith.constant 0 : index
    %c0_33 = arith.constant 0 : index
    %76 = vector.load %arg6[%c2, %c0_32, %c0_33] : memref<4x16x16xf32, #tpu.memory_space<vmem>>, vector<1x16x16xf32>
    %77 = vector.shape_cast %76 : vector<1x16x16xf32> to vector<16x16xf32>
    %78 = arith.addf %75, %77 : vector<16x16xf32>
    %cst_34 = arith.constant dense<0xFF800000> : vector<16xf32>
    %79 = vector.multi_reduction <maximumf>, %78, %cst_34 [1] : vector<16x16xf32> to vector<16xf32>
    %80 = vector.shape_cast %79 : vector<16xf32> to vector<16x1xf32>
    %81 = vector.broadcast %80 : vector<16x1xf32> to vector<16x16xf32>
    %82 = arith.subf %78, %81 : vector<16x16xf32>
    %83 = math.exp %82 : vector<16x16xf32>
    %cst_35 = arith.constant dense<0.000000e+00> : vector<16xf32>
    %84 = vector.multi_reduction <add>, %83, %cst_35 [1] : vector<16x16xf32> to vector<16xf32>
    %85 = vector.shape_cast %84 : vector<16xf32> to vector<16x1xf32>
    %86 = tpu.reciprocal %85 {approx = true} : vector<16x1xf32> -> vector<16x1xf32>
    %87 = vector.broadcast %86 : vector<16x1xf32> to vector<16x16xf32>
    %88 = arith.mulf %83, %87 : vector<16x16xf32>
    %89 = arith.truncf %88 : vector<16x16xf32> to vector<16x16xbf16>
    %90 = arith.truncf %72 : vector<16x16xf32> to vector<16x16xbf16>
    %cst_36 = arith.constant dense<0.000000e+00> : vector<16x16xf32>
    %91 = tpu.matmul %89, %90, %cst_36 {dimension_numbers = #tpu.dot_dimension_numbers<[1], [0], [0], [1], [0, 0, 1, 1], [], []>} : vector<16x16xbf16>, vector<16x16xbf16>, vector<16x16xf32> -> vector<16x16xf32>
    %92 = arith.truncf %91 : vector<16x16xf32> to vector<16x16xbf16>
    %93 = vector.extract_strided_slice %10 {offsets = [32, 0], sizes = [16, 32], strides = [1, 1]} : vector<64x32xbf16> to vector<16x32xbf16>
    %cst_37 = arith.constant dense<0.000000e+00> : vector<16x32xf32>
    %94 = tpu.matmul %92, %93, %cst_37 {dimension_numbers = #tpu.dot_dimension_numbers<[1], [0], [0], [1], [0, 0, 1, 1], [], []>} : vector<16x16xbf16>, vector<16x32xbf16>, vector<16x32xf32> -> vector<16x32xf32>
    %95 = arith.addf %67, %94 : vector<16x32xf32>
    %96 = vector.extract_strided_slice %5 {offsets = [0, 48], sizes = [16, 16], strides = [1, 1]} : vector<16x64xf32> to vector<16x16xf32>
    %cst_38 = arith.constant 2.500000e-01 : f32
    %97 = vector.broadcast %cst_38 : f32 to vector<16x16xf32>
    %98 = arith.mulf %96, %97 : vector<16x16xf32>
    %99 = vector.extract_strided_slice %8 {offsets = [0, 48], sizes = [16, 16], strides = [1, 1]} : vector<16x64xf32> to vector<16x16xf32>
    %100 = vector.extract_strided_slice %9 {offsets = [0, 48], sizes = [16, 16], strides = [1, 1]} : vector<16x64xf32> to vector<16x16xf32>
    %101 = arith.truncf %98 : vector<16x16xf32> to vector<16x16xbf16>
    %102 = arith.truncf %99 : vector<16x16xf32> to vector<16x16xbf16>
    %cst_39 = arith.constant dense<0.000000e+00> : vector<16x16xf32>
    %103 = tpu.matmul %101, %102, %cst_39 {dimension_numbers = #tpu.dot_dimension_numbers<[1], [1], [0], [0], [0, 0, 1, 0], [], []>} : vector<16x16xbf16>, vector<16x16xbf16>, vector<16x16xf32> -> vector<16x16xf32>
    %c3 = arith.constant 3 : index
    %c0_40 = arith.constant 0 : index
    %c0_41 = arith.constant 0 : index
    %104 = vector.load %arg6[%c3, %c0_40, %c0_41] : memref<4x16x16xf32, #tpu.memory_space<vmem>>, vector<1x16x16xf32>
    %105 = vector.shape_cast %104 : vector<1x16x16xf32> to vector<16x16xf32>
    %106 = arith.addf %103, %105 : vector<16x16xf32>
    %cst_42 = arith.constant dense<0xFF800000> : vector<16xf32>
    %107 = vector.multi_reduction <maximumf>, %106, %cst_42 [1] : vector<16x16xf32> to vector<16xf32>
    %108 = vector.shape_cast %107 : vector<16xf32> to vector<16x1xf32>
    %109 = vector.broadcast %108 : vector<16x1xf32> to vector<16x16xf32>
    %110 = arith.subf %106, %109 : vector<16x16xf32>
    %111 = math.exp %110 : vector<16x16xf32>
    %cst_43 = arith.constant dense<0.000000e+00> : vector<16xf32>
    %112 = vector.multi_reduction <add>, %111, %cst_43 [1] : vector<16x16xf32> to vector<16xf32>
    %113 = vector.shape_cast %112 : vector<16xf32> to vector<16x1xf32>
    %114 = tpu.reciprocal %113 {approx = true} : vector<16x1xf32> -> vector<16x1xf32>
    %115 = vector.broadcast %114 : vector<16x1xf32> to vector<16x16xf32>
    %116 = arith.mulf %111, %115 : vector<16x16xf32>
    %117 = arith.truncf %116 : vector<16x16xf32> to vector<16x16xbf16>
    %118 = arith.truncf %100 : vector<16x16xf32> to vector<16x16xbf16>
    %cst_44 = arith.constant dense<0.000000e+00> : vector<16x16xf32>
    %119 = tpu.matmul %117, %118, %cst_44 {dimension_numbers = #tpu.dot_dimension_numbers<[1], [0], [0], [1], [0, 0, 1, 1], [], []>} : vector<16x16xbf16>, vector<16x16xbf16>, vector<16x16xf32> -> vector<16x16xf32>
    %120 = arith.truncf %119 : vector<16x16xf32> to vector<16x16xbf16>
    %121 = vector.extract_strided_slice %10 {offsets = [48, 0], sizes = [16, 32], strides = [1, 1]} : vector<64x32xbf16> to vector<16x32xbf16>
    %cst_45 = arith.constant dense<0.000000e+00> : vector<16x32xf32>
    %122 = tpu.matmul %120, %121, %cst_45 {dimension_numbers = #tpu.dot_dimension_numbers<[1], [0], [0], [1], [0, 0, 1, 1], [], []>} : vector<16x16xbf16>, vector<16x32xbf16>, vector<16x32xf32> -> vector<16x32xf32>
    %123 = arith.addf %95, %122 : vector<16x32xf32>
    %c0_46 = arith.constant 0 : index
    %c0_47 = arith.constant 0 : index
    %124 = vector.load %arg5[%c0_46, %c0_47] : memref<1x32xf32, #tpu.memory_space<vmem>>, vector<1x32xf32>
    %125 = vector.broadcast %124 : vector<1x32xf32> to vector<16x32xf32>
    %126 = arith.addf %123, %125 : vector<16x32xf32>
    %c0_48 = arith.constant 0 : index
    %c0_49 = arith.constant 0 : index
    %c0_50 = arith.constant 0 : index
    %127 = vector.load %arg7[%c0_48, %c0_49, %c0_50] : memref<1x16x32xf32, #tpu.memory_space<vmem>>, vector<1x16x32xf32>
    %128 = vector.shape_cast %127 : vector<1x16x32xf32> to vector<16x32xf32>
    %129 = vector.shape_cast %126 : vector<16x32xf32> to vector<1x16x32xf32>
    tpu.vector_store %arg7[%c0_48, %c0_49, %c0_50], %129 {strides = array<i32>} : memref<1x16x32xf32, #tpu.memory_space<vmem>>, vector<1x16x32xf32>,
    return
  }
  func.func @transform_0(%arg0: i32) -> (i32, i32, i32) {
    %c0_i32 = arith.constant 0 : i32
    %c0_i32_0 = arith.constant 0 : i32
    %c0_i32_1 = arith.constant 0 : i32
    return %arg0, %c0_i32, %c0_i32_0 : i32, i32, i32
  }
  func.func @transform_1(%arg0: i32) -> (i32, i32) {
    %c0_i32 = arith.constant 0 : i32
    %c0_i32_0 = arith.constant 0 : i32
    %c0_i32_1 = arith.constant 0 : i32
    return %c0_i32, %c0_i32_0 : i32, i32
  }
  func.func @transform_2(%arg0: i32) -> (i32, i32) {
    %c0_i32 = arith.constant 0 : i32
    %c0_i32_0 = arith.constant 0 : i32
    %c0_i32_1 = arith.constant 0 : i32
    return %c0_i32, %c0_i32_0 : i32, i32
  }
  func.func @transform_3(%arg0: i32) -> (i32, i32) {
    %c0_i32 = arith.constant 0 : i32
    %c0_i32_0 = arith.constant 0 : i32
    %c0_i32_1 = arith.constant 0 : i32
    return %c0_i32, %c0_i32_0 : i32, i32
  }
  func.func @transform_4(%arg0: i32) -> (i32, i32) {
    %c0_i32 = arith.constant 0 : i32
    %c0_i32_0 = arith.constant 0 : i32
    %c0_i32_1 = arith.constant 0 : i32
    return %c0_i32, %c0_i32_0 : i32, i32
  }
  func.func @transform_5(%arg0: i32) -> (i32, i32, i32) {
    %c0_i32 = arith.constant 0 : i32
    %c0_i32_0 = arith.constant 0 : i32
    %c0_i32_1 = arith.constant 0 : i32
    %c0_i32_2 = arith.constant 0 : i32
    return %c0_i32, %c0_i32_0, %c0_i32_1 : i32, i32, i32
  }
  func.func @transform_6(%arg0: i32) -> (i32, i32, i32) {
    %c0_i32 = arith.constant 0 : i32
    %c0_i32_0 = arith.constant 0 : i32
    %c0_i32_1 = arith.constant 0 : i32
    return %arg0, %c0_i32, %c0_i32_0 : i32, i32, i32
  }
}

module attributes {stable_mosaic.version = 11 : i64} {
  func.func @_branch_kernel(%arg0: i32, %arg1: memref<1x16x32xbf16, #tpu.memory_space<vmem>>, %arg2: memref<1x16x32xbf16, #tpu.memory_space<vmem>>, %arg3: memref<32x64xbf16, #tpu.memory_space<vmem>>, %arg4: memref<32x128xbf16, #tpu.memory_space<vmem>>, %arg5: memref<64x32xbf16, #tpu.memory_space<vmem>>, %arg6: memref<1x32xf32, #tpu.memory_space<vmem>>, %arg7: memref<32x32xbf16, #tpu.memory_space<vmem>>, %arg8: memref<1x32xf32, #tpu.memory_space<vmem>>, %arg9: memref<1x32xf32, #tpu.memory_space<vmem>>, %arg10: memref<1x32xf32, #tpu.memory_space<vmem>>, %arg11: memref<32x32xbf16, #tpu.memory_space<vmem>>, %arg12: memref<1x32xf32, #tpu.memory_space<vmem>>, %arg13: memref<1x16x32xf32, #tpu.memory_space<vmem>>) attributes {dimension_semantics = [#tpu.dimension_semantics<parallel>], iteration_bounds = array<i64: 2>, scalar_prefetch = 0 : i64, scratch_operands = 0 : i64, tpu.core_type = #tpu.core_type<tc>, window_params = [{transform_indices = @transform_0, window_bounds = array<i64: 1, 16, 32>}, {transform_indices = @transform_1, window_bounds = array<i64: 1, 16, 32>}, {pipeline_mode = #tpu.pipeline_mode<synchronous>, transform_indices = @transform_2, window_bounds = array<i64: 32, 64>}, {pipeline_mode = #tpu.pipeline_mode<synchronous>, transform_indices = @transform_3, window_bounds = array<i64: 32, 128>}, {pipeline_mode = #tpu.pipeline_mode<synchronous>, transform_indices = @transform_4, window_bounds = array<i64: 64, 32>}, {pipeline_mode = #tpu.pipeline_mode<synchronous>, transform_indices = @transform_5, window_bounds = array<i64: 1, 32>}, {pipeline_mode = #tpu.pipeline_mode<synchronous>, transform_indices = @transform_6, window_bounds = array<i64: 32, 32>}, {pipeline_mode = #tpu.pipeline_mode<synchronous>, transform_indices = @transform_7, window_bounds = array<i64: 1, 32>}, {pipeline_mode = #tpu.pipeline_mode<synchronous>, transform_indices = @transform_8, window_bounds = array<i64: 1, 32>}, {pipeline_mode = #tpu.pipeline_mode<synchronous>, transform_indices = @transform_9, window_bounds = array<i64: 1, 32>}, {pipeline_mode = #tpu.pipeline_mode<synchronous>, transform_indices = @transform_10, window_bounds = array<i64: 32, 32>}, {pipeline_mode = #tpu.pipeline_mode<synchronous>, transform_indices = @transform_11, window_bounds = array<i64: 1, 32>}, {transform_indices = @transform_12, window_bounds = array<i64: 1, 16, 32>}]} {
    %c0 = arith.constant 0 : index
    %c0_0 = arith.constant 0 : index
    %c0_1 = arith.constant 0 : index
    %0 = vector.load %arg1[%c0, %c0_0, %c0_1] : memref<1x16x32xbf16, #tpu.memory_space<vmem>>, vector<1x16x32xbf16>
    %1 = vector.shape_cast %0 : vector<1x16x32xbf16> to vector<16x32xbf16>
    %c0_2 = arith.constant 0 : index
    %c0_3 = arith.constant 0 : index
    %c0_4 = arith.constant 0 : index
    %2 = vector.load %arg2[%c0_2, %c0_3, %c0_4] : memref<1x16x32xbf16, #tpu.memory_space<vmem>>, vector<1x16x32xbf16>
    %3 = vector.shape_cast %2 : vector<1x16x32xbf16> to vector<16x32xbf16>
    %c0_5 = arith.constant 0 : index
    %c0_6 = arith.constant 0 : index
    %4 = vector.load %arg3[%c0_5, %c0_6] : memref<32x64xbf16, #tpu.memory_space<vmem>>, vector<32x64xbf16>
    %cst = arith.constant dense<0.000000e+00> : vector<16x64xf32>
    %5 = tpu.matmul %1, %4, %cst {dimension_numbers = #tpu.dot_dimension_numbers<[1], [0], [0], [1], [0, 0, 1, 1], [], []>} : vector<16x32xbf16>, vector<32x64xbf16>, vector<16x64xf32> -> vector<16x64xf32>
    %c0_7 = arith.constant 0 : index
    %c0_8 = arith.constant 0 : index
    %6 = vector.load %arg4[%c0_7, %c0_8] : memref<32x128xbf16, #tpu.memory_space<vmem>>, vector<32x128xbf16>
    %cst_9 = arith.constant dense<0.000000e+00> : vector<16x128xf32>
    %7 = tpu.matmul %3, %6, %cst_9 {dimension_numbers = #tpu.dot_dimension_numbers<[1], [0], [0], [1], [0, 0, 1, 1], [], []>} : vector<16x32xbf16>, vector<32x128xbf16>, vector<16x128xf32> -> vector<16x128xf32>
    %8 = vector.extract_strided_slice %7 {offsets = [0, 0], sizes = [16, 64], strides = [1, 1]} : vector<16x128xf32> to vector<16x64xf32>
    %9 = vector.extract_strided_slice %7 {offsets = [0, 64], sizes = [16, 64], strides = [1, 1]} : vector<16x128xf32> to vector<16x64xf32>
    %c0_10 = arith.constant 0 : index
    %c0_11 = arith.constant 0 : index
    %10 = vector.load %arg5[%c0_10, %c0_11] : memref<64x32xbf16, #tpu.memory_space<vmem>>, vector<64x32xbf16>
    %cst_12 = arith.constant 0.000000e+00 : f32
    %11 = vector.broadcast %cst_12 : f32 to vector<16x32xf32>
    %12 = vector.extract_strided_slice %5 {offsets = [0, 0], sizes = [16, 16], strides = [1, 1]} : vector<16x64xf32> to vector<16x16xf32>
    %cst_13 = arith.constant 2.500000e-01 : f32
    %13 = vector.broadcast %cst_13 : f32 to vector<16x16xf32>
    %14 = arith.mulf %12, %13 : vector<16x16xf32>
    %15 = vector.extract_strided_slice %8 {offsets = [0, 0], sizes = [16, 16], strides = [1, 1]} : vector<16x64xf32> to vector<16x16xf32>
    %16 = vector.extract_strided_slice %9 {offsets = [0, 0], sizes = [16, 16], strides = [1, 1]} : vector<16x64xf32> to vector<16x16xf32>
    %17 = arith.truncf %14 : vector<16x16xf32> to vector<16x16xbf16>
    %18 = arith.truncf %15 : vector<16x16xf32> to vector<16x16xbf16>
    %cst_14 = arith.constant dense<0.000000e+00> : vector<16x16xf32>
    %19 = tpu.matmul %17, %18, %cst_14 {dimension_numbers = #tpu.dot_dimension_numbers<[1], [1], [0], [0], [0, 0, 1, 0], [], []>} : vector<16x16xbf16>, vector<16x16xbf16>, vector<16x16xf32> -> vector<16x16xf32>
    %cst_15 = arith.constant dense<0xFF800000> : vector<16xf32>
    %20 = vector.multi_reduction <maximumf>, %19, %cst_15 [1] : vector<16x16xf32> to vector<16xf32>
    %21 = vector.shape_cast %20 : vector<16xf32> to vector<16x1xf32>
    %22 = vector.broadcast %21 : vector<16x1xf32> to vector<16x16xf32>
    %23 = arith.subf %19, %22 : vector<16x16xf32>
    %24 = math.exp %23 : vector<16x16xf32>
    %cst_16 = arith.constant dense<0.000000e+00> : vector<16xf32>
    %25 = vector.multi_reduction <add>, %24, %cst_16 [1] : vector<16x16xf32> to vector<16xf32>
    %26 = vector.shape_cast %25 : vector<16xf32> to vector<16x1xf32>
    %27 = tpu.reciprocal %26 {approx = true} : vector<16x1xf32> -> vector<16x1xf32>
    %28 = vector.broadcast %27 : vector<16x1xf32> to vector<16x16xf32>
    %29 = arith.mulf %24, %28 : vector<16x16xf32>
    %30 = arith.truncf %29 : vector<16x16xf32> to vector<16x16xbf16>
    %31 = arith.truncf %16 : vector<16x16xf32> to vector<16x16xbf16>
    %cst_17 = arith.constant dense<0.000000e+00> : vector<16x16xf32>
    %32 = tpu.matmul %30, %31, %cst_17 {dimension_numbers = #tpu.dot_dimension_numbers<[1], [0], [0], [1], [0, 0, 1, 1], [], []>} : vector<16x16xbf16>, vector<16x16xbf16>, vector<16x16xf32> -> vector<16x16xf32>
    %33 = arith.truncf %32 : vector<16x16xf32> to vector<16x16xbf16>
    %34 = vector.extract_strided_slice %10 {offsets = [0, 0], sizes = [16, 32], strides = [1, 1]} : vector<64x32xbf16> to vector<16x32xbf16>
    %cst_18 = arith.constant dense<0.000000e+00> : vector<16x32xf32>
    %35 = tpu.matmul %33, %34, %cst_18 {dimension_numbers = #tpu.dot_dimension_numbers<[1], [0], [0], [1], [0, 0, 1, 1], [], []>} : vector<16x16xbf16>, vector<16x32xbf16>, vector<16x32xf32> -> vector<16x32xf32>
    %36 = arith.addf %11, %35 : vector<16x32xf32>
    %37 = vector.extract_strided_slice %5 {offsets = [0, 16], sizes = [16, 16], strides = [1, 1]} : vector<16x64xf32> to vector<16x16xf32>
    %cst_19 = arith.constant 2.500000e-01 : f32
    %38 = vector.broadcast %cst_19 : f32 to vector<16x16xf32>
    %39 = arith.mulf %37, %38 : vector<16x16xf32>
    %40 = vector.extract_strided_slice %8 {offsets = [0, 16], sizes = [16, 16], strides = [1, 1]} : vector<16x64xf32> to vector<16x16xf32>
    %41 = vector.extract_strided_slice %9 {offsets = [0, 16], sizes = [16, 16], strides = [1, 1]} : vector<16x64xf32> to vector<16x16xf32>
    %42 = arith.truncf %39 : vector<16x16xf32> to vector<16x16xbf16>
    %43 = arith.truncf %40 : vector<16x16xf32> to vector<16x16xbf16>
    %cst_20 = arith.constant dense<0.000000e+00> : vector<16x16xf32>
    %44 = tpu.matmul %42, %43, %cst_20 {dimension_numbers = #tpu.dot_dimension_numbers<[1], [1], [0], [0], [0, 0, 1, 0], [], []>} : vector<16x16xbf16>, vector<16x16xbf16>, vector<16x16xf32> -> vector<16x16xf32>
    %cst_21 = arith.constant dense<0xFF800000> : vector<16xf32>
    %45 = vector.multi_reduction <maximumf>, %44, %cst_21 [1] : vector<16x16xf32> to vector<16xf32>
    %46 = vector.shape_cast %45 : vector<16xf32> to vector<16x1xf32>
    %47 = vector.broadcast %46 : vector<16x1xf32> to vector<16x16xf32>
    %48 = arith.subf %44, %47 : vector<16x16xf32>
    %49 = math.exp %48 : vector<16x16xf32>
    %cst_22 = arith.constant dense<0.000000e+00> : vector<16xf32>
    %50 = vector.multi_reduction <add>, %49, %cst_22 [1] : vector<16x16xf32> to vector<16xf32>
    %51 = vector.shape_cast %50 : vector<16xf32> to vector<16x1xf32>
    %52 = tpu.reciprocal %51 {approx = true} : vector<16x1xf32> -> vector<16x1xf32>
    %53 = vector.broadcast %52 : vector<16x1xf32> to vector<16x16xf32>
    %54 = arith.mulf %49, %53 : vector<16x16xf32>
    %55 = arith.truncf %54 : vector<16x16xf32> to vector<16x16xbf16>
    %56 = arith.truncf %41 : vector<16x16xf32> to vector<16x16xbf16>
    %cst_23 = arith.constant dense<0.000000e+00> : vector<16x16xf32>
    %57 = tpu.matmul %55, %56, %cst_23 {dimension_numbers = #tpu.dot_dimension_numbers<[1], [0], [0], [1], [0, 0, 1, 1], [], []>} : vector<16x16xbf16>, vector<16x16xbf16>, vector<16x16xf32> -> vector<16x16xf32>
    %58 = arith.truncf %57 : vector<16x16xf32> to vector<16x16xbf16>
    %59 = vector.extract_strided_slice %10 {offsets = [16, 0], sizes = [16, 32], strides = [1, 1]} : vector<64x32xbf16> to vector<16x32xbf16>
    %cst_24 = arith.constant dense<0.000000e+00> : vector<16x32xf32>
    %60 = tpu.matmul %58, %59, %cst_24 {dimension_numbers = #tpu.dot_dimension_numbers<[1], [0], [0], [1], [0, 0, 1, 1], [], []>} : vector<16x16xbf16>, vector<16x32xbf16>, vector<16x32xf32> -> vector<16x32xf32>
    %61 = arith.addf %36, %60 : vector<16x32xf32>
    %62 = vector.extract_strided_slice %5 {offsets = [0, 32], sizes = [16, 16], strides = [1, 1]} : vector<16x64xf32> to vector<16x16xf32>
    %cst_25 = arith.constant 2.500000e-01 : f32
    %63 = vector.broadcast %cst_25 : f32 to vector<16x16xf32>
    %64 = arith.mulf %62, %63 : vector<16x16xf32>
    %65 = vector.extract_strided_slice %8 {offsets = [0, 32], sizes = [16, 16], strides = [1, 1]} : vector<16x64xf32> to vector<16x16xf32>
    %66 = vector.extract_strided_slice %9 {offsets = [0, 32], sizes = [16, 16], strides = [1, 1]} : vector<16x64xf32> to vector<16x16xf32>
    %67 = arith.truncf %64 : vector<16x16xf32> to vector<16x16xbf16>
    %68 = arith.truncf %65 : vector<16x16xf32> to vector<16x16xbf16>
    %cst_26 = arith.constant dense<0.000000e+00> : vector<16x16xf32>
    %69 = tpu.matmul %67, %68, %cst_26 {dimension_numbers = #tpu.dot_dimension_numbers<[1], [1], [0], [0], [0, 0, 1, 0], [], []>} : vector<16x16xbf16>, vector<16x16xbf16>, vector<16x16xf32> -> vector<16x16xf32>
    %cst_27 = arith.constant dense<0xFF800000> : vector<16xf32>
    %70 = vector.multi_reduction <maximumf>, %69, %cst_27 [1] : vector<16x16xf32> to vector<16xf32>
    %71 = vector.shape_cast %70 : vector<16xf32> to vector<16x1xf32>
    %72 = vector.broadcast %71 : vector<16x1xf32> to vector<16x16xf32>
    %73 = arith.subf %69, %72 : vector<16x16xf32>
    %74 = math.exp %73 : vector<16x16xf32>
    %cst_28 = arith.constant dense<0.000000e+00> : vector<16xf32>
    %75 = vector.multi_reduction <add>, %74, %cst_28 [1] : vector<16x16xf32> to vector<16xf32>
    %76 = vector.shape_cast %75 : vector<16xf32> to vector<16x1xf32>
    %77 = tpu.reciprocal %76 {approx = true} : vector<16x1xf32> -> vector<16x1xf32>
    %78 = vector.broadcast %77 : vector<16x1xf32> to vector<16x16xf32>
    %79 = arith.mulf %74, %78 : vector<16x16xf32>
    %80 = arith.truncf %79 : vector<16x16xf32> to vector<16x16xbf16>
    %81 = arith.truncf %66 : vector<16x16xf32> to vector<16x16xbf16>
    %cst_29 = arith.constant dense<0.000000e+00> : vector<16x16xf32>
    %82 = tpu.matmul %80, %81, %cst_29 {dimension_numbers = #tpu.dot_dimension_numbers<[1], [0], [0], [1], [0, 0, 1, 1], [], []>} : vector<16x16xbf16>, vector<16x16xbf16>, vector<16x16xf32> -> vector<16x16xf32>
    %83 = arith.truncf %82 : vector<16x16xf32> to vector<16x16xbf16>
    %84 = vector.extract_strided_slice %10 {offsets = [32, 0], sizes = [16, 32], strides = [1, 1]} : vector<64x32xbf16> to vector<16x32xbf16>
    %cst_30 = arith.constant dense<0.000000e+00> : vector<16x32xf32>
    %85 = tpu.matmul %83, %84, %cst_30 {dimension_numbers = #tpu.dot_dimension_numbers<[1], [0], [0], [1], [0, 0, 1, 1], [], []>} : vector<16x16xbf16>, vector<16x32xbf16>, vector<16x32xf32> -> vector<16x32xf32>
    %86 = arith.addf %61, %85 : vector<16x32xf32>
    %87 = vector.extract_strided_slice %5 {offsets = [0, 48], sizes = [16, 16], strides = [1, 1]} : vector<16x64xf32> to vector<16x16xf32>
    %cst_31 = arith.constant 2.500000e-01 : f32
    %88 = vector.broadcast %cst_31 : f32 to vector<16x16xf32>
    %89 = arith.mulf %87, %88 : vector<16x16xf32>
    %90 = vector.extract_strided_slice %8 {offsets = [0, 48], sizes = [16, 16], strides = [1, 1]} : vector<16x64xf32> to vector<16x16xf32>
    %91 = vector.extract_strided_slice %9 {offsets = [0, 48], sizes = [16, 16], strides = [1, 1]} : vector<16x64xf32> to vector<16x16xf32>
    %92 = arith.truncf %89 : vector<16x16xf32> to vector<16x16xbf16>
    %93 = arith.truncf %90 : vector<16x16xf32> to vector<16x16xbf16>
    %cst_32 = arith.constant dense<0.000000e+00> : vector<16x16xf32>
    %94 = tpu.matmul %92, %93, %cst_32 {dimension_numbers = #tpu.dot_dimension_numbers<[1], [1], [0], [0], [0, 0, 1, 0], [], []>} : vector<16x16xbf16>, vector<16x16xbf16>, vector<16x16xf32> -> vector<16x16xf32>
    %cst_33 = arith.constant dense<0xFF800000> : vector<16xf32>
    %95 = vector.multi_reduction <maximumf>, %94, %cst_33 [1] : vector<16x16xf32> to vector<16xf32>
    %96 = vector.shape_cast %95 : vector<16xf32> to vector<16x1xf32>
    %97 = vector.broadcast %96 : vector<16x1xf32> to vector<16x16xf32>
    %98 = arith.subf %94, %97 : vector<16x16xf32>
    %99 = math.exp %98 : vector<16x16xf32>
    %cst_34 = arith.constant dense<0.000000e+00> : vector<16xf32>
    %100 = vector.multi_reduction <add>, %99, %cst_34 [1] : vector<16x16xf32> to vector<16xf32>
    %101 = vector.shape_cast %100 : vector<16xf32> to vector<16x1xf32>
    %102 = tpu.reciprocal %101 {approx = true} : vector<16x1xf32> -> vector<16x1xf32>
    %103 = vector.broadcast %102 : vector<16x1xf32> to vector<16x16xf32>
    %104 = arith.mulf %99, %103 : vector<16x16xf32>
    %105 = arith.truncf %104 : vector<16x16xf32> to vector<16x16xbf16>
    %106 = arith.truncf %91 : vector<16x16xf32> to vector<16x16xbf16>
    %cst_35 = arith.constant dense<0.000000e+00> : vector<16x16xf32>
    %107 = tpu.matmul %105, %106, %cst_35 {dimension_numbers = #tpu.dot_dimension_numbers<[1], [0], [0], [1], [0, 0, 1, 1], [], []>} : vector<16x16xbf16>, vector<16x16xbf16>, vector<16x16xf32> -> vector<16x16xf32>
    %108 = arith.truncf %107 : vector<16x16xf32> to vector<16x16xbf16>
    %109 = vector.extract_strided_slice %10 {offsets = [48, 0], sizes = [16, 32], strides = [1, 1]} : vector<64x32xbf16> to vector<16x32xbf16>
    %cst_36 = arith.constant dense<0.000000e+00> : vector<16x32xf32>
    %110 = tpu.matmul %108, %109, %cst_36 {dimension_numbers = #tpu.dot_dimension_numbers<[1], [0], [0], [1], [0, 0, 1, 1], [], []>} : vector<16x16xbf16>, vector<16x32xbf16>, vector<16x32xf32> -> vector<16x32xf32>
    %111 = arith.addf %86, %110 : vector<16x32xf32>
    %c0_37 = arith.constant 0 : index
    %c0_38 = arith.constant 0 : index
    %112 = vector.load %arg6[%c0_37, %c0_38] : memref<1x32xf32, #tpu.memory_space<vmem>>, vector<1x32xf32>
    %113 = vector.broadcast %112 : vector<1x32xf32> to vector<16x32xf32>
    %114 = arith.addf %111, %113 : vector<16x32xf32>
    %c0_39 = arith.constant 0 : index
    %c0_40 = arith.constant 0 : index
    %115 = vector.load %arg7[%c0_39, %c0_40] : memref<32x32xbf16, #tpu.memory_space<vmem>>, vector<32x32xbf16>
    %cst_41 = arith.constant dense<0.000000e+00> : vector<16x32xf32>
    %116 = tpu.matmul %3, %115, %cst_41 {dimension_numbers = #tpu.dot_dimension_numbers<[1], [0], [0], [1], [0, 0, 1, 1], [], []>} : vector<16x32xbf16>, vector<32x32xbf16>, vector<16x32xf32> -> vector<16x32xf32>
    %c0_42 = arith.constant 0 : index
    %c0_43 = arith.constant 0 : index
    %117 = vector.load %arg8[%c0_42, %c0_43] : memref<1x32xf32, #tpu.memory_space<vmem>>, vector<1x32xf32>
    %118 = vector.broadcast %117 : vector<1x32xf32> to vector<16x32xf32>
    %119 = arith.addf %116, %118 : vector<16x32xf32>
    %cst_44 = arith.constant dense<0.000000e+00> : vector<16xf32>
    %120 = vector.multi_reduction <add>, %119, %cst_44 [1] : vector<16x32xf32> to vector<16xf32>
    %121 = vector.shape_cast %120 : vector<16xf32> to vector<16x1xf32>
    %cst_45 = arith.constant 3.200000e+01 : f32
    %122 = vector.broadcast %cst_45 : f32 to vector<16x1xf32>
    %123 = arith.divf %121, %122 : vector<16x1xf32>
    %124 = vector.broadcast %123 : vector<16x1xf32> to vector<16x32xf32>
    %125 = arith.subf %119, %124 : vector<16x32xf32>
    %126 = arith.mulf %125, %125 : vector<16x32xf32>
    %cst_46 = arith.constant dense<0.000000e+00> : vector<16xf32>
    %127 = vector.multi_reduction <add>, %126, %cst_46 [1] : vector<16x32xf32> to vector<16xf32>
    %128 = vector.shape_cast %127 : vector<16xf32> to vector<16x1xf32>
    %cst_47 = arith.constant 3.200000e+01 : f32
    %129 = vector.broadcast %cst_47 : f32 to vector<16x1xf32>
    %130 = arith.divf %128, %129 : vector<16x1xf32>
    %131 = vector.broadcast %123 : vector<16x1xf32> to vector<16x32xf32>
    %132 = arith.subf %119, %131 : vector<16x32xf32>
    %cst_48 = arith.constant 9.99999974E-6 : f32
    %133 = vector.broadcast %cst_48 : f32 to vector<16x1xf32>
    %134 = arith.addf %130, %133 : vector<16x1xf32>
    %135 = math.rsqrt %134 : vector<16x1xf32>
    %136 = vector.broadcast %135 : vector<16x1xf32> to vector<16x32xf32>
    %137 = arith.mulf %132, %136 : vector<16x32xf32>
    %c0_49 = arith.constant 0 : index
    %c0_50 = arith.constant 0 : index
    %138 = vector.load %arg9[%c0_49, %c0_50] : memref<1x32xf32, #tpu.memory_space<vmem>>, vector<1x32xf32>
    %139 = vector.broadcast %138 : vector<1x32xf32> to vector<16x32xf32>
    %140 = arith.mulf %137, %139 : vector<16x32xf32>
    %c0_51 = arith.constant 0 : index
    %c0_52 = arith.constant 0 : index
    %141 = vector.load %arg10[%c0_51, %c0_52] : memref<1x32xf32, #tpu.memory_space<vmem>>, vector<1x32xf32>
    %142 = vector.broadcast %141 : vector<1x32xf32> to vector<16x32xf32>
    %143 = arith.addf %140, %142 : vector<16x32xf32>
    %cst_53 = arith.constant 0.000000e+00 : f32
    %144 = vector.broadcast %cst_53 : f32 to vector<16x32xf32>
    %145 = arith.maximumf %143, %144 : vector<16x32xf32>
    %146 = arith.truncf %145 : vector<16x32xf32> to vector<16x32xbf16>
    %c0_54 = arith.constant 0 : index
    %c0_55 = arith.constant 0 : index
    %147 = vector.load %arg11[%c0_54, %c0_55] : memref<32x32xbf16, #tpu.memory_space<vmem>>, vector<32x32xbf16>
    %cst_56 = arith.constant dense<0.000000e+00> : vector<16x32xf32>
    %148 = tpu.matmul %146, %147, %cst_56 {dimension_numbers = #tpu.dot_dimension_numbers<[1], [0], [0], [1], [0, 0, 1, 1], [], []>} : vector<16x32xbf16>, vector<32x32xbf16>, vector<16x32xf32> -> vector<16x32xf32>
    %c0_57 = arith.constant 0 : index
    %c0_58 = arith.constant 0 : index
    %149 = vector.load %arg12[%c0_57, %c0_58] : memref<1x32xf32, #tpu.memory_space<vmem>>, vector<1x32xf32>
    %150 = vector.broadcast %149 : vector<1x32xf32> to vector<16x32xf32>
    %151 = arith.addf %148, %150 : vector<16x32xf32>
    %152 = arith.addf %114, %151 : vector<16x32xf32>
    %c0_59 = arith.constant 0 : index
    %c0_60 = arith.constant 0 : index
    %c0_61 = arith.constant 0 : index
    %153 = vector.load %arg13[%c0_59, %c0_60, %c0_61] : memref<1x16x32xf32, #tpu.memory_space<vmem>>, vector<1x16x32xf32>
    %154 = vector.shape_cast %153 : vector<1x16x32xf32> to vector<16x32xf32>
    %155 = vector.shape_cast %152 : vector<16x32xf32> to vector<1x16x32xf32>
    tpu.vector_store %arg13[%c0_59, %c0_60, %c0_61], %155 {strides = array<i32>} : memref<1x16x32xf32, #tpu.memory_space<vmem>>, vector<1x16x32xf32>,
    return
  }
  func.func @transform_0(%arg0: i32) -> (i32, i32, i32) {
    %c0_i32 = arith.constant 0 : i32
    %c0_i32_0 = arith.constant 0 : i32
    %c0_i32_1 = arith.constant 0 : i32
    return %arg0, %c0_i32, %c0_i32_0 : i32, i32, i32
  }
  func.func @transform_1(%arg0: i32) -> (i32, i32, i32) {
    %c0_i32 = arith.constant 0 : i32
    %c0_i32_0 = arith.constant 0 : i32
    %c0_i32_1 = arith.constant 0 : i32
    return %arg0, %c0_i32, %c0_i32_0 : i32, i32, i32
  }
  func.func @transform_2(%arg0: i32) -> (i32, i32) {
    %c0_i32 = arith.constant 0 : i32
    %c0_i32_0 = arith.constant 0 : i32
    %c0_i32_1 = arith.constant 0 : i32
    return %c0_i32, %c0_i32_0 : i32, i32
  }
  func.func @transform_3(%arg0: i32) -> (i32, i32) {
    %c0_i32 = arith.constant 0 : i32
    %c0_i32_0 = arith.constant 0 : i32
    %c0_i32_1 = arith.constant 0 : i32
    return %c0_i32, %c0_i32_0 : i32, i32
  }
  func.func @transform_4(%arg0: i32) -> (i32, i32) {
    %c0_i32 = arith.constant 0 : i32
    %c0_i32_0 = arith.constant 0 : i32
    %c0_i32_1 = arith.constant 0 : i32
    return %c0_i32, %c0_i32_0 : i32, i32
  }
  func.func @transform_5(%arg0: i32) -> (i32, i32) {
    %c0_i32 = arith.constant 0 : i32
    %c0_i32_0 = arith.constant 0 : i32
    %c0_i32_1 = arith.constant 0 : i32
    return %c0_i32, %c0_i32_0 : i32, i32
  }
  func.func @transform_6(%arg0: i32) -> (i32, i32) {
    %c0_i32 = arith.constant 0 : i32
    %c0_i32_0 = arith.constant 0 : i32
    %c0_i32_1 = arith.constant 0 : i32
    return %c0_i32, %c0_i32_0 : i32, i32
  }
  func.func @transform_7(%arg0: i32) -> (i32, i32) {
    %c0_i32 = arith.constant 0 : i32
    %c0_i32_0 = arith.constant 0 : i32
    %c0_i32_1 = arith.constant 0 : i32
    return %c0_i32, %c0_i32_0 : i32, i32
  }
  func.func @transform_8(%arg0: i32) -> (i32, i32) {
    %c0_i32 = arith.constant 0 : i32
    %c0_i32_0 = arith.constant 0 : i32
    %c0_i32_1 = arith.constant 0 : i32
    return %c0_i32, %c0_i32_0 : i32, i32
  }
  func.func @transform_9(%arg0: i32) -> (i32, i32) {
    %c0_i32 = arith.constant 0 : i32
    %c0_i32_0 = arith.constant 0 : i32
    %c0_i32_1 = arith.constant 0 : i32
    return %c0_i32, %c0_i32_0 : i32, i32
  }
  func.func @transform_10(%arg0: i32) -> (i32, i32) {
    %c0_i32 = arith.constant 0 : i32
    %c0_i32_0 = arith.constant 0 : i32
    %c0_i32_1 = arith.constant 0 : i32
    return %c0_i32, %c0_i32_0 : i32, i32
  }
  func.func @transform_11(%arg0: i32) -> (i32, i32) {
    %c0_i32 = arith.constant 0 : i32
    %c0_i32_0 = arith.constant 0 : i32
    %c0_i32_1 = arith.constant 0 : i32
    return %c0_i32, %c0_i32_0 : i32, i32
  }
  func.func @transform_12(%arg0: i32) -> (i32, i32, i32) {
    %c0_i32 = arith.constant 0 : i32
    %c0_i32_0 = arith.constant 0 : i32
    %c0_i32_1 = arith.constant 0 : i32
    return %arg0, %c0_i32, %c0_i32_0 : i32, i32, i32
  }
}

</mosaic_0001>

<llo_original>
// kernel: sub.8
$region0: #{sub.8}
  %s0 = inlined_call_operand.vmem [shape: s32[2,4,4], index: 0, kind: input, shape index: {}]
  %s1 = inlined_call_operand.vmem [shape: s32[2,16], index: 1, kind: output, shape index: {}]
  $region1: #{sub.8} parent=0
    #allocation0 [shape = 'u8[4096]{0}', space=vmem, size = 0x1000, scoped, tag = 'scoped mem for output reshape']
    #allocation1 [shape = 'u8[8192]{0}', space=vmem, size = 0x2000, scoped, tag = 'scoped mem for input reshape']
    %s3 = sshll.u32 1, 4
    %s4 = ssub.s32 %s3, 1
    %s5 = scalar_lea.vmem %s0, 4
    %v6 = vld [vmem:[%s5] sm:%s4]
    %s7 = scalar_lea.vmem [#allocation1], 8
    %8 = vst [vmem:[%s7] sm:%s4] %v6
    %v9 = vld [vmem:[%s0] sm:%s4]
    %10 = vst [vmem:[#allocation1] sm:%s4] %v9
    %s11 = smov 3
    %v12 = vld [vmem:[#allocation1] ss:$8 sm:%s11]
    %vm13 = vcmask 31744
    %14 = vst.msk [vmem:[#allocation0] sm:$0x3] %vm13, %v12
    %s15 = scalar_lea.vmem [#allocation1], 3
    %s16 = smov 3
    %v17 = vld [vmem:[%s15] ss:$8 sm:%s16]
    %18 = vrot.lane.b32.xlu0 %v17, 12
    %v19 = vpop.permute.xlu0 %18
    %vm20 = vcmask 130144
    %21 = vst.msk [vmem:[#allocation0] sm:$0x3] %vm20, %v19
    %s22 = scalar_lea.vmem [#allocation1], 2
    %s23 = smov 3
    %v24 = vld [vmem:[%s22] ss:$8 sm:%s23]
    %25 = vrot.lane.b32.xlu0 %v24, 8
    %v26 = vpop.permute.xlu0 %25
    %vm27 = vcmask 97344
    %28 = vst.msk [vmem:[#allocation0] sm:$0x3] %vm27, %v26
    %s29 = scalar_lea.vmem [#allocation1], 1
    %s30 = smov 3
    %v31 = vld [vmem:[%s29] ss:$8 sm:%s30]
    %32 = vrot.lane.b32.xlu0 %v31, 4
    %v33 = vpop.permute.xlu0 %32
    %vm34 = vcmask 64544
    %35 = vst.msk [vmem:[#allocation0] sm:$0x3] %vm34, %v33
    %s37 = sshll.u32 1, 2
    %s38 = ssub.s32 %s37, 1
    %v40 = vld [vmem:[#allocation0] sm:%s38]
    %s41 = sshll.u32 1, 2
    %s42 = ssub.s32 %s41, 1
    %43 = vst [vmem:[%s1] sm:%s42] %v40

// kernel: global_local_attention.5
$region0: #{global_local_attention.5}
  #allocation0 [shape = 'u32[]', space=smem, size = 0x4, offset = 0x4, fixed_abs, tag = 'smem constant byte address 0x4 - core index']
  #allocation1 [shape = 'u32[144,128]{1,0:T(1,128)}', space=vmem, size = 0x12000, scoped, tag = 'internal scratch']
  %s0 = inlined_call_operand.vmem [shape: bf16[32,64], index: 0, kind: input, shape index: {}]
  %s1 = inlined_call_operand.vmem [shape: bf16[64,32], index: 1, kind: input, shape index: {}]
  %s2 = inlined_call_operand.vmem [shape: f32[1,32], index: 2, kind: input, shape index: {}]
  %s3 = inlined_call_operand.vmem [shape: f32[1,32], index: 3, kind: input, shape index: {}]
  %s4 = inlined_call_operand.vmem [shape: f32[1,32], index: 4, kind: input, shape index: {}]
  %s5 = inlined_call_operand.vmem [shape: bf16[32,32], index: 5, kind: input, shape index: {}]
  %s6 = inlined_call_operand.vmem [shape: f32[1,32], index: 6, kind: input, shape index: {}]
  %s7 = inlined_call_operand.hbm [shape: f32[32,32], index: 7, kind: output, shape index: {}]
  %s8 = sld [smem:[#allocation0]]
  $region38: #{global_local_attention.5} parent=0
    _
  %s10 = ssub.s32 1, %s8
  %s11 = scalar_select 0, %s10, %s8
  $region1: #{global_local_attention.5} parent=0
    #allocation2 [shape = 'u8[16384]{0}', space=vmem, size = 0x4000, scoped, tag = 'output window, operand 0, single buffered']
    #allocation3 [shape = 's32[1]{0}', space=sflag, size = 0x4, scoped, tag = 'scoped memory for global_local_attention.5']
    %12 = vsyncpa [#allocation3], 0
    // Predicated region
    $region2: #{global_local_attention.5} parent=1 // pred_check
      _
    $region3: #{global_local_attention.5} parent=1 // pred_check_branch
      %14 = sbr.rel (0) target = $region5
    $region4: #{global_local_attention.5} parent=1 // pred_region
      _
    $region5: #{global_local_attention.5} parent=1 // pred_fallthru
      _
    // Predicated region
    $region6: #{global_local_attention.5} parent=1 // pred_check
      _
    $region7: #{global_local_attention.5} parent=1 // pred_check_branch
      %16 = sbr.rel (0) target = $region9
    $region8: #{global_local_attention.5} parent=1 // pred_region
      _
    $region9: #{global_local_attention.5} parent=1 // pred_fallthru
      _
    // Predicated region
    $region10: #{global_local_attention.5} parent=1 // pred_check
      _
    $region11: #{global_local_attention.5} parent=1 // pred_check_branch
      %18 = sbr.rel (0) target = $region13
    $region12: #{global_local_attention.5} parent=1 // pred_region
      _
    $region13: #{global_local_attention.5} parent=1 // pred_fallthru
      _
    // Predicated region
    $region14: #{global_local_attention.5} parent=1 // pred_check
      _
    $region15: #{global_local_attention.5} parent=1 // pred_check_branch
      %20 = sbr.rel (0) target = $region17
    $region16: #{global_local_attention.5} parent=1 // pred_region
      _
    $region17: #{global_local_attention.5} parent=1 // pred_fallthru
      _
    // Predicated region
    $region18: #{global_local_attention.5} parent=1 // pred_check
      _
    $region19: #{global_local_attention.5} parent=1 // pred_check_branch
      %22 = sbr.rel (0) target = $region21
    $region20: #{global_local_attention.5} parent=1 // pred_region
      _
    $region21: #{global_local_attention.5} parent=1 // pred_fallthru
      _
    // Predicated region
    $region22: #{global_local_attention.5} parent=1 // pred_check
      _
    $region23: #{global_local_attention.5} parent=1 // pred_check_branch
      %24 = sbr.rel (0) target = $region25
    $region24: #{global_local_attention.5} parent=1 // pred_region
      _
    $region25: #{global_local_attention.5} parent=1 // pred_fallthru
      _
    // Predicated region
    $region26: #{global_local_attention.5} parent=1 // pred_check
      _
    $region27: #{global_local_attention.5} parent=1 // pred_check_branch
      %26 = sbr.rel (0) target = $region29
    $region28: #{global_local_attention.5} parent=1 // pred_region
      _
    $region29: #{global_local_attention.5} parent=1 // pred_fallthru
      _
    %v28 = vld [vmem:[%s0] sm:$0xf]
    %v29 = vld [vmem:[%s0 + $0x4] sm:$0xf]
    %v30 = vld [vmem:[%s0 + $0x8] sm:$0xf]
    %v31 = vld [vmem:[%s0 + $0xc] sm:$0xf]
    %v32 = vld [vmem:[%s1] sm:$0xf]
    %v33 = vld [vmem:[%s1 + $0x4] sm:$0xf]
    %v34 = vld [vmem:[%s1 + $0x8] sm:$0xf]
    %v35 = vld [vmem:[%s1 + $0xc] sm:$0xf]
    %v36 = vld [vmem:[%s1 + $0x10] sm:$0xf]
    %v37 = vld [vmem:[%s1 + $0x14] sm:$0xf]
    %v38 = vld [vmem:[%s1 + $0x18] sm:$0xf]
    %v39 = vld [vmem:[%s1 + $0x1c] sm:$0xf]
    %v40 = vld [vmem:[%s2] sm:$0x1]
    %v42 = vlaneseq
    %v43 = vshrl.u32 %v42, 7
    %v44 = vsub.s32 0, %v43
    %v45 = vrot.slane %v40, %v44
    %v51 = vunpack.c.l.b16 %v28
    %v52 = vunpack.c.l.b16 %v29
    %v53 = vunpack.c.l.b16 %v30
    %v54 = vunpack.c.l.b16 %v31
    %v55 = vpack.c.b16 %v52, %v51
    %v56 = vpack.c.b16 %v54, %v53
    %v65 = vunpack.c.l.b16 %v32
    %v66 = vunpack.c.l.b16 %v33
    %v67 = vunpack.c.l.b16 %v34
    %v68 = vunpack.c.l.b16 %v35
    %v69 = vunpack.c.l.b16 %v36
    %v70 = vunpack.c.l.b16 %v37
    %v71 = vunpack.c.l.b16 %v38
    %v72 = vunpack.c.l.b16 %v39
    %v73 = vpack.c.b16 %v66, %v65
    %v74 = vpack.c.b16 %v68, %v67
    %v75 = vpack.c.b16 %v70, %v69
    %v76 = vpack.c.b16 %v72, %v71
    %vm81 = vcmask 523264
    %v83 = vsel %vm81, %v55, 0
    %v86 = vsel %vm81, %v56, 0
    %88 = vmatprep.subr.bf16.mxu0 0
    %89 = vmatpush1.bf16.msra.mxu0 0
    %90 = vmatprep.subr.bf16.mxu0 0
    %91 = vmatpush1.bf16.msra.mxu0 0
    %92 = vmatprep.subr.bf16.mxu0 0
    %93 = vmatpush1.bf16.msra.mxu0 0
    %94 = vmatprep.subr.bf16.mxu0 0
    %95 = vmatpush1.bf16.msra.mxu0 0
    %96 = vmatprep.subr.bf16.mxu0 0
    %97 = vmatpush1.bf16.msra.mxu0 %v76
    %98 = vmatprep.subr.bf16.mxu0 0
    %99 = vmatpush1.bf16.msra.mxu0 %v75
    %100 = vmatprep.subr.bf16.mxu0 0
    %101 = vmatpush1.bf16.msra.mxu0 %v74
    %102 = vmatprep.subr.bf16.mxu0 0
    %103 = vmatpush1.bf16.msra.mxu0 %v73
    %104 = vmatprep.subr.bf16.mxu0 0
    %105 = vmatpush2.bf16.msra.mxu0 0
    %106 = vmatprep.subr.bf16.mxu0 0
    %107 = vmatpush2.bf16.msra.mxu0 0
    %108 = vmatprep.subr.bf16.mxu0 0
    %109 = vmatpush2.bf16.msra.mxu0 0
    %110 = vmatprep.subr.bf16.mxu0 0
    %111 = vmatpush2.bf16.msra.mxu0 0
    %112 = vmatprep.subr.bf16.mxu0 0
    %113 = vmatpush2.bf16.msra.mxu0 0
    %114 = vmatprep.subr.bf16.mxu0 0
    %115 = vmatpush2.bf16.msra.mxu0 0
    %116 = vmatprep.subr.bf16.mxu0 0
    %117 = vmatpush2.bf16.msra.mxu0 0
    %118 = vmatprep.subr.bf16.mxu0 0
    %119 = vmatpush2.bf16.msra.mxu0 0
    %120 = vmatprep.mubr.bf16.mxu0 0
    %121 = vmatmul.mubr.bf16.gmra.mxu0 %v83
    %v122 = vpop.f32.mrf.mxu0
    %v123 = vadd.f32 %v45, %v122
    %v124 = vpop.f32.mrf.mxu0
    %v125 = vpop.f32.mrf.mxu0
    %v126 = vadd.f32 %v45, %v125
    %v127 = vpop.f32.mrf.mxu0
    %128 = vmatprep.mubr.bf16.mxu0 0
    %129 = vmatmul.mubr.bf16.gmra.mxu0 %v86
    %v130 = vpop.f32.mrf.mxu0
    %v131 = vadd.f32 %v45, %v130
    %v132 = vpop.f32.mrf.mxu0
    %v133 = vpop.f32.mrf.mxu0
    %v134 = vadd.f32 %v45, %v133
    %v135 = vpop.f32.mrf.mxu0
    %136 = vdwg.mxu0
    %vm137 = vcmask 261120
    %v138 = vsel %vm137, %v123, 0.0
    %139 = vadd.xlane.f32.xlu0 %v138
    %v140 = vpop.xlane.xlu0 %139
    %v141 = vsel %vm137, %v126, 0.0
    %142 = vadd.xlane.f32.xlu0 %v141
    %v143 = vpop.xlane.xlu0 %142
    %v144 = vsel %vm137, %v131, 0.0
    %145 = vadd.xlane.f32.xlu0 %v144
    %v146 = vpop.xlane.xlu0 %145
    %v147 = vsel %vm137, %v134, 0.0
    %148 = vadd.xlane.f32.xlu0 %v147
    %v149 = vpop.xlane.xlu0 %148
    %v150 = vrcp.pop 32.0
    %v151 = vmul.f32 %v140, %v150
    %v152 = vmul.f32 %v143, %v150
    %v153 = vmul.f32 %v146, %v150
    %v154 = vmul.f32 %v149, %v150
    %v155 = vsub.f32 %v123, %v151
    %v156 = vsub.f32 %v126, %v152
    %v157 = vsub.f32 %v131, %v153
    %v158 = vsub.f32 %v134, %v154
    %v159 = vmul.f32 %v155, %v155
    %v160 = vmul.f32 %v156, %v156
    %v161 = vmul.f32 %v157, %v157
    %v162 = vmul.f32 %v158, %v158
    %v163 = vsel %vm137, %v159, 0.0
    %164 = vadd.xlane.f32.xlu0 %v163
    %v165 = vpop.xlane.xlu0 %164
    %v166 = vsel %vm137, %v160, 0.0
    %167 = vadd.xlane.f32.xlu0 %v166
    %v168 = vpop.xlane.xlu0 %167
    %v169 = vsel %vm137, %v161, 0.0
    %170 = vadd.xlane.f32.xlu0 %v169
    %v171 = vpop.xlane.xlu0 %170
    %v172 = vsel %vm137, %v162, 0.0
    %173 = vadd.xlane.f32.xlu0 %v172
    %v174 = vpop.xlane.xlu0 %173
    %v175 = vmul.f32 %v165, %v150
    %v176 = vmul.f32 %v168, %v150
    %v177 = vmul.f32 %v171, %v150
    %v178 = vmul.f32 %v174, %v150
    %v179 = vadd.f32 %v175, 1e-05
    %v180 = vadd.f32 %v176, 1e-05
    %v181 = vadd.f32 %v177, 1e-05
    %v182 = vadd.f32 %v178, 1e-05
    %v183 = vrsqrt.pop %v179
    %v184 = vrsqrt.pop %v180
    %v185 = vrsqrt.pop %v181
    %v186 = vrsqrt.pop %v182
    %v187 = vmul.f32 %v155, %v183
    %v188 = vmul.f32 %v156, %v184
    %v189 = vmul.f32 %v157, %v185
    %v190 = vmul.f32 %v158, %v186
    %v191 = vld [vmem:[%s3] sm:$0x1]
    %v193 = vlaneseq
    %v194 = vshrl.u32 %v193, 7
    %v195 = vsub.s32 0, %v194
    %v196 = vrot.slane %v191, %v195
    %v198 = vmul.f32 %v187, %v196
    %v199 = vmul.f32 %v188, %v196
    %v200 = vmul.f32 %v189, %v196
    %v201 = vmul.f32 %v190, %v196
    %v202 = vld [vmem:[%s4] sm:$0x1]
    %v204 = vlaneseq
    %v205 = vshrl.u32 %v204, 7
    %v206 = vsub.s32 0, %v205
    %v207 = vrot.slane %v202, %v206
    %v209 = vadd.f32 %v198, %v207
    %v210 = vadd.f32 %v199, %v207
    %v211 = vadd.f32 %v200, %v207
    %v212 = vadd.f32 %v201, %v207
    %v213 = vmax.f32 %v209, 0.0
    %v214 = vmax.f32 %v210, 0.0
    %v215 = vmax.f32 %v211, 0.0
    %v216 = vmax.f32 %v212, 0.0
    %v217 = vpack.c.bf16 %v214, %v213
    %v218 = vpack.c.bf16 %v216, %v215
    %v219 = vld [vmem:[%s5] sm:$0xf]
    %v220 = vld [vmem:[%s5 + $0x4] sm:$0xf]
    %v221 = vld [vmem:[%s5 + $0x8] sm:$0xf]
    %v222 = vld [vmem:[%s5 + $0xc] sm:$0xf]
    %v223 = vld [vmem:[%s6] sm:$0x1]
    %v225 = vlaneseq
    %v226 = vshrl.u32 %v225, 7
    %v227 = vsub.s32 0, %v226
    %v228 = vrot.slane %v223, %v227
    %v234 = vunpack.c.l.b16 %v219
    %v235 = vunpack.c.l.b16 %v220
    %v236 = vunpack.c.l.b16 %v221
    %v237 = vunpack.c.l.b16 %v222
    %v238 = vpack.c.b16 %v235, %v234
    %v239 = vpack.c.b16 %v237, %v236
    %v243 = vsel %vm137, %v217, 0
    %v246 = vsel %vm137, %v218, 0
    %248 = vmatprep.subr.bf16.mxu0 0
    %249 = vmatpush1.bf16.msra.mxu0 0
    %250 = vmatprep.subr.bf16.mxu0 0
    %251 = vmatpush1.bf16.msra.mxu0 0
    %252 = vmatprep.subr.bf16.mxu0 0
    %253 = vmatpush1.bf16.msra.mxu0 0
    %254 = vmatprep.subr.bf16.mxu0 0
    %255 = vmatpush1.bf16.msra.mxu0 0
    %256 = vmatprep.subr.bf16.mxu0 0
    %257 = vmatpush1.bf16.msra.mxu0 0
    %258 = vmatprep.subr.bf16.mxu0 0
    %259 = vmatpush1.bf16.msra.mxu0 0
    %260 = vmatprep.subr.bf16.mxu0 0
    %261 = vmatpush1.bf16.msra.mxu0 %v239
    %262 = vmatprep.subr.bf16.mxu0 0
    %263 = vmatpush1.bf16.msra.mxu0 %v238
    %264 = vmatprep.subr.bf16.mxu0 0
    %265 = vmatpush2.bf16.msra.mxu0 0
    %266 = vmatprep.subr.bf16.mxu0 0
    %267 = vmatpush2.bf16.msra.mxu0 0
    %268 = vmatprep.subr.bf16.mxu0 0
    %269 = vmatpush2.bf16.msra.mxu0 0
    %270 = vmatprep.subr.bf16.mxu0 0
    %271 = vmatpush2.bf16.msra.mxu0 0
    %272 = vmatprep.subr.bf16.mxu0 0
    %273 = vmatpush2.bf16.msra.mxu0 0
    %274 = vmatprep.subr.bf16.mxu0 0
    %275 = vmatpush2.bf16.msra.mxu0 0
    %276 = vmatprep.subr.bf16.mxu0 0
    %277 = vmatpush2.bf16.msra.mxu0 0
    %278 = vmatprep.subr.bf16.mxu0 0
    %279 = vmatpush2.bf16.msra.mxu0 0
    %280 = vmatprep.mubr.bf16.mxu0 0
    %281 = vmatmul.mubr.bf16.gmra.mxu0 %v243
    %v282 = vpop.f32.mrf.mxu0
    %v283 = vadd.f32 %v228, %v282
    %v284 = vpop.f32.mrf.mxu0
    %v285 = vpop.f32.mrf.mxu0
    %v286 = vadd.f32 %v228, %v285
    %v287 = vpop.f32.mrf.mxu0
    %288 = vmatprep.mubr.bf16.mxu0 0
    %289 = vmatmul.mubr.bf16.gmra.mxu0 %v246
    %v290 = vpop.f32.mrf.mxu0
    %v291 = vadd.f32 %v228, %v290
    %v292 = vpop.f32.mrf.mxu0
    %v293 = vpop.f32.mrf.mxu0
    %v294 = vadd.f32 %v228, %v293
    %v295 = vpop.f32.mrf.mxu0
    %296 = vdwg.mxu0
    %297 = vst.msk [vmem:[#allocation2] sm:$0xff] %vm137, %v283
    %298 = vst.msk [vmem:[#allocation2 + $0x8] sm:$0xff] %vm137, %v286
    %299 = vst.msk [vmem:[#allocation2 + $0x10] sm:$0xff] %vm137, %v291
    %300 = vst.msk [vmem:[#allocation2 + $0x18] sm:$0xff] %vm137, %v294
    // Predicated region
    $region30: #{global_local_attention.5} parent=1 // pred_check
      _
    $region31: #{global_local_attention.5} parent=1 // pred_check_branch
      %302 = sbr.rel (0) target = $region33
    $region32: #{global_local_attention.5} parent=1 // pred_region
      %s304 = ssub.s32 512, 512
      %305 = vsyncadd [#allocation3], %s304
      %s306 = sshll.u32 [#allocation2], 4
      %s307 = int_to_ptr.vmem [resolvable:$true] %s306
      %312 = dma.vmem_to_hbm [thread:$0]  %s307, 512, %s7, [#allocation3], 128, 128, 8
    $region33: #{global_local_attention.5} parent=1 // pred_fallthru
      _
    // Predicated region
    $region34: #{global_local_attention.5} parent=1 // pred_check
      _
    $region35: #{global_local_attention.5} parent=1 // pred_check_branch
      %314 = sbr.rel (0) target = $region37
    $region36: #{global_local_attention.5} parent=1 // pred_region
      %315 = dma.done [#allocation3], 512
    $region37: #{global_local_attention.5} parent=1 // pred_fallthru
      _
    %316 = vsyncpa [#allocation3], 1

// kernel: global_local_attention.4
$region0: #{global_local_attention.4}
  #allocation0 [shape = 'u32[]', space=smem, size = 0x4, offset = 0x4, fixed_abs, tag = 'smem constant byte address 0x4 - core index']
  #allocation1 [shape = 'u32[144,128]{1,0:T(1,128)}', space=vmem, size = 0x12000, scoped, tag = 'internal scratch']
  %s0 = inlined_call_operand.vmem [shape: bf16[2,16,32], index: 0, kind: input, shape index: {}]
  %s1 = inlined_call_operand.vmem [shape: bf16[32,64], index: 1, kind: input, shape index: {}]
  %s2 = inlined_call_operand.vmem [shape: bf16[32,128], index: 2, kind: input, shape index: {}]
  %s3 = inlined_call_operand.vmem [shape: bf16[64,32], index: 3, kind: input, shape index: {}]
  %s4 = inlined_call_operand.vmem [shape: f32[1,32], index: 4, kind: input, shape index: {}]
  %s5 = inlined_call_operand.vmem [shape: f32[4,16,16], index: 5, kind: input, shape index: {}]
  %s6 = inlined_call_operand.vmem [shape: f32[2,16,32], index: 6, kind: output, shape index: {}]
  %s7 = sld [smem:[#allocation0]]
  $region57: #{global_local_attention.4} parent=0
    _
  %s9 = ssub.s32 1, %s7
  %s10 = scalar_select 0, %s9, %s7
  loop: start=0, step=1, limit=4
  $region2: #{global_local_attention.4} parent=0 // loop_pre_header
    _
  $region3: #{global_local_attention.4} parent=0 // loop_header
    %s12 = sphi 0, %s16
    %p13 = scmp.ge.s32.totalorder %s12, 4
    %s22 = sphi 0, %s24
    %s25 = sphi 0, %s22
    %s26 = sphi 0, %s25
    %s42 = sphi 0, %s26
    %s46 = sphi 0, %s46
    %s48 = sphi 0, %s46
    %s49 = sphi 0, %s48
    %s63 = sphi 0, %s49
    %s67 = sphi 0, %s67
    %s69 = sphi 0, %s67
    %s70 = sphi 0, %s69
    %s84 = sphi 0, %s70
    %s88 = sphi 0, %s88
    %s90 = sphi 0, %s88
    %s91 = sphi 0, %s90
    %s105 = sphi 0, %s91
    %s109 = sphi 0, %s109
    %s111 = sphi 0, %s109
    %s112 = sphi 0, %s111
    %s126 = sphi 0, %s112
    %s130 = sphi 0, %s130
    %s132 = sphi 0, %s130
    %s133 = sphi 0, %s132
    %s147 = sphi 0, %s133
    %s153 = sphi 0, %s155
    %s156 = sphi 0, %s153
    %s157 = sphi 0, %s156
    %s173 = sphi 0, %s157
  $region4: #{global_local_attention.4} parent=0 // loop_header_branch
    %15 = sbr.rel (%p13) target = $region8
  $region5: #{global_local_attention.4} parent=0 // loop_body
    %s17 = ssub.s32 %s12, 1
    %s18 = ssub.s32 %s12, 2
    %s19 = sadd.s32 %s12, 1
    %s20 = ssub.s32 %s12, %s19
    %p21 = scmp.eq.s32.totalorder %s20, 0
    %s23 = sadd.s32 %s22, 1
    %s24 = scalar_select %p21, %s22, %s23
    %p27 = pneg %p21
    %p28 = scmp.eq.s32.totalorder %s12, 1
    %p29 = por %p27, %p28
    %p30 = scmp.ne.s32.totalorder %s22, %s25
    %p31 = scmp.eq.s32.totalorder %s12, 0
    %p32 = por %p30, %p31
    %p33 = scmp.ne.s32.totalorder %s22, %s25
    %p34 = scmp.eq.s32.totalorder %s17, 1
    %p35 = por %p33, %p34
    %p36 = scmp.ne.s32.totalorder %s25, %s26
    %p37 = scmp.eq.s32.totalorder %s17, 0
    %p38 = por %p36, %p37
    %p39 = scmp.ne.s32.totalorder %s25, %s26
    %p40 = scmp.eq.s32.totalorder %s18, 1
    %p41 = por %p39, %p40
    %p43 = scmp.ne.s32.totalorder %s26, %s42
    %p44 = scmp.eq.s32.totalorder %s18, 0
    %p45 = por %p43, %p44
    %s47 = sadd.s32 %s46, 1
    %p50 = scmp.eq.s32.totalorder %s12, 1
    %p51 = scmp.ne.s32.totalorder %s46, %s48
    %p52 = scmp.eq.s32.totalorder %s12, 0
    %p53 = por %p51, %p52
    %p54 = scmp.ne.s32.totalorder %s46, %s48
    %p55 = scmp.eq.s32.totalorder %s17, 1
    %p56 = por %p54, %p55
    %p57 = scmp.ne.s32.totalorder %s48, %s49
    %p58 = scmp.eq.s32.totalorder %s17, 0
    %p59 = por %p57, %p58
    %p60 = scmp.ne.s32.totalorder %s48, %s49
    %p61 = scmp.eq.s32.totalorder %s18, 1
    %p62 = por %p60, %p61
    %p64 = scmp.ne.s32.totalorder %s49, %s63
    %p65 = scmp.eq.s32.totalorder %s18, 0
    %p66 = por %p64, %p65
    %s68 = sadd.s32 %s67, 1
    %p71 = scmp.eq.s32.totalorder %s12, 1
    %p72 = scmp.ne.s32.totalorder %s67, %s69
    %p73 = scmp.eq.s32.totalorder %s12, 0
    %p74 = por %p72, %p73
    %p75 = scmp.ne.s32.totalorder %s67, %s69
    %p76 = scmp.eq.s32.totalorder %s17, 1
    %p77 = por %p75, %p76
    %p78 = scmp.ne.s32.totalorder %s69, %s70
    %p79 = scmp.eq.s32.totalorder %s17, 0
    %p80 = por %p78, %p79
    %p81 = scmp.ne.s32.totalorder %s69, %s70
    %p82 = scmp.eq.s32.totalorder %s18, 1
    %p83 = por %p81, %p82
    %p85 = scmp.ne.s32.totalorder %s70, %s84
    %p86 = scmp.eq.s32.totalorder %s18, 0
    %p87 = por %p85, %p86
    %s89 = sadd.s32 %s88, 1
    %p92 = scmp.eq.s32.totalorder %s12, 1
    %p93 = scmp.ne.s32.totalorder %s88, %s90
    %p94 = scmp.eq.s32.totalorder %s12, 0
    %p95 = por %p93, %p94
    %p96 = scmp.ne.s32.totalorder %s88, %s90
    %p97 = scmp.eq.s32.totalorder %s17, 1
    %p98 = por %p96, %p97
    %p99 = scmp.ne.s32.totalorder %s90, %s91
    %p100 = scmp.eq.s32.totalorder %s17, 0
    %p101 = por %p99, %p100
    %p102 = scmp.ne.s32.totalorder %s90, %s91
    %p103 = scmp.eq.s32.totalorder %s18, 1
    %p104 = por %p102, %p103
    %p106 = scmp.ne.s32.totalorder %s91, %s105
    %p107 = scmp.eq.s32.totalorder %s18, 0
    %p108 = por %p106, %p107
    %s110 = sadd.s32 %s109, 1
    %p113 = scmp.eq.s32.totalorder %s12, 1
    %p114 = scmp.ne.s32.totalorder %s109, %s111
    %p115 = scmp.eq.s32.totalorder %s12, 0
    %p116 = por %p114, %p115
    %p117 = scmp.ne.s32.totalorder %s109, %s111
    %p118 = scmp.eq.s32.totalorder %s17, 1
    %p119 = por %p117, %p118
    %p120 = scmp.ne.s32.totalorder %s111, %s112
    %p121 = scmp.eq.s32.totalorder %s17, 0
    %p122 = por %p120, %p121
    %p123 = scmp.ne.s32.totalorder %s111, %s112
    %p124 = scmp.eq.s32.totalorder %s18, 1
    %p125 = por %p123, %p124
    %p127 = scmp.ne.s32.totalorder %s112, %s126
    %p128 = scmp.eq.s32.totalorder %s18, 0
    %p129 = por %p127, %p128
    %s131 = sadd.s32 %s130, 1
    %p134 = scmp.eq.s32.totalorder %s12, 1
    %p135 = scmp.ne.s32.totalorder %s130, %s132
    %p136 = scmp.eq.s32.totalorder %s12, 0
    %p137 = por %p135, %p136
    %p138 = scmp.ne.s32.totalorder %s130, %s132
    %p139 = scmp.eq.s32.totalorder %s17, 1
    %p140 = por %p138, %p139
    %p141 = scmp.ne.s32.totalorder %s132, %s133
    %p142 = scmp.eq.s32.totalorder %s17, 0
    %p143 = por %p141, %p142
    %p144 = scmp.ne.s32.totalorder %s132, %s133
    %p145 = scmp.eq.s32.totalorder %s18, 1
    %p146 = por %p144, %p145
    %p148 = scmp.ne.s32.totalorder %s133, %s147
    %p149 = scmp.eq.s32.totalorder %s18, 0
    %p150 = por %p148, %p149
    %s151 = ssub.s32 %s12, %s19
    %p152 = scmp.eq.s32.totalorder %s151, 0
    %s154 = sadd.s32 %s153, 1
    %s155 = scalar_select %p152, %s153, %s154
    %p158 = pneg %p152
    %p159 = scmp.eq.s32.totalorder %s12, 1
    %p160 = por %p158, %p159
    %p161 = scmp.ne.s32.totalorder %s153, %s156
    %p162 = scmp.eq.s32.totalorder %s12, 0
    %p163 = por %p161, %p162
    %p164 = scmp.ne.s32.totalorder %s153, %s156
    %p165 = scmp.eq.s32.totalorder %s17, 1
    %p166 = por %p164, %p165
    %p167 = scmp.ne.s32.totalorder %s156, %s157
    %p168 = scmp.eq.s32.totalorder %s17, 0
    %p169 = por %p167, %p168
    %p170 = scmp.ne.s32.totalorder %s156, %s157
    %p171 = scmp.eq.s32.totalorder %s18, 1
    %p172 = por %p170, %p171
    %p174 = scmp.ne.s32.totalorder %s157, %s173
    %p175 = scmp.eq.s32.totalorder %s18, 0
    %p176 = por %p174, %p175
    %p177 = scmp.le.s32.totalorder 1, %s12
    %p178 = scmp.lt.s32.totalorder %s12, 3
    %p179 = pnand %p177, %p178
    %p180 = pneg %p179
    // Predicated region
    $region9: #{global_local_attention.4} parent=5 // pred_check
      _
    $region10: #{global_local_attention.4} parent=5 // pred_check_branch
      %182 = sbr.rel (%p179) target = $region12
    $region11: #{global_local_attention.4} parent=5 // pred_region
      %s183 = ssub.s32 %s12, 1
      // Predicated region
      $region13: #{global_local_attention.4} parent=11 // pred_check
        %p184 = pneg %p59
      $region14: #{global_local_attention.4} parent=11 // pred_check_branch
        %186 = sbr.rel (%p184) target = $region16
      $region15: #{global_local_attention.4} parent=11 // pred_region
        _
      $region16: #{global_local_attention.4} parent=11 // pred_fallthru
        _
      // Predicated region
      $region17: #{global_local_attention.4} parent=11 // pred_check
        %p187 = pneg %p80
      $region18: #{global_local_attention.4} parent=11 // pred_check_branch
        %189 = sbr.rel (%p187) target = $region20
      $region19: #{global_local_attention.4} parent=11 // pred_region
        _
      $region20: #{global_local_attention.4} parent=11 // pred_fallthru
        _
      // Predicated region
      $region21: #{global_local_attention.4} parent=11 // pred_check
        %p190 = pneg %p101
      $region22: #{global_local_attention.4} parent=11 // pred_check_branch
        %192 = sbr.rel (%p190) target = $region24
      $region23: #{global_local_attention.4} parent=11 // pred_region
        _
      $region24: #{global_local_attention.4} parent=11 // pred_fallthru
        _
      // Predicated region
      $region25: #{global_local_attention.4} parent=11 // pred_check
        %p193 = pneg %p122
      $region26: #{global_local_attention.4} parent=11 // pred_check_branch
        %195 = sbr.rel (%p193) target = $region28
      $region27: #{global_local_attention.4} parent=11 // pred_region
        _
      $region28: #{global_local_attention.4} parent=11 // pred_fallthru
        _
      // Predicated region
      $region29: #{global_local_attention.4} parent=11 // pred_check
        %p196 = pneg %p143
      $region30: #{global_local_attention.4} parent=11 // pred_check_branch
        %198 = sbr.rel (%p196) target = $region32
      $region31: #{global_local_attention.4} parent=11 // pred_region
        _
      $region32: #{global_local_attention.4} parent=11 // pred_fallthru
        _
    $region12: #{global_local_attention.4} parent=5 // pred_fallthru
      _
    %p199 = scmp.lt.s32.totalorder %s12, 2
    // Predicated region
    $region33: #{global_local_attention.4} parent=5 // pred_check
      %p200 = pneg %p199
    $region34: #{global_local_attention.4} parent=5 // pred_check_branch
      %202 = sbr.rel (%p200) target = $region36
    $region35: #{global_local_attention.4} parent=5 // pred_region
      // Predicated region
      $region37: #{global_local_attention.4} parent=35 // pred_check
        %p203 = pneg %p32
      $region38: #{global_local_attention.4} parent=35 // pred_check_branch
        %205 = sbr.rel (%p203) target = $region40
      $region39: #{global_local_attention.4} parent=35 // pred_region
        %p206 = scmp.lt.s32.totalorder %s12, 1
        %s207 = scalar_select %p206, %s12, 1
        %s208 = smul.addr %s207, 2
        %s209 = smul.addr %s208, 4
        %s210 = scalar_lea.vmem %s0, %s209
      $region40: #{global_local_attention.4} parent=35 // pred_fallthru
        _
    $region36: #{global_local_attention.4} parent=5 // pred_fallthru
      _
    %p211 = scmp.le.s32.totalorder 1, %s12
    %p212 = scmp.lt.s32.totalorder %s12, 3
    %p213 = pnand %p211, %p212
    %p214 = pneg %p213
    // Predicated region
    $region41: #{global_local_attention.4} parent=5 // pred_check
      _
    $region42: #{global_local_attention.4} parent=5 // pred_check_branch
      %216 = sbr.rel (%p213) target = $region44
    $region43: #{global_local_attention.4} parent=5 // pred_region
      %s217 = ssub.s32 %s12, 1
      %p218 = scmp.lt.s32.totalorder %s17, 1
      %s219 = scalar_select %p218, %s17, 1
      %s220 = smul.addr %s219, 2
      %s221 = smul.addr %s220, 4
      %s222 = scalar_lea.vmem %s0, %s221
      %p223 = pneg %p38
      %p224 = pneg %p35
      %p225 = pneg %p59
      %p226 = pneg %p56
      %p227 = pneg %p80
      %p228 = pneg %p77
      %p229 = pneg %p101
      %p230 = pneg %p98
      %p231 = pneg %p122
      %p232 = pneg %p119
      %p233 = pneg %p143
      %p234 = pneg %p140
      %p235 = pneg %p169
      %p236 = pneg %p166
      %p237 = scmp.lt.s32.totalorder %s17, 1
      %s238 = scalar_select %p237, %s17, 1
      %s239 = smul.addr %s238, 2
      %s240 = smul.addr %s239, 8
      %s241 = scalar_lea.vmem %s6, %s240
      %p242 = scmp.lt.s32.totalorder %s17, 1
      %s243 = scalar_select %p242, %s17, 1
      %s244 = smul.addr %s243, 2
      %s245 = smul.addr %s244, 4
      %s246 = scalar_lea.vmem %s0, %s245
      %p247 = scmp.lt.s32.totalorder %s17, 1
      %s248 = scalar_select %p247, %s17, 1
      %s249 = smul.addr %s248, 2
      %s250 = smul.addr %s249, 8
      %s251 = scalar_lea.vmem %s6, %s250
      %v253 = vld [vmem:[%s246] sm:$0xf]
      %v254 = vld [vmem:[%s246 + $0x4] sm:$0xf]
      %v255 = vld [vmem:[%s1] sm:$0xf]
      %v256 = vld [vmem:[%s1 + $0x4] sm:$0xf]
      %v257 = vld [vmem:[%s1 + $0x8] sm:$0xf]
      %v258 = vld [vmem:[%s1 + $0xc] sm:$0xf]
      %v261 = vunpack.c.l.b16 %v253
      %v262 = vunpack.c.l.b16 %v254
      %v263 = vpack.c.b16 %v262, %v261
      %v268 = vunpack.c.l.b16 %v255
      %v269 = vunpack.c.l.b16 %v256
      %v270 = vunpack.c.l.b16 %v257
      %v271 = vunpack.c.l.b16 %v258
      %v272 = vpack.c.b16 %v269, %v268
      %v273 = vpack.c.b16 %v271, %v270
      %vm276 = vcmask 261120
      %v278 = vsel %vm276, %v263, 0
      %280 = vmatprep.subr.bf16.mxu0 0
      %281 = vmatpush1.bf16.msra.mxu0 0
      %282 = vmatprep.subr.bf16.mxu0 0
      %283 = vmatpush1.bf16.msra.mxu0 0
      %284 = vmatprep.subr.bf16.mxu0 0
      %285 = vmatpush1.bf16.msra.mxu0 0
      %286 = vmatprep.subr.bf16.mxu0 0
      %287 = vmatpush1.bf16.msra.mxu0 0
      %288 = vmatprep.subr.bf16.mxu0 0
      %289 = vmatpush1.bf16.msra.mxu0 0
      %290 = vmatprep.subr.bf16.mxu0 0
      %291 = vmatpush1.bf16.msra.mxu0 0
      %292 = vmatprep.subr.bf16.mxu0 0
      %293 = vmatpush1.bf16.msra.mxu0 %v273
      %294 = vmatprep.subr.bf16.mxu0 0
      %295 = vmatpush1.bf16.msra.mxu0 %v272
      %296 = vmatprep.subr.bf16.mxu0 0
      %297 = vmatpush2.bf16.msra.mxu0 0
      %298 = vmatprep.subr.bf16.mxu0 0
      %299 = vmatpush2.bf16.msra.mxu0 0
      %300 = vmatprep.subr.bf16.mxu0 0
      %301 = vmatpush2.bf16.msra.mxu0 0
      %302 = vmatprep.subr.bf16.mxu0 0
      %303 = vmatpush2.bf16.msra.mxu0 0
      %304 = vmatprep.subr.bf16.mxu0 0
      %305 = vmatpush2.bf16.msra.mxu0 0
      %306 = vmatprep.subr.bf16.mxu0 0
      %307 = vmatpush2.bf16.msra.mxu0 0
      %308 = vmatprep.subr.bf16.mxu0 0
      %309 = vmatpush2.bf16.msra.mxu0 0
      %310 = vmatprep.subr.bf16.mxu0 0
      %311 = vmatpush2.bf16.msra.mxu0 0
      %312 = vmatprep.mubr.bf16.mxu0 0
      %313 = vmatmul.mubr.bf16.gmra.mxu0 %v278
      %v314 = vpop.f32.mrf.mxu0
      %v315 = vadd.f32 0.0, %v314
      %v316 = vpop.f32.mrf.mxu0
      %v317 = vpop.f32.mrf.mxu0
      %v318 = vadd.f32 0.0, %v317
      %v319 = vpop.f32.mrf.mxu0
      %320 = vdwg.mxu0
      %v321 = vld [vmem:[%s2] sm:$0xf]
      %v322 = vld [vmem:[%s2 + $0x4] sm:$0xf]
      %v323 = vld [vmem:[%s2 + $0x8] sm:$0xf]
      %v324 = vld [vmem:[%s2 + $0xc] sm:$0xf]
      %v329 = vunpack.c.l.b16 %v321
      %v330 = vunpack.c.l.b16 %v322
      %v331 = vunpack.c.l.b16 %v323
      %v332 = vunpack.c.l.b16 %v324
      %v333 = vpack.c.b16 %v330, %v329
      %v334 = vpack.c.b16 %v332, %v331
      %337 = vmatprep.subr.bf16.mxu0 0
      %338 = vmatpush1.bf16.msra.mxu0 0
      %339 = vmatprep.subr.bf16.mxu0 0
      %340 = vmatpush1.bf16.msra.mxu0 0
      %341 = vmatprep.subr.bf16.mxu0 0
      %342 = vmatpush1.bf16.msra.mxu0 0
      %343 = vmatprep.subr.bf16.mxu0 0
      %344 = vmatpush1.bf16.msra.mxu0 0
      %345 = vmatprep.subr.bf16.mxu0 0
      %346 = vmatpush1.bf16.msra.mxu0 0
      %347 = vmatprep.subr.bf16.mxu0 0
      %348 = vmatpush1.bf16.msra.mxu0 0
      %349 = vmatprep.subr.bf16.mxu0 0
      %350 = vmatpush1.bf16.msra.mxu0 %v334
      %351 = vmatprep.subr.bf16.mxu0 0
      %352 = vmatpush1.bf16.msra.mxu0 %v333
      %353 = vmatprep.subr.bf16.mxu0 0
      %354 = vmatpush2.bf16.msra.mxu0 0
      %355 = vmatprep.subr.bf16.mxu0 0
      %356 = vmatpush2.bf16.msra.mxu0 0
      %357 = vmatprep.subr.bf16.mxu0 0
      %358 = vmatpush2.bf16.msra.mxu0 0
      %359 = vmatprep.subr.bf16.mxu0 0
      %360 = vmatpush2.bf16.msra.mxu0 0
      %361 = vmatprep.subr.bf16.mxu0 0
      %362 = vmatpush2.bf16.msra.mxu0 0
      %363 = vmatprep.subr.bf16.mxu0 0
      %364 = vmatpush2.bf16.msra.mxu0 0
      %365 = vmatprep.subr.bf16.mxu0 0
      %366 = vmatpush2.bf16.msra.mxu0 0
      %367 = vmatprep.subr.bf16.mxu0 0
      %368 = vmatpush2.bf16.msra.mxu0 0
      %369 = vmatprep.mubr.bf16.mxu0 0
      %370 = vmatmul.mubr.bf16.gmra.mxu0 %v278
      %v371 = vpop.f32.mrf.mxu0
      %v372 = vadd.f32 0.0, %v371
      %v373 = vpop.f32.mrf.mxu0
      %v374 = vpop.f32.mrf.mxu0
      %v375 = vadd.f32 0.0, %v374
      %v376 = vpop.f32.mrf.mxu0
      %377 = vdwg.mxu0
      %v378 = vld [vmem:[%s3] sm:$0xf]
      %v379 = vld [vmem:[%s3 + $0x4] sm:$0xf]
      %v380 = vld [vmem:[%s3 + $0x8] sm:$0xf]
      %v381 = vld [vmem:[%s3 + $0xc] sm:$0xf]
      %v382 = vld [vmem:[%s3 + $0x10] sm:$0xf]
      %v383 = vld [vmem:[%s3 + $0x14] sm:$0xf]
      %v384 = vld [vmem:[%s3 + $0x18] sm:$0xf]
      %v385 = vld [vmem:[%s3 + $0x1c] sm:$0xf]
      %v386 = vmul.f32 %v315, 0.25
      %v387 = vmul.f32 %v318, 0.25
      %v388 = vpack.c.bf16 %v387, %v386
      %v389 = vpack.c.bf16 %v375, %v372
      %v390 = vld [vmem:[%s5] sm:$0xff]
      %v391 = vld [vmem:[%s5 + $0x8] sm:$0xff]
      %vm392 = vcmask 130048
      %v394 = vsel %vm392, %v388, 0
      %v397 = vsel %vm392, %v389, 0
      %399 = vmatprep.subr.bf16.mxu0 0
      %400 = vmatpush1.bf16.xpose.msra.mxu0 0
      %401 = vmatprep.subr.bf16.mxu0 0
      %402 = vmatpush1.bf16.xpose.msra.mxu0 0
      %403 = vmatprep.subr.bf16.mxu0 0
      %404 = vmatpush1.bf16.xpose.msra.mxu0 0
      %405 = vmatprep.subr.bf16.mxu0 0
      %406 = vmatpush1.bf16.xpose.msra.mxu0 0
      %407 = vmatprep.subr.bf16.mxu0 0
      %408 = vmatpush1.bf16.xpose.msra.mxu0 0
      %409 = vmatprep.subr.bf16.mxu0 0
      %410 = vmatpush1.bf16.xpose.msra.mxu0 0
      %411 = vmatprep.subr.bf16.mxu0 0
      %412 = vmatpush1.bf16.xpose.msra.mxu0 0
      %413 = vmatprep.subr.bf16.mxu0 0
      %414 = vmatpush1.bf16.xpose.msra.mxu0 %v397
      %415 = vmatprep.subr.bf16.mxu0 0
      %416 = vmatpush2.bf16.xpose.msra.mxu0 0
      %417 = vmatprep.subr.bf16.mxu0 0
      %418 = vmatpush2.bf16.xpose.msra.mxu0 0
      %419 = vmatprep.subr.bf16.mxu0 0
      %420 = vmatpush2.bf16.xpose.msra.mxu0 0
      %421 = vmatprep.subr.bf16.mxu0 0
      %422 = vmatpush2.bf16.xpose.msra.mxu0 0
      %423 = vmatprep.subr.bf16.mxu0 0
      %424 = vmatpush2.bf16.xpose.msra.mxu0 0
      %425 = vmatprep.subr.bf16.mxu0 0
      %426 = vmatpush2.bf16.xpose.msra.mxu0 0
      %427 = vmatprep.subr.bf16.mxu0 0
      %428 = vmatpush2.bf16.xpose.msra.mxu0 0
      %429 = vmatprep.subr.bf16.mxu0 0
      %430 = vmatpush2.bf16.xpose.msra.mxu0 0
      %431 = vmatprep.mubr.bf16.mxu0 0
      %432 = vmatmul.mubr.bf16.gmra.mxu0 %v394
      %v433 = vpop.f32.mrf.mxu0
      %v434 = vadd.f32 %v390, %v433
      %v435 = vpop.f32.mrf.mxu0
      %v436 = vpop.f32.mrf.mxu0
      %v437 = vadd.f32 %v391, %v436
      %v438 = vpop.f32.mrf.mxu0
      %439 = vdwg.mxu0
      %v440 = vsel %vm392, %v434, -inf
      %441 = vmax.xlane.f32.xlu0 %v440
      %v442 = vpop.xlane.xlu0 %441
      %v443 = vsel %vm392, %v437, -inf
      %444 = vmax.xlane.f32.xlu0 %v443
      %v445 = vpop.xlane.xlu0 %444
      %v446 = vsub.f32 %v434, %v442
      %v447 = vsub.f32 %v437, %v445
      %v448 = vmul.f32 %v446, 1.442695
      %v449 = vpow.pop %v448
      %v450 = vmul.f32 %v447, 1.442695
      %v451 = vpow.pop %v450
      %v452 = vsel %vm392, %v449, 0.0
      %453 = vadd.xlane.f32.xlu0 %v452
      %v454 = vpop.xlane.xlu0 %453
      %v455 = vsel %vm392, %v451, 0.0
      %456 = vadd.xlane.f32.xlu0 %v455
      %v457 = vpop.xlane.xlu0 %456
      %v458 = vrcp.pop %v454
      %v459 = vrcp.pop %v457
      %v460 = vmul.f32 %v449, %v458
      %v461 = vmul.f32 %v451, %v459
      %v462 = vpack.c.bf16 %v461, %v460
      %464 = vrot.lane.b32.xlu0 %v389, 64
      %v465 = vpop.permute.xlu0 %464
      %v468 = vsel %vm392, %v462, 0
      %470 = vmatprep.subr.bf16.mxu0 0
      %471 = vmatpush1.bf16.msra.mxu0 0
      %472 = vmatprep.subr.bf16.mxu0 0
      %473 = vmatpush1.bf16.msra.mxu0 0
      %474 = vmatprep.subr.bf16.mxu0 0
      %475 = vmatpush1.bf16.msra.mxu0 0
      %476 = vmatprep.subr.bf16.mxu0 0
      %477 = vmatpush1.bf16.msra.mxu0 0
      %478 = vmatprep.subr.bf16.mxu0 0
      %479 = vmatpush1.bf16.msra.mxu0 0
      %480 = vmatprep.subr.bf16.mxu0 0
      %481 = vmatpush1.bf16.msra.mxu0 0
      %482 = vmatprep.subr.bf16.mxu0 0
      %483 = vmatpush1.bf16.msra.mxu0 0
      %484 = vmatprep.subr.bf16.mxu0 0
      %485 = vmatpush1.bf16.msra.mxu0 %v465
      %486 = vmatprep.subr.bf16.mxu0 0
      %487 = vmatpush2.bf16.msra.mxu0 0
      %488 = vmatprep.subr.bf16.mxu0 0
      %489 = vmatpush2.bf16.msra.mxu0 0
      %490 = vmatprep.subr.bf16.mxu0 0
      %491 = vmatpush2.bf16.msra.mxu0 0
      %492 = vmatprep.subr.bf16.mxu0 0
      %493 = vmatpush2.bf16.msra.mxu0 0
      %494 = vmatprep.subr.bf16.mxu0 0
      %495 = vmatpush2.bf16.msra.mxu0 0
      %496 = vmatprep.subr.bf16.mxu0 0
      %497 = vmatpush2.bf16.msra.mxu0 0
      %498 = vmatprep.subr.bf16.mxu0 0
      %499 = vmatpush2.bf16.msra.mxu0 0
      %500 = vmatprep.subr.bf16.mxu0 0
      %501 = vmatpush2.bf16.msra.mxu0 0
      %502 = vmatprep.mubr.bf16.mxu0 0
      %503 = vmatmul.mubr.bf16.gmra.mxu0 %v468
      %v504 = vpop.f32.mrf.mxu0
      %v505 = vadd.f32 0.0, %v504
      %v506 = vpop.f32.mrf.mxu0
      %v507 = vpop.f32.mrf.mxu0
      %v508 = vadd.f32 0.0, %v507
      %v509 = vpop.f32.mrf.mxu0
      %510 = vdwg.mxu0
      %v511 = vpack.c.bf16 %v508, %v505
      %s512 = scalar_lea.vmem %s5, 16
      %v513 = vld [vmem:[%s512] sm:$0xff]
      %v514 = vld [vmem:[%s512 + $0x8] sm:$0xff]
      %516 = vrot.lane.b32.xlu0 %v388, 112
      %v517 = vpop.permute.xlu0 %516
      %518 = vrot.lane.b32.xlu0 %v389, 112
      %v519 = vpop.permute.xlu0 %518
      %v521 = vsel %vm392, %v517, 0
      %v524 = vsel %vm392, %v519, 0
      %526 = vmatprep.subr.bf16.mxu0 0
      %527 = vmatpush1.bf16.xpose.msra.mxu0 0
      %528 = vmatprep.subr.bf16.mxu0 0
      %529 = vmatpush1.bf16.xpose.msra.mxu0 0
      %530 = vmatprep.subr.bf16.mxu0 0
      %531 = vmatpush1.bf16.xpose.msra.mxu0 0
      %532 = vmatprep.subr.bf16.mxu0 0
      %533 = vmatpush1.bf16.xpose.msra.mxu0 0
      %534 = vmatprep.subr.bf16.mxu0 0
      %535 = vmatpush1.bf16.xpose.msra.mxu0 0
      %536 = vmatprep.subr.bf16.mxu0 0
      %537 = vmatpush1.bf16.xpose.msra.mxu0 0
      %538 = vmatprep.subr.bf16.mxu0 0
      %539 = vmatpush1.bf16.xpose.msra.mxu0 0
      %540 = vmatprep.subr.bf16.mxu0 0
      %541 = vmatpush1.bf16.xpose.msra.mxu0 %v524
      %542 = vmatprep.subr.bf16.mxu0 0
      %543 = vmatpush2.bf16.xpose.msra.mxu0 0
      %544 = vmatprep.subr.bf16.mxu0 0
      %545 = vmatpush2.bf16.xpose.msra.mxu0 0
      %546 = vmatprep.subr.bf16.mxu0 0
      %547 = vmatpush2.bf16.xpose.msra.mxu0 0
      %548 = vmatprep.subr.bf16.mxu0 0
      %549 = vmatpush2.bf16.xpose.msra.mxu0 0
      %550 = vmatprep.subr.bf16.mxu0 0
      %551 = vmatpush2.bf16.xpose.msra.mxu0 0
      %552 = vmatprep.subr.bf16.mxu0 0
      %553 = vmatpush2.bf16.xpose.msra.mxu0 0
      %554 = vmatprep.subr.bf16.mxu0 0
      %555 = vmatpush2.bf16.xpose.msra.mxu0 0
      %556 = vmatprep.subr.bf16.mxu0 0
      %557 = vmatpush2.bf16.xpose.msra.mxu0 0
      %558 = vmatprep.mubr.bf16.mxu0 0
      %559 = vmatmul.mubr.bf16.gmra.mxu0 %v521
      %v560 = vpop.f32.mrf.mxu0
      %v561 = vadd.f32 %v513, %v560
      %v562 = vpop.f32.mrf.mxu0
      %v563 = vpop.f32.mrf.mxu0
      %v564 = vadd.f32 %v514, %v563
      %v565 = vpop.f32.mrf.mxu0
      %566 = vdwg.mxu0
      %v567 = vsel %vm392, %v561, -inf
      %568 = vmax.xlane.f32.xlu0 %v567
      %v569 = vpop.xlane.xlu0 %568
      %v570 = vsel %vm392, %v564, -inf
      %571 = vmax.xlane.f32.xlu0 %v570
      %v572 = vpop.xlane.xlu0 %571
      %v573 = vsub.f32 %v561, %v569
      %v574 = vsub.f32 %v564, %v572
      %v575 = vmul.f32 %v573, 1.442695
      %v576 = vpow.pop %v575
      %v577 = vmul.f32 %v574, 1.442695
      %v578 = vpow.pop %v577
      %v579 = vsel %vm392, %v576, 0.0
      %580 = vadd.xlane.f32.xlu0 %v579
      %v581 = vpop.xlane.xlu0 %580
      %v582 = vsel %vm392, %v578, 0.0
      %583 = vadd.xlane.f32.xlu0 %v582
      %v584 = vpop.xlane.xlu0 %583
      %v585 = vrcp.pop %v581
      %v586 = vrcp.pop %v584
      %v587 = vmul.f32 %v576, %v585
      %v588 = vmul.f32 %v578, %v586
      %v589 = vpack.c.bf16 %v588, %v587
      %590 = vrot.lane.b32.xlu0 %v389, 48
      %v591 = vpop.permute.xlu0 %590
      %v594 = vsel %vm392, %v589, 0
      %596 = vmatprep.subr.bf16.mxu0 0
      %597 = vmatpush1.bf16.msra.mxu0 0
      %598 = vmatprep.subr.bf16.mxu0 0
      %599 = vmatpush1.bf16.msra.mxu0 0
      %600 = vmatprep.subr.bf16.mxu0 0
      %601 = vmatpush1.bf16.msra.mxu0 0
      %602 = vmatprep.subr.bf16.mxu0 0
      %603 = vmatpush1.bf16.msra.mxu0 0
      %604 = vmatprep.subr.bf16.mxu0 0
      %605 = vmatpush1.bf16.msra.mxu0 0
      %606 = vmatprep.subr.bf16.mxu0 0
      %607 = vmatpush1.bf16.msra.mxu0 0
      %608 = vmatprep.subr.bf16.mxu0 0
      %609 = vmatpush1.bf16.msra.mxu0 0
      %610 = vmatprep.subr.bf16.mxu0 0
      %611 = vmatpush1.bf16.msra.mxu0 %v591
      %612 = vmatprep.subr.bf16.mxu0 0
      %613 = vmatpush2.bf16.msra.mxu0 0
      %614 = vmatprep.subr.bf16.mxu0 0
      %615 = vmatpush2.bf16.msra.mxu0 0
      %616 = vmatprep.subr.bf16.mxu0 0
      %617 = vmatpush2.bf16.msra.mxu0 0
      %618 = vmatprep.subr.bf16.mxu0 0
      %619 = vmatpush2.bf16.msra.mxu0 0
      %620 = vmatprep.subr.bf16.mxu0 0
      %621 = vmatpush2.bf16.msra.mxu0 0
      %622 = vmatprep.subr.bf16.mxu0 0
      %623 = vmatpush2.bf16.msra.mxu0 0
      %624 = vmatprep.subr.bf16.mxu0 0
      %625 = vmatpush2.bf16.msra.mxu0 0
      %626 = vmatprep.subr.bf16.mxu0 0
      %627 = vmatpush2.bf16.msra.mxu0 0
      %628 = vmatprep.mubr.bf16.mxu0 0
      %629 = vmatmul.mubr.bf16.gmra.mxu0 %v594
      %v630 = vpop.f32.mrf.mxu0
      %v631 = vadd.f32 0.0, %v630
      %v632 = vpop.f32.mrf.mxu0
      %v633 = vpop.f32.mrf.mxu0
      %v634 = vadd.f32 0.0, %v633
      %v635 = vpop.f32.mrf.mxu0
      %636 = vdwg.mxu0
      %v637 = vpack.c.bf16 %v634, %v631
      %v640 = vunpack.c.l.b16 %v380
      %v641 = vunpack.c.l.b16 %v381
      %v642 = vpack.c.b16 %v641, %v640
      %v645 = vsel %vm392, %v637, 0
      %647 = vmatprep.subr.bf16.mxu0 0
      %648 = vmatpush1.bf16.msra.mxu0 0
      %649 = vmatprep.subr.bf16.mxu0 0
      %650 = vmatpush1.bf16.msra.mxu0 0
      %651 = vmatprep.subr.bf16.mxu0 0
      %652 = vmatpush1.bf16.msra.mxu0 0
      %653 = vmatprep.subr.bf16.mxu0 0
      %654 = vmatpush1.bf16.msra.mxu0 0
      %655 = vmatprep.subr.bf16.mxu0 0
      %656 = vmatpush1.bf16.msra.mxu0 0
      %657 = vmatprep.subr.bf16.mxu0 0
      %658 = vmatpush1.bf16.msra.mxu0 0
      %659 = vmatprep.subr.bf16.mxu0 0
      %660 = vmatpush1.bf16.msra.mxu0 0
      %661 = vmatprep.subr.bf16.mxu0 0
      %662 = vmatpush1.bf16.msra.mxu0 %v642
      %663 = vmatprep.subr.bf16.mxu0 0
      %664 = vmatpush2.bf16.msra.mxu0 0
      %665 = vmatprep.subr.bf16.mxu0 0
      %666 = vmatpush2.bf16.msra.mxu0 0
      %667 = vmatprep.subr.bf16.mxu0 0
      %668 = vmatpush2.bf16.msra.mxu0 0
      %669 = vmatprep.subr.bf16.mxu0 0
      %670 = vmatpush2.bf16.msra.mxu0 0
      %671 = vmatprep.subr.bf16.mxu0 0
      %672 = vmatpush2.bf16.msra.mxu0 0
      %673 = vmatprep.subr.bf16.mxu0 0
      %674 = vmatpush2.bf16.msra.mxu0 0
      %675 = vmatprep.subr.bf16.mxu0 0
      %676 = vmatpush2.bf16.msra.mxu0 0
      %677 = vmatprep.subr.bf16.mxu0 0
      %678 = vmatpush2.bf16.msra.mxu0 0
      %679 = vmatprep.mubr.bf16.mxu0 0
      %680 = vmatmul.mubr.bf16.gmra.mxu0 %v645
      %v681 = vpop.f32.mrf.mxu0
      %v682 = vadd.f32 0.0, %v681
      %v683 = vpop.f32.mrf.mxu0
      %v684 = vpop.f32.mrf.mxu0
      %v685 = vadd.f32 0.0, %v684
      %v686 = vpop.f32.mrf.mxu0
      %687 = vdwg.mxu0
      %v690 = vunpack.c.l.b16 %v378
      %v691 = vunpack.c.l.b16 %v379
      %v692 = vpack.c.b16 %v691, %v690
      %v695 = vsel %vm392, %v511, 0
      %697 = vmatprep.subr.bf16.mxu0 0
      %698 = vmatpush1.bf16.msra.mxu0 0
      %699 = vmatprep.subr.bf16.mxu0 0
      %700 = vmatpush1.bf16.msra.mxu0 0
      %701 = vmatprep.subr.bf16.mxu0 0
      %702 = vmatpush1.bf16.msra.mxu0 0
      %703 = vmatprep.subr.bf16.mxu0 0
      %704 = vmatpush1.bf16.msra.mxu0 0
      %705 = vmatprep.subr.bf16.mxu0 0
      %706 = vmatpush1.bf16.msra.mxu0 0
      %707 = vmatprep.subr.bf16.mxu0 0
      %708 = vmatpush1.bf16.msra.mxu0 0
      %709 = vmatprep.subr.bf16.mxu0 0
      %710 = vmatpush1.bf16.msra.mxu0 0
      %711 = vmatprep.subr.bf16.mxu0 0
      %712 = vmatpush1.bf16.msra.mxu0 %v692
      %713 = vmatprep.subr.bf16.mxu0 0
      %714 = vmatpush2.bf16.msra.mxu0 0
      %715 = vmatprep.subr.bf16.mxu0 0
      %716 = vmatpush2.bf16.msra.mxu0 0
      %717 = vmatprep.subr.bf16.mxu0 0
      %718 = vmatpush2.bf16.msra.mxu0 0
      %719 = vmatprep.subr.bf16.mxu0 0
      %720 = vmatpush2.bf16.msra.mxu0 0
      %721 = vmatprep.subr.bf16.mxu0 0
      %722 = vmatpush2.bf16.msra.mxu0 0
      %723 = vmatprep.subr.bf16.mxu0 0
      %724 = vmatpush2.bf16.msra.mxu0 0
      %725 = vmatprep.subr.bf16.mxu0 0
      %726 = vmatpush2.bf16.msra.mxu0 0
      %727 = vmatprep.subr.bf16.mxu0 0
      %728 = vmatpush2.bf16.msra.mxu0 0
      %729 = vmatprep.mubr.bf16.mxu0 0
      %730 = vmatmul.mubr.bf16.gmra.mxu0 %v695
      %v731 = vpop.f32.mrf.mxu0
      %v732 = vadd.f32 %v682, %v731
      %v733 = vpop.f32.mrf.mxu0
      %v734 = vpop.f32.mrf.mxu0
      %v735 = vadd.f32 %v685, %v734
      %v736 = vpop.f32.mrf.mxu0
      %737 = vdwg.mxu0
      %s738 = scalar_lea.vmem %s5, 32
      %v739 = vld [vmem:[%s738] sm:$0xff]
      %v740 = vld [vmem:[%s738 + $0x8] sm:$0xff]
      %741 = vrot.lane.b32.xlu0 %v388, 96
      %v742 = vpop.permute.xlu0 %741
      %743 = vrot.lane.b32.xlu0 %v389, 96
      %v744 = vpop.permute.xlu0 %743
      %v746 = vsel %vm392, %v742, 0
      %v749 = vsel %vm392, %v744, 0
      %751 = vmatprep.subr.bf16.mxu0 0
      %752 = vmatpush1.bf16.xpose.msra.mxu0 0
      %753 = vmatprep.subr.bf16.mxu0 0
      %754 = vmatpush1.bf16.xpose.msra.mxu0 0
      %755 = vmatprep.subr.bf16.mxu0 0
      %756 = vmatpush1.bf16.xpose.msra.mxu0 0
      %757 = vmatprep.subr.bf16.mxu0 0
      %758 = vmatpush1.bf16.xpose.msra.mxu0 0
      %759 = vmatprep.subr.bf16.mxu0 0
      %760 = vmatpush1.bf16.xpose.msra.mxu0 0
      %761 = vmatprep.subr.bf16.mxu0 0
      %762 = vmatpush1.bf16.xpose.msra.mxu0 0
      %763 = vmatprep.subr.bf16.mxu0 0
      %764 = vmatpush1.bf16.xpose.msra.mxu0 0
      %765 = vmatprep.subr.bf16.mxu0 0
      %766 = vmatpush1.bf16.xpose.msra.mxu0 %v749
      %767 = vmatprep.subr.bf16.mxu0 0
      %768 = vmatpush2.bf16.xpose.msra.mxu0 0
      %769 = vmatprep.subr.bf16.mxu0 0
      %770 = vmatpush2.bf16.xpose.msra.mxu0 0
      %771 = vmatprep.subr.bf16.mxu0 0
      %772 = vmatpush2.bf16.xpose.msra.mxu0 0
      %773 = vmatprep.subr.bf16.mxu0 0
      %774 = vmatpush2.bf16.xpose.msra.mxu0 0
      %775 = vmatprep.subr.bf16.mxu0 0
      %776 = vmatpush2.bf16.xpose.msra.mxu0 0
      %777 = vmatprep.subr.bf16.mxu0 0
      %778 = vmatpush2.bf16.xpose.msra.mxu0 0
      %779 = vmatprep.subr.bf16.mxu0 0
      %780 = vmatpush2.bf16.xpose.msra.mxu0 0
      %781 = vmatprep.subr.bf16.mxu0 0
      %782 = vmatpush2.bf16.xpose.msra.mxu0 0
      %783 = vmatprep.mubr.bf16.mxu0 0
      %784 = vmatmul.mubr.bf16.gmra.mxu0 %v746
      %v785 = vpop.f32.mrf.mxu0
      %v786 = vadd.f32 %v739, %v785
      %v787 = vpop.f32.mrf.mxu0
      %v788 = vpop.f32.mrf.mxu0
      %v789 = vadd.f32 %v740, %v788
      %v790 = vpop.f32.mrf.mxu0
      %791 = vdwg.mxu0
      %v792 = vsel %vm392, %v786, -inf
      %793 = vmax.xlane.f32.xlu0 %v792
      %v794 = vpop.xlane.xlu0 %793
      %v795 = vsel %vm392, %v789, -inf
      %796 = vmax.xlane.f32.xlu0 %v795
      %v797 = vpop.xlane.xlu0 %796
      %v798 = vsub.f32 %v786, %v794
      %v799 = vsub.f32 %v789, %v797
      %v800 = vmul.f32 %v798, 1.442695
      %v801 = vpow.pop %v800
      %v802 = vmul.f32 %v799, 1.442695
      %v803 = vpow.pop %v802
      %v804 = vsel %vm392, %v801, 0.0
      %805 = vadd.xlane.f32.xlu0 %v804
      %v806 = vpop.xlane.xlu0 %805
      %v807 = vsel %vm392, %v803, 0.0
      %808 = vadd.xlane.f32.xlu0 %v807
      %v809 = vpop.xlane.xlu0 %808
      %v810 = vrcp.pop %v806
      %v811 = vrcp.pop %v809
      %v812 = vmul.f32 %v801, %v810
      %v813 = vmul.f32 %v803, %v811
      %v814 = vpack.c.bf16 %v813, %v812
      %815 = vrot.lane.b32.xlu0 %v389, 32
      %v816 = vpop.permute.xlu0 %815
      %v819 = vsel %vm392, %v814, 0
      %821 = vmatprep.subr.bf16.mxu0 0
      %822 = vmatpush1.bf16.msra.mxu0 0
      %823 = vmatprep.subr.bf16.mxu0 0
      %824 = vmatpush1.bf16.msra.mxu0 0
      %825 = vmatprep.subr.bf16.mxu0 0
      %826 = vmatpush1.bf16.msra.mxu0 0
      %827 = vmatprep.subr.bf16.mxu0 0
      %828 = vmatpush1.bf16.msra.mxu0 0
      %829 = vmatprep.subr.bf16.mxu0 0
      %830 = vmatpush1.bf16.msra.mxu0 0
      %831 = vmatprep.subr.bf16.mxu0 0
      %832 = vmatpush1.bf16.msra.mxu0 0
      %833 = vmatprep.subr.bf16.mxu0 0
      %834 = vmatpush1.bf16.msra.mxu0 0
      %835 = vmatprep.subr.bf16.mxu0 0
      %836 = vmatpush1.bf16.msra.mxu0 %v816
      %837 = vmatprep.subr.bf16.mxu0 0
      %838 = vmatpush2.bf16.msra.mxu0 0
      %839 = vmatprep.subr.bf16.mxu0 0
      %840 = vmatpush2.bf16.msra.mxu0 0
      %841 = vmatprep.subr.bf16.mxu0 0
      %842 = vmatpush2.bf16.msra.mxu0 0
      %843 = vmatprep.subr.bf16.mxu0 0
      %844 = vmatpush2.bf16.msra.mxu0 0
      %845 = vmatprep.subr.bf16.mxu0 0
      %846 = vmatpush2.bf16.msra.mxu0 0
      %847 = vmatprep.subr.bf16.mxu0 0
      %848 = vmatpush2.bf16.msra.mxu0 0
      %849 = vmatprep.subr.bf16.mxu0 0
      %850 = vmatpush2.bf16.msra.mxu0 0
      %851 = vmatprep.subr.bf16.mxu0 0
      %852 = vmatpush2.bf16.msra.mxu0 0
      %853 = vmatprep.mubr.bf16.mxu0 0
      %854 = vmatmul.mubr.bf16.gmra.mxu0 %v819
      %v855 = vpop.f32.mrf.mxu0
      %v856 = vadd.f32 0.0, %v855
      %v857 = vpop.f32.mrf.mxu0
      %v858 = vpop.f32.mrf.mxu0
      %v859 = vadd.f32 0.0, %v858
      %v860 = vpop.f32.mrf.mxu0
      %861 = vdwg.mxu0
      %v862 = vpack.c.bf16 %v859, %v856
      %v865 = vunpack.c.l.b16 %v382
      %v866 = vunpack.c.l.b16 %v383
      %v867 = vpack.c.b16 %v866, %v865
      %v870 = vsel %vm392, %v862, 0
      %872 = vmatprep.subr.bf16.mxu0 0
      %873 = vmatpush1.bf16.msra.mxu0 0
      %874 = vmatprep.subr.bf16.mxu0 0
      %875 = vmatpush1.bf16.msra.mxu0 0
      %876 = vmatprep.subr.bf16.mxu0 0
      %877 = vmatpush1.bf16.msra.mxu0 0
      %878 = vmatprep.subr.bf16.mxu0 0
      %879 = vmatpush1.bf16.msra.mxu0 0
      %880 = vmatprep.subr.bf16.mxu0 0
      %881 = vmatpush1.bf16.msra.mxu0 0
      %882 = vmatprep.subr.bf16.mxu0 0
      %883 = vmatpush1.bf16.msra.mxu0 0
      %884 = vmatprep.subr.bf16.mxu0 0
      %885 = vmatpush1.bf16.msra.mxu0 0
      %886 = vmatprep.subr.bf16.mxu0 0
      %887 = vmatpush1.bf16.msra.mxu0 %v867
      %888 = vmatprep.subr.bf16.mxu0 0
      %889 = vmatpush2.bf16.msra.mxu0 0
      %890 = vmatprep.subr.bf16.mxu0 0
      %891 = vmatpush2.bf16.msra.mxu0 0
      %892 = vmatprep.subr.bf16.mxu0 0
      %893 = vmatpush2.bf16.msra.mxu0 0
      %894 = vmatprep.subr.bf16.mxu0 0
      %895 = vmatpush2.bf16.msra.mxu0 0
      %896 = vmatprep.subr.bf16.mxu0 0
      %897 = vmatpush2.bf16.msra.mxu0 0
      %898 = vmatprep.subr.bf16.mxu0 0
      %899 = vmatpush2.bf16.msra.mxu0 0
      %900 = vmatprep.subr.bf16.mxu0 0
      %901 = vmatpush2.bf16.msra.mxu0 0
      %902 = vmatprep.subr.bf16.mxu0 0
      %903 = vmatpush2.bf16.msra.mxu0 0
      %904 = vmatprep.mubr.bf16.mxu0 0
      %905 = vmatmul.mubr.bf16.gmra.mxu0 %v870
      %v906 = vpop.f32.mrf.mxu0
      %v907 = vadd.f32 0.0, %v906
      %v908 = vpop.f32.mrf.mxu0
      %v909 = vpop.f32.mrf.mxu0
      %v910 = vadd.f32 0.0, %v909
      %v911 = vpop.f32.mrf.mxu0
      %912 = vdwg.mxu0
      %v913 = vadd.f32 %v732, %v907
      %v914 = vadd.f32 %v735, %v910
      %s915 = scalar_lea.vmem %s5, 48
      %v916 = vld [vmem:[%s915] sm:$0xff]
      %v917 = vld [vmem:[%s915 + $0x8] sm:$0xff]
      %918 = vrot.lane.b32.xlu0 %v388, 80
      %v919 = vpop.permute.xlu0 %918
      %920 = vrot.lane.b32.xlu0 %v389, 80
      %v921 = vpop.permute.xlu0 %920
      %v923 = vsel %vm392, %v919, 0
      %v926 = vsel %vm392, %v921, 0
      %928 = vmatprep.subr.bf16.mxu0 0
      %929 = vmatpush1.bf16.xpose.msra.mxu0 0
      %930 = vmatprep.subr.bf16.mxu0 0
      %931 = vmatpush1.bf16.xpose.msra.mxu0 0
      %932 = vmatprep.subr.bf16.mxu0 0
      %933 = vmatpush1.bf16.xpose.msra.mxu0 0
      %934 = vmatprep.subr.bf16.mxu0 0
      %935 = vmatpush1.bf16.xpose.msra.mxu0 0
      %936 = vmatprep.subr.bf16.mxu0 0
      %937 = vmatpush1.bf16.xpose.msra.mxu0 0
      %938 = vmatprep.subr.bf16.mxu0 0
      %939 = vmatpush1.bf16.xpose.msra.mxu0 0
      %940 = vmatprep.subr.bf16.mxu0 0
      %941 = vmatpush1.bf16.xpose.msra.mxu0 0
      %942 = vmatprep.subr.bf16.mxu0 0
      %943 = vmatpush1.bf16.xpose.msra.mxu0 %v926
      %944 = vmatprep.subr.bf16.mxu0 0
      %945 = vmatpush2.bf16.xpose.msra.mxu0 0
      %946 = vmatprep.subr.bf16.mxu0 0
      %947 = vmatpush2.bf16.xpose.msra.mxu0 0
      %948 = vmatprep.subr.bf16.mxu0 0
      %949 = vmatpush2.bf16.xpose.msra.mxu0 0
      %950 = vmatprep.subr.bf16.mxu0 0
      %951 = vmatpush2.bf16.xpose.msra.mxu0 0
      %952 = vmatprep.subr.bf16.mxu0 0
      %953 = vmatpush2.bf16.xpose.msra.mxu0 0
      %954 = vmatprep.subr.bf16.mxu0 0
      %955 = vmatpush2.bf16.xpose.msra.mxu0 0
      %956 = vmatprep.subr.bf16.mxu0 0
      %957 = vmatpush2.bf16.xpose.msra.mxu0 0
      %958 = vmatprep.subr.bf16.mxu0 0
      %959 = vmatpush2.bf16.xpose.msra.mxu0 0
      %960 = vmatprep.mubr.bf16.mxu0 0
      %961 = vmatmul.mubr.bf16.gmra.mxu0 %v923
      %v962 = vpop.f32.mrf.mxu0
      %v963 = vadd.f32 %v916, %v962
      %v964 = vpop.f32.mrf.mxu0
      %v965 = vpop.f32.mrf.mxu0
      %v966 = vadd.f32 %v917, %v965
      %v967 = vpop.f32.mrf.mxu0
      %968 = vdwg.mxu0
      %v969 = vsel %vm392, %v963, -inf
      %970 = vmax.xlane.f32.xlu0 %v969
      %v971 = vpop.xlane.xlu0 %970
      %v972 = vsel %vm392, %v966, -inf
      %973 = vmax.xlane.f32.xlu0 %v972
      %v974 = vpop.xlane.xlu0 %973
      %v975 = vsub.f32 %v963, %v971
      %v976 = vsub.f32 %v966, %v974
      %v977 = vmul.f32 %v975, 1.442695
      %v978 = vpow.pop %v977
      %v979 = vmul.f32 %v976, 1.442695
      %v980 = vpow.pop %v979
      %v981 = vsel %vm392, %v978, 0.0
      %982 = vadd.xlane.f32.xlu0 %v981
      %v983 = vpop.xlane.xlu0 %982
      %v984 = vsel %vm392, %v980, 0.0
      %985 = vadd.xlane.f32.xlu0 %v984
      %v986 = vpop.xlane.xlu0 %985
      %v987 = vrcp.pop %v983
      %v988 = vrcp.pop %v986
      %v989 = vmul.f32 %v978, %v987
      %v990 = vmul.f32 %v980, %v988
      %v991 = vpack.c.bf16 %v990, %v989
      %992 = vrot.lane.b32.xlu0 %v389, 16
      %v993 = vpop.permute.xlu0 %992
      %v996 = vsel %vm392, %v991, 0
      %998 = vmatprep.subr.bf16.mxu0 0
      %999 = vmatpush1.bf16.msra.mxu0 0
      %1000 = vmatprep.subr.bf16.mxu0 0
      %1001 = vmatpush1.bf16.msra.mxu0 0
      %1002 = vmatprep.subr.bf16.mxu0 0
      %1003 = vmatpush1.bf16.msra.mxu0 0
      %1004 = vmatprep.subr.bf16.mxu0 0
      %1005 = vmatpush1.bf16.msra.mxu0 0
      %1006 = vmatprep.subr.bf16.mxu0 0
      %1007 = vmatpush1.bf16.msra.mxu0 0
      %1008 = vmatprep.subr.bf16.mxu0 0
      %1009 = vmatpush1.bf16.msra.mxu0 0
      %1010 = vmatprep.subr.bf16.mxu0 0
      %1011 = vmatpush1.bf16.msra.mxu0 0
      %1012 = vmatprep.subr.bf16.mxu0 0
      %1013 = vmatpush1.bf16.msra.mxu0 %v993
      %1014 = vmatprep.subr.bf16.mxu0 0
      %1015 = vmatpush2.bf16.msra.mxu0 0
      %1016 = vmatprep.subr.bf16.mxu0 0
      %1017 = vmatpush2.bf16.msra.mxu0 0
      %1018 = vmatprep.subr.bf16.mxu0 0
      %1019 = vmatpush2.bf16.msra.mxu0 0
      %1020 = vmatprep.subr.bf16.mxu0 0
      %1021 = vmatpush2.bf16.msra.mxu0 0
      %1022 = vmatprep.subr.bf16.mxu0 0
      %1023 = vmatpush2.bf16.msra.mxu0 0
      %1024 = vmatprep.subr.bf16.mxu0 0
      %1025 = vmatpush2.bf16.msra.mxu0 0
      %1026 = vmatprep.subr.bf16.mxu0 0
      %1027 = vmatpush2.bf16.msra.mxu0 0
      %1028 = vmatprep.subr.bf16.mxu0 0
      %1029 = vmatpush2.bf16.msra.mxu0 0
      %1030 = vmatprep.mubr.bf16.mxu0 0
      %1031 = vmatmul.mubr.bf16.gmra.mxu0 %v996
      %v1032 = vpop.f32.mrf.mxu0
      %v1033 = vadd.f32 0.0, %v1032
      %v1034 = vpop.f32.mrf.mxu0
      %v1035 = vpop.f32.mrf.mxu0
      %v1036 = vadd.f32 0.0, %v1035
      %v1037 = vpop.f32.mrf.mxu0
      %1038 = vdwg.mxu0
      %v1039 = vpack.c.bf16 %v1036, %v1033
      %v1042 = vunpack.c.l.b16 %v384
      %v1043 = vunpack.c.l.b16 %v385
      %v1044 = vpack.c.b16 %v1043, %v1042
      %v1047 = vsel %vm392, %v1039, 0
      %1049 = vmatprep.subr.bf16.mxu0 0
      %1050 = vmatpush1.bf16.msra.mxu0 0
      %1051 = vmatprep.subr.bf16.mxu0 0
      %1052 = vmatpush1.bf16.msra.mxu0 0
      %1053 = vmatprep.subr.bf16.mxu0 0
      %1054 = vmatpush1.bf16.msra.mxu0 0
      %1055 = vmatprep.subr.bf16.mxu0 0
      %1056 = vmatpush1.bf16.msra.mxu0 0
      %1057 = vmatprep.subr.bf16.mxu0 0
      %1058 = vmatpush1.bf16.msra.mxu0 0
      %1059 = vmatprep.subr.bf16.mxu0 0
      %1060 = vmatpush1.bf16.msra.mxu0 0
      %1061 = vmatprep.subr.bf16.mxu0 0
      %1062 = vmatpush1.bf16.msra.mxu0 0
      %1063 = vmatprep.subr.bf16.mxu0 0
      %1064 = vmatpush1.bf16.msra.mxu0 %v1044
      %1065 = vmatprep.subr.bf16.mxu0 0
      %1066 = vmatpush2.bf16.msra.mxu0 0
      %1067 = vmatprep.subr.bf16.mxu0 0
      %1068 = vmatpush2.bf16.msra.mxu0 0
      %1069 = vmatprep.subr.bf16.mxu0 0
      %1070 = vmatpush2.bf16.msra.mxu0 0
      %1071 = vmatprep.subr.bf16.mxu0 0
      %1072 = vmatpush2.bf16.msra.mxu0 0
      %1073 = vmatprep.subr.bf16.mxu0 0
      %1074 = vmatpush2.bf16.msra.mxu0 0
      %1075 = vmatprep.subr.bf16.mxu0 0
      %1076 = vmatpush2.bf16.msra.mxu0 0
      %1077 = vmatprep.subr.bf16.mxu0 0
      %1078 = vmatpush2.bf16.msra.mxu0 0
      %1079 = vmatprep.subr.bf16.mxu0 0
      %1080 = vmatpush2.bf16.msra.mxu0 0
      %1081 = vmatprep.mubr.bf16.mxu0 0
      %1082 = vmatmul.mubr.bf16.gmra.mxu0 %v1047
      %v1083 = vpop.f32.mrf.mxu0
      %v1084 = vadd.f32 0.0, %v1083
      %v1085 = vpop.f32.mrf.mxu0
      %v1086 = vpop.f32.mrf.mxu0
      %v1087 = vadd.f32 0.0, %v1086
      %v1088 = vpop.f32.mrf.mxu0
      %1089 = vdwg.mxu0
      %v1090 = vadd.f32 %v913, %v1084
      %v1091 = vadd.f32 %v914, %v1087
      %v1092 = vld [vmem:[%s4] sm:$0x1]
      %v1094 = vlaneseq
      %v1095 = vshrl.u32 %v1094, 7
      %v1096 = vsub.s32 0, %v1095
      %v1097 = vrot.slane %v1092, %v1096
      %v1099 = vadd.f32 %v1090, %v1097
      %v1100 = vadd.f32 %v1091, %v1097
      %1101 = vst.msk [vmem:[%s251] sm:$0xff] %vm276, %v1099
      %1102 = vst.msk [vmem:[%s251 + $0x8] sm:$0xff] %vm276, %v1100
      %p1103 = scmp.lt.s32.totalorder %s17, 1
      %s1104 = scalar_select %p1103, %s17, 1
      %s1105 = smul.addr %s1104, 2
      %s1106 = smul.addr %s1105, 8
      %s1107 = scalar_lea.vmem %s6, %s1106
      // Predicated region
      $region45: #{global_local_attention.4} parent=43 // pred_check
        %p1108 = pneg %p166
      $region46: #{global_local_attention.4} parent=43 // pred_check_branch
        %1110 = sbr.rel (%p1108) target = $region48
      $region47: #{global_local_attention.4} parent=43 // pred_region
        _
      $region48: #{global_local_attention.4} parent=43 // pred_fallthru
        _
    $region44: #{global_local_attention.4} parent=5 // pred_fallthru
      _
    %p1111 = scmp.le.s32.totalorder 2, %s12
    // Predicated region
    $region49: #{global_local_attention.4} parent=5 // pred_check
      %p1112 = pneg %p1111
    $region50: #{global_local_attention.4} parent=5 // pred_check_branch
      %1114 = sbr.rel (%p1112) target = $region52
    $region51: #{global_local_attention.4} parent=5 // pred_region
      %s1115 = ssub.s32 %s12, 2
      // Predicated region
      $region53: #{global_local_attention.4} parent=51 // pred_check
        %p1116 = pneg %p172
      $region54: #{global_local_attention.4} parent=51 // pred_check_branch
        %1118 = sbr.rel (%p1116) target = $region56
      $region55: #{global_local_attention.4} parent=51 // pred_region
        %p1119 = scmp.lt.s32.totalorder %s18, 1
        %s1120 = scalar_select %p1119, %s18, 1
        %s1121 = smul.addr %s1120, 2
        %s1122 = smul.addr %s1121, 8
        %s1123 = scalar_lea.vmem %s6, %s1122
      $region56: #{global_local_attention.4} parent=51 // pred_fallthru
        _
    $region52: #{global_local_attention.4} parent=5 // pred_fallthru
      _
  $region6: #{global_local_attention.4} parent=0 // loop_footer
    %s16 = sadd.s32 1, %s12
  $region7: #{global_local_attention.4} parent=0 // loop_footer_branch
    %11 = sbr.rel target = $region3
  $region8: #{global_local_attention.4} parent=0 // loop_exit
    _

// kernel: global_local_attention.3
$region0: #{global_local_attention.3}
  #allocation0 [shape = 'u32[]', space=smem, size = 0x4, offset = 0x4, fixed_abs, tag = 'smem constant byte address 0x4 - core index']
  #allocation1 [shape = 'u32[144,128]{1,0:T(1,128)}', space=vmem, size = 0x12000, scoped, tag = 'internal scratch']
  %s0 = inlined_call_operand.vmem [shape: bf16[2,16,32], index: 0, kind: input, shape index: {}]
  %s1 = inlined_call_operand.vmem [shape: bf16[2,16,32], index: 1, kind: input, shape index: {}]
  %s2 = inlined_call_operand.vmem [shape: bf16[32,64], index: 2, kind: input, shape index: {}]
  %s3 = inlined_call_operand.vmem [shape: bf16[32,128], index: 3, kind: input, shape index: {}]
  %s4 = inlined_call_operand.vmem [shape: bf16[64,32], index: 4, kind: input, shape index: {}]
  %s5 = inlined_call_operand.vmem [shape: f32[1,32], index: 5, kind: input, shape index: {}]
  %s6 = inlined_call_operand.vmem [shape: bf16[32,32], index: 6, kind: input, shape index: {}]
  %s7 = inlined_call_operand.vmem [shape: f32[1,32], index: 7, kind: input, shape index: {}]
  %s8 = inlined_call_operand.vmem [shape: f32[1,32], index: 8, kind: input, shape index: {}]
  %s9 = inlined_call_operand.vmem [shape: f32[1,32], index: 9, kind: input, shape index: {}]
  %s10 = inlined_call_operand.vmem [shape: bf16[32,32], index: 10, kind: input, shape index: {}]
  %s11 = inlined_call_operand.vmem [shape: f32[1,32], index: 11, kind: input, shape index: {}]
  %s12 = inlined_call_operand.vmem [shape: f32[2,16,32], index: 12, kind: output, shape index: {}]
  %s13 = sld [smem:[#allocation0]]
  $region81: #{global_local_attention.3} parent=0
    _
  %s15 = ssub.s32 1, %s13
  %s16 = scalar_select 0, %s15, %s13
  loop: start=0, step=1, limit=4
  $region2: #{global_local_attention.3} parent=0 // loop_pre_header
    _
  $region3: #{global_local_attention.3} parent=0 // loop_header
    %s18 = sphi 0, %s22
    %p19 = scmp.ge.s32.totalorder %s18, 4
    %s28 = sphi 0, %s30
    %s31 = sphi 0, %s28
    %s32 = sphi 0, %s31
    %s48 = sphi 0, %s32
    %s54 = sphi 0, %s56
    %s57 = sphi 0, %s54
    %s58 = sphi 0, %s57
    %s74 = sphi 0, %s58
    %s78 = sphi 0, %s78
    %s80 = sphi 0, %s78
    %s81 = sphi 0, %s80
    %s95 = sphi 0, %s81
    %s99 = sphi 0, %s99
    %s101 = sphi 0, %s99
    %s102 = sphi 0, %s101
    %s116 = sphi 0, %s102
    %s120 = sphi 0, %s120
    %s122 = sphi 0, %s120
    %s123 = sphi 0, %s122
    %s137 = sphi 0, %s123
    %s141 = sphi 0, %s141
    %s143 = sphi 0, %s141
    %s144 = sphi 0, %s143
    %s158 = sphi 0, %s144
    %s162 = sphi 0, %s162
    %s164 = sphi 0, %s162
    %s165 = sphi 0, %s164
    %s179 = sphi 0, %s165
    %s183 = sphi 0, %s183
    %s185 = sphi 0, %s183
    %s186 = sphi 0, %s185
    %s200 = sphi 0, %s186
    %s204 = sphi 0, %s204
    %s206 = sphi 0, %s204
    %s207 = sphi 0, %s206
    %s221 = sphi 0, %s207
    %s225 = sphi 0, %s225
    %s227 = sphi 0, %s225
    %s228 = sphi 0, %s227
    %s242 = sphi 0, %s228
    %s246 = sphi 0, %s246
    %s248 = sphi 0, %s246
    %s249 = sphi 0, %s248
    %s263 = sphi 0, %s249
    %s267 = sphi 0, %s267
    %s269 = sphi 0, %s267
    %s270 = sphi 0, %s269
    %s284 = sphi 0, %s270
    %s290 = sphi 0, %s292
    %s293 = sphi 0, %s290
    %s294 = sphi 0, %s293
    %s310 = sphi 0, %s294
  $region4: #{global_local_attention.3} parent=0 // loop_header_branch
    %21 = sbr.rel (%p19) target = $region8
  $region5: #{global_local_attention.3} parent=0 // loop_body
    %s23 = ssub.s32 %s18, 1
    %s24 = ssub.s32 %s18, 2
    %s25 = sadd.s32 %s18, 1
    %s26 = ssub.s32 %s18, %s25
    %p27 = scmp.eq.s32.totalorder %s26, 0
    %s29 = sadd.s32 %s28, 1
    %s30 = scalar_select %p27, %s28, %s29
    %p33 = pneg %p27
    %p34 = scmp.eq.s32.totalorder %s18, 1
    %p35 = por %p33, %p34
    %p36 = scmp.ne.s32.totalorder %s28, %s31
    %p37 = scmp.eq.s32.totalorder %s18, 0
    %p38 = por %p36, %p37
    %p39 = scmp.ne.s32.totalorder %s28, %s31
    %p40 = scmp.eq.s32.totalorder %s23, 1
    %p41 = por %p39, %p40
    %p42 = scmp.ne.s32.totalorder %s31, %s32
    %p43 = scmp.eq.s32.totalorder %s23, 0
    %p44 = por %p42, %p43
    %p45 = scmp.ne.s32.totalorder %s31, %s32
    %p46 = scmp.eq.s32.totalorder %s24, 1
    %p47 = por %p45, %p46
    %p49 = scmp.ne.s32.totalorder %s32, %s48
    %p50 = scmp.eq.s32.totalorder %s24, 0
    %p51 = por %p49, %p50
    %s52 = ssub.s32 %s18, %s25
    %p53 = scmp.eq.s32.totalorder %s52, 0
    %s55 = sadd.s32 %s54, 1
    %s56 = scalar_select %p53, %s54, %s55
    %p59 = pneg %p53
    %p60 = scmp.eq.s32.totalorder %s18, 1
    %p61 = por %p59, %p60
    %p62 = scmp.ne.s32.totalorder %s54, %s57
    %p63 = scmp.eq.s32.totalorder %s18, 0
    %p64 = por %p62, %p63
    %p65 = scmp.ne.s32.totalorder %s54, %s57
    %p66 = scmp.eq.s32.totalorder %s23, 1
    %p67 = por %p65, %p66
    %p68 = scmp.ne.s32.totalorder %s57, %s58
    %p69 = scmp.eq.s32.totalorder %s23, 0
    %p70 = por %p68, %p69
    %p71 = scmp.ne.s32.totalorder %s57, %s58
    %p72 = scmp.eq.s32.totalorder %s24, 1
    %p73 = por %p71, %p72
    %p75 = scmp.ne.s32.totalorder %s58, %s74
    %p76 = scmp.eq.s32.totalorder %s24, 0
    %p77 = por %p75, %p76
    %s79 = sadd.s32 %s78, 1
    %p82 = scmp.eq.s32.totalorder %s18, 1
    %p83 = scmp.ne.s32.totalorder %s78, %s80
    %p84 = scmp.eq.s32.totalorder %s18, 0
    %p85 = por %p83, %p84
    %p86 = scmp.ne.s32.totalorder %s78, %s80
    %p87 = scmp.eq.s32.totalorder %s23, 1
    %p88 = por %p86, %p87
    %p89 = scmp.ne.s32.totalorder %s80, %s81
    %p90 = scmp.eq.s32.totalorder %s23, 0
    %p91 = por %p89, %p90
    %p92 = scmp.ne.s32.totalorder %s80, %s81
    %p93 = scmp.eq.s32.totalorder %s24, 1
    %p94 = por %p92, %p93
    %p96 = scmp.ne.s32.totalorder %s81, %s95
    %p97 = scmp.eq.s32.totalorder %s24, 0
    %p98 = por %p96, %p97
    %s100 = sadd.s32 %s99, 1
    %p103 = scmp.eq.s32.totalorder %s18, 1
    %p104 = scmp.ne.s32.totalorder %s99, %s101
    %p105 = scmp.eq.s32.totalorder %s18, 0
    %p106 = por %p104, %p105
    %p107 = scmp.ne.s32.totalorder %s99, %s101
    %p108 = scmp.eq.s32.totalorder %s23, 1
    %p109 = por %p107, %p108
    %p110 = scmp.ne.s32.totalorder %s101, %s102
    %p111 = scmp.eq.s32.totalorder %s23, 0
    %p112 = por %p110, %p111
    %p113 = scmp.ne.s32.totalorder %s101, %s102
    %p114 = scmp.eq.s32.totalorder %s24, 1
    %p115 = por %p113, %p114
    %p117 = scmp.ne.s32.totalorder %s102, %s116
    %p118 = scmp.eq.s32.totalorder %s24, 0
    %p119 = por %p117, %p118
    %s121 = sadd.s32 %s120, 1
    %p124 = scmp.eq.s32.totalorder %s18, 1
    %p125 = scmp.ne.s32.totalorder %s120, %s122
    %p126 = scmp.eq.s32.totalorder %s18, 0
    %p127 = por %p125, %p126
    %p128 = scmp.ne.s32.totalorder %s120, %s122
    %p129 = scmp.eq.s32.totalorder %s23, 1
    %p130 = por %p128, %p129
    %p131 = scmp.ne.s32.totalorder %s122, %s123
    %p132 = scmp.eq.s32.totalorder %s23, 0
    %p133 = por %p131, %p132
    %p134 = scmp.ne.s32.totalorder %s122, %s123
    %p135 = scmp.eq.s32.totalorder %s24, 1
    %p136 = por %p134, %p135
    %p138 = scmp.ne.s32.totalorder %s123, %s137
    %p139 = scmp.eq.s32.totalorder %s24, 0
    %p140 = por %p138, %p139
    %s142 = sadd.s32 %s141, 1
    %p145 = scmp.eq.s32.totalorder %s18, 1
    %p146 = scmp.ne.s32.totalorder %s141, %s143
    %p147 = scmp.eq.s32.totalorder %s18, 0
    %p148 = por %p146, %p147
    %p149 = scmp.ne.s32.totalorder %s141, %s143
    %p150 = scmp.eq.s32.totalorder %s23, 1
    %p151 = por %p149, %p150
    %p152 = scmp.ne.s32.totalorder %s143, %s144
    %p153 = scmp.eq.s32.totalorder %s23, 0
    %p154 = por %p152, %p153
    %p155 = scmp.ne.s32.totalorder %s143, %s144
    %p156 = scmp.eq.s32.totalorder %s24, 1
    %p157 = por %p155, %p156
    %p159 = scmp.ne.s32.totalorder %s144, %s158
    %p160 = scmp.eq.s32.totalorder %s24, 0
    %p161 = por %p159, %p160
    %s163 = sadd.s32 %s162, 1
    %p166 = scmp.eq.s32.totalorder %s18, 1
    %p167 = scmp.ne.s32.totalorder %s162, %s164
    %p168 = scmp.eq.s32.totalorder %s18, 0
    %p169 = por %p167, %p168
    %p170 = scmp.ne.s32.totalorder %s162, %s164
    %p171 = scmp.eq.s32.totalorder %s23, 1
    %p172 = por %p170, %p171
    %p173 = scmp.ne.s32.totalorder %s164, %s165
    %p174 = scmp.eq.s32.totalorder %s23, 0
    %p175 = por %p173, %p174
    %p176 = scmp.ne.s32.totalorder %s164, %s165
    %p177 = scmp.eq.s32.totalorder %s24, 1
    %p178 = por %p176, %p177
    %p180 = scmp.ne.s32.totalorder %s165, %s179
    %p181 = scmp.eq.s32.totalorder %s24, 0
    %p182 = por %p180, %p181
    %s184 = sadd.s32 %s183, 1
    %p187 = scmp.eq.s32.totalorder %s18, 1
    %p188 = scmp.ne.s32.totalorder %s183, %s185
    %p189 = scmp.eq.s32.totalorder %s18, 0
    %p190 = por %p188, %p189
    %p191 = scmp.ne.s32.totalorder %s183, %s185
    %p192 = scmp.eq.s32.totalorder %s23, 1
    %p193 = por %p191, %p192
    %p194 = scmp.ne.s32.totalorder %s185, %s186
    %p195 = scmp.eq.s32.totalorder %s23, 0
    %p196 = por %p194, %p195
    %p197 = scmp.ne.s32.totalorder %s185, %s186
    %p198 = scmp.eq.s32.totalorder %s24, 1
    %p199 = por %p197, %p198
    %p201 = scmp.ne.s32.totalorder %s186, %s200
    %p202 = scmp.eq.s32.totalorder %s24, 0
    %p203 = por %p201, %p202
    %s205 = sadd.s32 %s204, 1
    %p208 = scmp.eq.s32.totalorder %s18, 1
    %p209 = scmp.ne.s32.totalorder %s204, %s206
    %p210 = scmp.eq.s32.totalorder %s18, 0
    %p211 = por %p209, %p210
    %p212 = scmp.ne.s32.totalorder %s204, %s206
    %p213 = scmp.eq.s32.totalorder %s23, 1
    %p214 = por %p212, %p213
    %p215 = scmp.ne.s32.totalorder %s206, %s207
    %p216 = scmp.eq.s32.totalorder %s23, 0
    %p217 = por %p215, %p216
    %p218 = scmp.ne.s32.totalorder %s206, %s207
    %p219 = scmp.eq.s32.totalorder %s24, 1
    %p220 = por %p218, %p219
    %p222 = scmp.ne.s32.totalorder %s207, %s221
    %p223 = scmp.eq.s32.totalorder %s24, 0
    %p224 = por %p222, %p223
    %s226 = sadd.s32 %s225, 1
    %p229 = scmp.eq.s32.totalorder %s18, 1
    %p230 = scmp.ne.s32.totalorder %s225, %s227
    %p231 = scmp.eq.s32.totalorder %s18, 0
    %p232 = por %p230, %p231
    %p233 = scmp.ne.s32.totalorder %s225, %s227
    %p234 = scmp.eq.s32.totalorder %s23, 1
    %p235 = por %p233, %p234
    %p236 = scmp.ne.s32.totalorder %s227, %s228
    %p237 = scmp.eq.s32.totalorder %s23, 0
    %p238 = por %p236, %p237
    %p239 = scmp.ne.s32.totalorder %s227, %s228
    %p240 = scmp.eq.s32.totalorder %s24, 1
    %p241 = por %p239, %p240
    %p243 = scmp.ne.s32.totalorder %s228, %s242
    %p244 = scmp.eq.s32.totalorder %s24, 0
    %p245 = por %p243, %p244
    %s247 = sadd.s32 %s246, 1
    %p250 = scmp.eq.s32.totalorder %s18, 1
    %p251 = scmp.ne.s32.totalorder %s246, %s248
    %p252 = scmp.eq.s32.totalorder %s18, 0
    %p253 = por %p251, %p252
    %p254 = scmp.ne.s32.totalorder %s246, %s248
    %p255 = scmp.eq.s32.totalorder %s23, 1
    %p256 = por %p254, %p255
    %p257 = scmp.ne.s32.totalorder %s248, %s249
    %p258 = scmp.eq.s32.totalorder %s23, 0
    %p259 = por %p257, %p258
    %p260 = scmp.ne.s32.totalorder %s248, %s249
    %p261 = scmp.eq.s32.totalorder %s24, 1
    %p262 = por %p260, %p261
    %p264 = scmp.ne.s32.totalorder %s249, %s263
    %p265 = scmp.eq.s32.totalorder %s24, 0
    %p266 = por %p264, %p265
    %s268 = sadd.s32 %s267, 1
    %p271 = scmp.eq.s32.totalorder %s18, 1
    %p272 = scmp.ne.s32.totalorder %s267, %s269
    %p273 = scmp.eq.s32.totalorder %s18, 0
    %p274 = por %p272, %p273
    %p275 = scmp.ne.s32.totalorder %s267, %s269
    %p276 = scmp.eq.s32.totalorder %s23, 1
    %p277 = por %p275, %p276
    %p278 = scmp.ne.s32.totalorder %s269, %s270
    %p279 = scmp.eq.s32.totalorder %s23, 0
    %p280 = por %p278, %p279
    %p281 = scmp.ne.s32.totalorder %s269, %s270
    %p282 = scmp.eq.s32.totalorder %s24, 1
    %p283 = por %p281, %p282
    %p285 = scmp.ne.s32.totalorder %s270, %s284
    %p286 = scmp.eq.s32.totalorder %s24, 0
    %p287 = por %p285, %p286
    %s288 = ssub.s32 %s18, %s25
    %p289 = scmp.eq.s32.totalorder %s288, 0
    %s291 = sadd.s32 %s290, 1
    %s292 = scalar_select %p289, %s290, %s291
    %p295 = pneg %p289
    %p296 = scmp.eq.s32.totalorder %s18, 1
    %p297 = por %p295, %p296
    %p298 = scmp.ne.s32.totalorder %s290, %s293
    %p299 = scmp.eq.s32.totalorder %s18, 0
    %p300 = por %p298, %p299
    %p301 = scmp.ne.s32.totalorder %s290, %s293
    %p302 = scmp.eq.s32.totalorder %s23, 1
    %p303 = por %p301, %p302
    %p304 = scmp.ne.s32.totalorder %s293, %s294
    %p305 = scmp.eq.s32.totalorder %s23, 0
    %p306 = por %p304, %p305
    %p307 = scmp.ne.s32.totalorder %s293, %s294
    %p308 = scmp.eq.s32.totalorder %s24, 1
    %p309 = por %p307, %p308
    %p311 = scmp.ne.s32.totalorder %s294, %s310
    %p312 = scmp.eq.s32.totalorder %s24, 0
    %p313 = por %p311, %p312
    %p314 = scmp.le.s32.totalorder 1, %s18
    %p315 = scmp.lt.s32.totalorder %s18, 3
    %p316 = pnand %p314, %p315
    %p317 = pneg %p316
    // Predicated region
    $region9: #{global_local_attention.3} parent=5 // pred_check
      _
    $region10: #{global_local_attention.3} parent=5 // pred_check_branch
      %319 = sbr.rel (%p316) target = $region12
    $region11: #{global_local_attention.3} parent=5 // pred_region
      %s320 = ssub.s32 %s18, 1
      // Predicated region
      $region13: #{global_local_attention.3} parent=11 // pred_check
        %p321 = pneg %p91
      $region14: #{global_local_attention.3} parent=11 // pred_check_branch
        %323 = sbr.rel (%p321) target = $region16
      $region15: #{global_local_attention.3} parent=11 // pred_region
        _
      $region16: #{global_local_attention.3} parent=11 // pred_fallthru
        _
      // Predicated region
      $region17: #{global_local_attention.3} parent=11 // pred_check
        %p324 = pneg %p112
      $region18: #{global_local_attention.3} parent=11 // pred_check_branch
        %326 = sbr.rel (%p324) target = $region20
      $region19: #{global_local_attention.3} parent=11 // pred_region
        _
      $region20: #{global_local_attention.3} parent=11 // pred_fallthru
        _
      // Predicated region
      $region21: #{global_local_attention.3} parent=11 // pred_check
        %p327 = pneg %p133
      $region22: #{global_local_attention.3} parent=11 // pred_check_branch
        %329 = sbr.rel (%p327) target = $region24
      $region23: #{global_local_attention.3} parent=11 // pred_region
        _
      $region24: #{global_local_attention.3} parent=11 // pred_fallthru
        _
      // Predicated region
      $region25: #{global_local_attention.3} parent=11 // pred_check
        %p330 = pneg %p154
      $region26: #{global_local_attention.3} parent=11 // pred_check_branch
        %332 = sbr.rel (%p330) target = $region28
      $region27: #{global_local_attention.3} parent=11 // pred_region
        _
      $region28: #{global_local_attention.3} parent=11 // pred_fallthru
        _
      // Predicated region
      $region29: #{global_local_attention.3} parent=11 // pred_check
        %p333 = pneg %p175
      $region30: #{global_local_attention.3} parent=11 // pred_check_branch
        %335 = sbr.rel (%p333) target = $region32
      $region31: #{global_local_attention.3} parent=11 // pred_region
        _
      $region32: #{global_local_attention.3} parent=11 // pred_fallthru
        _
      // Predicated region
      $region33: #{global_local_attention.3} parent=11 // pred_check
        %p336 = pneg %p196
      $region34: #{global_local_attention.3} parent=11 // pred_check_branch
        %338 = sbr.rel (%p336) target = $region36
      $region35: #{global_local_attention.3} parent=11 // pred_region
        _
      $region36: #{global_local_attention.3} parent=11 // pred_fallthru
        _
      // Predicated region
      $region37: #{global_local_attention.3} parent=11 // pred_check
        %p339 = pneg %p217
      $region38: #{global_local_attention.3} parent=11 // pred_check_branch
        %341 = sbr.rel (%p339) target = $region40
      $region39: #{global_local_attention.3} parent=11 // pred_region
        _
      $region40: #{global_local_attention.3} parent=11 // pred_fallthru
        _
      // Predicated region
      $region41: #{global_local_attention.3} parent=11 // pred_check
        %p342 = pneg %p238
      $region42: #{global_local_attention.3} parent=11 // pred_check_branch
        %344 = sbr.rel (%p342) target = $region44
      $region43: #{global_local_attention.3} parent=11 // pred_region
        _
      $region44: #{global_local_attention.3} parent=11 // pred_fallthru
        _
      // Predicated region
      $region45: #{global_local_attention.3} parent=11 // pred_check
        %p345 = pneg %p259
      $region46: #{global_local_attention.3} parent=11 // pred_check_branch
        %347 = sbr.rel (%p345) target = $region48
      $region47: #{global_local_attention.3} parent=11 // pred_region
        _
      $region48: #{global_local_attention.3} parent=11 // pred_fallthru
        _
      // Predicated region
      $region49: #{global_local_attention.3} parent=11 // pred_check
        %p348 = pneg %p280
      $region50: #{global_local_attention.3} parent=11 // pred_check_branch
        %350 = sbr.rel (%p348) target = $region52
      $region51: #{global_local_attention.3} parent=11 // pred_region
        _
      $region52: #{global_local_attention.3} parent=11 // pred_fallthru
        _
    $region12: #{global_local_attention.3} parent=5 // pred_fallthru
      _
    %p351 = scmp.lt.s32.totalorder %s18, 2
    // Predicated region
    $region53: #{global_local_attention.3} parent=5 // pred_check
      %p352 = pneg %p351
    $region54: #{global_local_attention.3} parent=5 // pred_check_branch
      %354 = sbr.rel (%p352) target = $region56
    $region55: #{global_local_attention.3} parent=5 // pred_region
      // Predicated region
      $region57: #{global_local_attention.3} parent=55 // pred_check
        %p355 = pneg %p38
      $region58: #{global_local_attention.3} parent=55 // pred_check_branch
        %357 = sbr.rel (%p355) target = $region60
      $region59: #{global_local_attention.3} parent=55 // pred_region
        %p358 = scmp.lt.s32.totalorder %s18, 1
        %s359 = scalar_select %p358, %s18, 1
        %s360 = smul.addr %s359, 2
        %s361 = smul.addr %s360, 4
        %s362 = scalar_lea.vmem %s0, %s361
      $region60: #{global_local_attention.3} parent=55 // pred_fallthru
        _
      // Predicated region
      $region61: #{global_local_attention.3} parent=55 // pred_check
        %p363 = pneg %p64
      $region62: #{global_local_attention.3} parent=55 // pred_check_branch
        %365 = sbr.rel (%p363) target = $region64
      $region63: #{global_local_attention.3} parent=55 // pred_region
        %p366 = scmp.lt.s32.totalorder %s18, 1
        %s367 = scalar_select %p366, %s18, 1
        %s368 = smul.addr %s367, 2
        %s369 = smul.addr %s368, 4
        %s370 = scalar_lea.vmem %s1, %s369
      $region64: #{global_local_attention.3} parent=55 // pred_fallthru
        _
    $region56: #{global_local_attention.3} parent=5 // pred_fallthru
      _
    %p371 = scmp.le.s32.totalorder 1, %s18
    %p372 = scmp.lt.s32.totalorder %s18, 3
    %p373 = pnand %p371, %p372
    %p374 = pneg %p373
    // Predicated region
    $region65: #{global_local_attention.3} parent=5 // pred_check
      _
    $region66: #{global_local_attention.3} parent=5 // pred_check_branch
      %376 = sbr.rel (%p373) target = $region68
    $region67: #{global_local_attention.3} parent=5 // pred_region
      %s377 = ssub.s32 %s18, 1
      %p378 = scmp.lt.s32.totalorder %s23, 1
      %s379 = scalar_select %p378, %s23, 1
      %s380 = smul.addr %s379, 2
      %s381 = smul.addr %s380, 4
      %s382 = scalar_lea.vmem %s0, %s381
      %p383 = pneg %p44
      %p384 = pneg %p41
      %p385 = scmp.lt.s32.totalorder %s23, 1
      %s386 = scalar_select %p385, %s23, 1
      %s387 = smul.addr %s386, 2
      %s388 = smul.addr %s387, 4
      %s389 = scalar_lea.vmem %s1, %s388
      %p390 = pneg %p70
      %p391 = pneg %p67
      %p392 = pneg %p91
      %p393 = pneg %p88
      %p394 = pneg %p112
      %p395 = pneg %p109
      %p396 = pneg %p133
      %p397 = pneg %p130
      %p398 = pneg %p154
      %p399 = pneg %p151
      %p400 = pneg %p175
      %p401 = pneg %p172
      %p402 = pneg %p196
      %p403 = pneg %p193
      %p404 = pneg %p217
      %p405 = pneg %p214
      %p406 = pneg %p238
      %p407 = pneg %p235
      %p408 = pneg %p259
      %p409 = pneg %p256
      %p410 = pneg %p280
      %p411 = pneg %p277
      %p412 = pneg %p306
      %p413 = pneg %p303
      %p414 = scmp.lt.s32.totalorder %s23, 1
      %s415 = scalar_select %p414, %s23, 1
      %s416 = smul.addr %s415, 2
      %s417 = smul.addr %s416, 8
      %s418 = scalar_lea.vmem %s12, %s417
      %p419 = scmp.lt.s32.totalorder %s23, 1
      %s420 = scalar_select %p419, %s23, 1
      %s421 = smul.addr %s420, 2
      %s422 = smul.addr %s421, 4
      %s423 = scalar_lea.vmem %s0, %s422
      %p424 = scmp.lt.s32.totalorder %s23, 1
      %s425 = scalar_select %p424, %s23, 1
      %s426 = smul.addr %s425, 2
      %s427 = smul.addr %s426, 4
      %s428 = scalar_lea.vmem %s1, %s427
      %p429 = scmp.lt.s32.totalorder %s23, 1
      %s430 = scalar_select %p429, %s23, 1
      %s431 = smul.addr %s430, 2
      %s432 = smul.addr %s431, 8
      %s433 = scalar_lea.vmem %s12, %s432
      %v435 = vld [vmem:[%s423] sm:$0xf]
      %v436 = vld [vmem:[%s423 + $0x4] sm:$0xf]
      %v437 = vld [vmem:[%s428] sm:$0xf]
      %v438 = vld [vmem:[%s428 + $0x4] sm:$0xf]
      %v439 = vld [vmem:[%s2] sm:$0xf]
      %v440 = vld [vmem:[%s2 + $0x4] sm:$0xf]
      %v441 = vld [vmem:[%s2 + $0x8] sm:$0xf]
      %v442 = vld [vmem:[%s2 + $0xc] sm:$0xf]
      %v445 = vunpack.c.l.b16 %v435
      %v446 = vunpack.c.l.b16 %v436
      %v447 = vpack.c.b16 %v446, %v445
      %v452 = vunpack.c.l.b16 %v439
      %v453 = vunpack.c.l.b16 %v440
      %v454 = vunpack.c.l.b16 %v441
      %v455 = vunpack.c.l.b16 %v442
      %v456 = vpack.c.b16 %v453, %v452
      %v457 = vpack.c.b16 %v455, %v454
      %vm460 = vcmask 261120
      %v462 = vsel %vm460, %v447, 0
      %464 = vmatprep.subr.bf16.mxu0 0
      %465 = vmatpush1.bf16.msra.mxu0 0
      %466 = vmatprep.subr.bf16.mxu0 0
      %467 = vmatpush1.bf16.msra.mxu0 0
      %468 = vmatprep.subr.bf16.mxu0 0
      %469 = vmatpush1.bf16.msra.mxu0 0
      %470 = vmatprep.subr.bf16.mxu0 0
      %471 = vmatpush1.bf16.msra.mxu0 0
      %472 = vmatprep.subr.bf16.mxu0 0
      %473 = vmatpush1.bf16.msra.mxu0 0
      %474 = vmatprep.subr.bf16.mxu0 0
      %475 = vmatpush1.bf16.msra.mxu0 0
      %476 = vmatprep.subr.bf16.mxu0 0
      %477 = vmatpush1.bf16.msra.mxu0 %v457
      %478 = vmatprep.subr.bf16.mxu0 0
      %479 = vmatpush1.bf16.msra.mxu0 %v456
      %480 = vmatprep.subr.bf16.mxu0 0
      %481 = vmatpush2.bf16.msra.mxu0 0
      %482 = vmatprep.subr.bf16.mxu0 0
      %483 = vmatpush2.bf16.msra.mxu0 0
      %484 = vmatprep.subr.bf16.mxu0 0
      %485 = vmatpush2.bf16.msra.mxu0 0
      %486 = vmatprep.subr.bf16.mxu0 0
      %487 = vmatpush2.bf16.msra.mxu0 0
      %488 = vmatprep.subr.bf16.mxu0 0
      %489 = vmatpush2.bf16.msra.mxu0 0
      %490 = vmatprep.subr.bf16.mxu0 0
      %491 = vmatpush2.bf16.msra.mxu0 0
      %492 = vmatprep.subr.bf16.mxu0 0
      %493 = vmatpush2.bf16.msra.mxu0 0
      %494 = vmatprep.subr.bf16.mxu0 0
      %495 = vmatpush2.bf16.msra.mxu0 0
      %496 = vmatprep.mubr.bf16.mxu0 0
      %497 = vmatmul.mubr.bf16.gmra.mxu0 %v462
      %v498 = vpop.f32.mrf.mxu0
      %v499 = vadd.f32 0.0, %v498
      %v500 = vpop.f32.mrf.mxu0
      %v501 = vpop.f32.mrf.mxu0
      %v502 = vadd.f32 0.0, %v501
      %v503 = vpop.f32.mrf.mxu0
      %504 = vdwg.mxu0
      %v505 = vld [vmem:[%s3] sm:$0xf]
      %v506 = vld [vmem:[%s3 + $0x4] sm:$0xf]
      %v507 = vld [vmem:[%s3 + $0x8] sm:$0xf]
      %v508 = vld [vmem:[%s3 + $0xc] sm:$0xf]
      %v511 = vunpack.c.l.b16 %v437
      %v512 = vunpack.c.l.b16 %v438
      %v513 = vpack.c.b16 %v512, %v511
      %v518 = vunpack.c.l.b16 %v505
      %v519 = vunpack.c.l.b16 %v506
      %v520 = vunpack.c.l.b16 %v507
      %v521 = vunpack.c.l.b16 %v508
      %v522 = vpack.c.b16 %v519, %v518
      %v523 = vpack.c.b16 %v521, %v520
      %v527 = vsel %vm460, %v513, 0
      %529 = vmatprep.subr.bf16.mxu0 0
      %530 = vmatpush1.bf16.msra.mxu0 0
      %531 = vmatprep.subr.bf16.mxu0 0
      %532 = vmatpush1.bf16.msra.mxu0 0
      %533 = vmatprep.subr.bf16.mxu0 0
      %534 = vmatpush1.bf16.msra.mxu0 0
      %535 = vmatprep.subr.bf16.mxu0 0
      %536 = vmatpush1.bf16.msra.mxu0 0
      %537 = vmatprep.subr.bf16.mxu0 0
      %538 = vmatpush1.bf16.msra.mxu0 0
      %539 = vmatprep.subr.bf16.mxu0 0
      %540 = vmatpush1.bf16.msra.mxu0 0
      %541 = vmatprep.subr.bf16.mxu0 0
      %542 = vmatpush1.bf16.msra.mxu0 %v523
      %543 = vmatprep.subr.bf16.mxu0 0
      %544 = vmatpush1.bf16.msra.mxu0 %v522
      %545 = vmatprep.subr.bf16.mxu0 0
      %546 = vmatpush2.bf16.msra.mxu0 0
      %547 = vmatprep.subr.bf16.mxu0 0
      %548 = vmatpush2.bf16.msra.mxu0 0
      %549 = vmatprep.subr.bf16.mxu0 0
      %550 = vmatpush2.bf16.msra.mxu0 0
      %551 = vmatprep.subr.bf16.mxu0 0
      %552 = vmatpush2.bf16.msra.mxu0 0
      %553 = vmatprep.subr.bf16.mxu0 0
      %554 = vmatpush2.bf16.msra.mxu0 0
      %555 = vmatprep.subr.bf16.mxu0 0
      %556 = vmatpush2.bf16.msra.mxu0 0
      %557 = vmatprep.subr.bf16.mxu0 0
      %558 = vmatpush2.bf16.msra.mxu0 0
      %559 = vmatprep.subr.bf16.mxu0 0
      %560 = vmatpush2.bf16.msra.mxu0 0
      %561 = vmatprep.mubr.bf16.mxu0 0
      %562 = vmatmul.mubr.bf16.gmra.mxu0 %v527
      %v563 = vpop.f32.mrf.mxu0
      %v564 = vadd.f32 0.0, %v563
      %v565 = vpop.f32.mrf.mxu0
      %v566 = vpop.f32.mrf.mxu0
      %v567 = vadd.f32 0.0, %v566
      %v568 = vpop.f32.mrf.mxu0
      %569 = vdwg.mxu0
      %v570 = vld [vmem:[%s4] sm:$0xf]
      %v571 = vld [vmem:[%s4 + $0x4] sm:$0xf]
      %v572 = vld [vmem:[%s4 + $0x8] sm:$0xf]
      %v573 = vld [vmem:[%s4 + $0xc] sm:$0xf]
      %v574 = vld [vmem:[%s4 + $0x10] sm:$0xf]
      %v575 = vld [vmem:[%s4 + $0x14] sm:$0xf]
      %v576 = vld [vmem:[%s4 + $0x18] sm:$0xf]
      %v577 = vld [vmem:[%s4 + $0x1c] sm:$0xf]
      %v578 = vmul.f32 %v499, 0.25
      %v579 = vmul.f32 %v502, 0.25
      %v580 = vpack.c.bf16 %v579, %v578
      %v581 = vpack.c.bf16 %v567, %v564
      %vm582 = vcmask 130048
      %v584 = vsel %vm582, %v580, 0
      %v587 = vsel %vm582, %v581, 0
      %589 = vmatprep.subr.bf16.mxu0 0
      %590 = vmatpush1.bf16.xpose.msra.mxu0 0
      %591 = vmatprep.subr.bf16.mxu0 0
      %592 = vmatpush1.bf16.xpose.msra.mxu0 0
      %593 = vmatprep.subr.bf16.mxu0 0
      %594 = vmatpush1.bf16.xpose.msra.mxu0 0
      %595 = vmatprep.subr.bf16.mxu0 0
      %596 = vmatpush1.bf16.xpose.msra.mxu0 0
      %597 = vmatprep.subr.bf16.mxu0 0
      %598 = vmatpush1.bf16.xpose.msra.mxu0 0
      %599 = vmatprep.subr.bf16.mxu0 0
      %600 = vmatpush1.bf16.xpose.msra.mxu0 0
      %601 = vmatprep.subr.bf16.mxu0 0
      %602 = vmatpush1.bf16.xpose.msra.mxu0 0
      %603 = vmatprep.subr.bf16.mxu0 0
      %604 = vmatpush1.bf16.xpose.msra.mxu0 %v587
      %605 = vmatprep.subr.bf16.mxu0 0
      %606 = vmatpush2.bf16.xpose.msra.mxu0 0
      %607 = vmatprep.subr.bf16.mxu0 0
      %608 = vmatpush2.bf16.xpose.msra.mxu0 0
      %609 = vmatprep.subr.bf16.mxu0 0
      %610 = vmatpush2.bf16.xpose.msra.mxu0 0
      %611 = vmatprep.subr.bf16.mxu0 0
      %612 = vmatpush2.bf16.xpose.msra.mxu0 0
      %613 = vmatprep.subr.bf16.mxu0 0
      %614 = vmatpush2.bf16.xpose.msra.mxu0 0
      %615 = vmatprep.subr.bf16.mxu0 0
      %616 = vmatpush2.bf16.xpose.msra.mxu0 0
      %617 = vmatprep.subr.bf16.mxu0 0
      %618 = vmatpush2.bf16.xpose.msra.mxu0 0
      %619 = vmatprep.subr.bf16.mxu0 0
      %620 = vmatpush2.bf16.xpose.msra.mxu0 0
      %621 = vmatprep.mubr.bf16.mxu0 0
      %622 = vmatmul.mubr.bf16.gmra.mxu0 %v584
      %v623 = vpop.f32.mrf.mxu0
      %v624 = vadd.f32 0.0, %v623
      %v625 = vpop.f32.mrf.mxu0
      %v626 = vpop.f32.mrf.mxu0
      %v627 = vadd.f32 0.0, %v626
      %v628 = vpop.f32.mrf.mxu0
      %629 = vdwg.mxu0
      %v630 = vsel %vm582, %v624, -inf
      %631 = vmax.xlane.f32.xlu0 %v630
      %v632 = vpop.xlane.xlu0 %631
      %v633 = vsel %vm582, %v627, -inf
      %634 = vmax.xlane.f32.xlu0 %v633
      %v635 = vpop.xlane.xlu0 %634
      %v636 = vsub.f32 %v624, %v632
      %v637 = vsub.f32 %v627, %v635
      %v638 = vmul.f32 %v636, 1.442695
      %v639 = vpow.pop %v638
      %v640 = vmul.f32 %v637, 1.442695
      %v641 = vpow.pop %v640
      %v642 = vsel %vm582, %v639, 0.0
      %643 = vadd.xlane.f32.xlu0 %v642
      %v644 = vpop.xlane.xlu0 %643
      %v645 = vsel %vm582, %v641, 0.0
      %646 = vadd.xlane.f32.xlu0 %v645
      %v647 = vpop.xlane.xlu0 %646
      %v648 = vrcp.pop %v644
      %v649 = vrcp.pop %v647
      %v650 = vmul.f32 %v639, %v648
      %v651 = vmul.f32 %v641, %v649
      %v652 = vpack.c.bf16 %v651, %v650
      %654 = vrot.lane.b32.xlu0 %v581, 64
      %v655 = vpop.permute.xlu0 %654
      %v658 = vsel %vm582, %v652, 0
      %660 = vmatprep.subr.bf16.mxu0 0
      %661 = vmatpush1.bf16.msra.mxu0 0
      %662 = vmatprep.subr.bf16.mxu0 0
      %663 = vmatpush1.bf16.msra.mxu0 0
      %664 = vmatprep.subr.bf16.mxu0 0
      %665 = vmatpush1.bf16.msra.mxu0 0
      %666 = vmatprep.subr.bf16.mxu0 0
      %667 = vmatpush1.bf16.msra.mxu0 0
      %668 = vmatprep.subr.bf16.mxu0 0
      %669 = vmatpush1.bf16.msra.mxu0 0
      %670 = vmatprep.subr.bf16.mxu0 0
      %671 = vmatpush1.bf16.msra.mxu0 0
      %672 = vmatprep.subr.bf16.mxu0 0
      %673 = vmatpush1.bf16.msra.mxu0 0
      %674 = vmatprep.subr.bf16.mxu0 0
      %675 = vmatpush1.bf16.msra.mxu0 %v655
      %676 = vmatprep.subr.bf16.mxu0 0
      %677 = vmatpush2.bf16.msra.mxu0 0
      %678 = vmatprep.subr.bf16.mxu0 0
      %679 = vmatpush2.bf16.msra.mxu0 0
      %680 = vmatprep.subr.bf16.mxu0 0
      %681 = vmatpush2.bf16.msra.mxu0 0
      %682 = vmatprep.subr.bf16.mxu0 0
      %683 = vmatpush2.bf16.msra.mxu0 0
      %684 = vmatprep.subr.bf16.mxu0 0
      %685 = vmatpush2.bf16.msra.mxu0 0
      %686 = vmatprep.subr.bf16.mxu0 0
      %687 = vmatpush2.bf16.msra.mxu0 0
      %688 = vmatprep.subr.bf16.mxu0 0
      %689 = vmatpush2.bf16.msra.mxu0 0
      %690 = vmatprep.subr.bf16.mxu0 0
      %691 = vmatpush2.bf16.msra.mxu0 0
      %692 = vmatprep.mubr.bf16.mxu0 0
      %693 = vmatmul.mubr.bf16.gmra.mxu0 %v658
      %v694 = vpop.f32.mrf.mxu0
      %v695 = vadd.f32 0.0, %v694
      %v696 = vpop.f32.mrf.mxu0
      %v697 = vpop.f32.mrf.mxu0
      %v698 = vadd.f32 0.0, %v697
      %v699 = vpop.f32.mrf.mxu0
      %700 = vdwg.mxu0
      %v701 = vpack.c.bf16 %v698, %v695
      %703 = vrot.lane.b32.xlu0 %v580, 112
      %v704 = vpop.permute.xlu0 %703
      %705 = vrot.lane.b32.xlu0 %v581, 112
      %v706 = vpop.permute.xlu0 %705
      %v708 = vsel %vm582, %v704, 0
      %v711 = vsel %vm582, %v706, 0
      %713 = vmatprep.subr.bf16.mxu0 0
      %714 = vmatpush1.bf16.xpose.msra.mxu0 0
      %715 = vmatprep.subr.bf16.mxu0 0
      %716 = vmatpush1.bf16.xpose.msra.mxu0 0
      %717 = vmatprep.subr.bf16.mxu0 0
      %718 = vmatpush1.bf16.xpose.msra.mxu0 0
      %719 = vmatprep.subr.bf16.mxu0 0
      %720 = vmatpush1.bf16.xpose.msra.mxu0 0
      %721 = vmatprep.subr.bf16.mxu0 0
      %722 = vmatpush1.bf16.xpose.msra.mxu0 0
      %723 = vmatprep.subr.bf16.mxu0 0
      %724 = vmatpush1.bf16.xpose.msra.mxu0 0
      %725 = vmatprep.subr.bf16.mxu0 0
      %726 = vmatpush1.bf16.xpose.msra.mxu0 0
      %727 = vmatprep.subr.bf16.mxu0 0
      %728 = vmatpush1.bf16.xpose.msra.mxu0 %v711
      %729 = vmatprep.subr.bf16.mxu0 0
      %730 = vmatpush2.bf16.xpose.msra.mxu0 0
      %731 = vmatprep.subr.bf16.mxu0 0
      %732 = vmatpush2.bf16.xpose.msra.mxu0 0
      %733 = vmatprep.subr.bf16.mxu0 0
      %734 = vmatpush2.bf16.xpose.msra.mxu0 0
      %735 = vmatprep.subr.bf16.mxu0 0
      %736 = vmatpush2.bf16.xpose.msra.mxu0 0
      %737 = vmatprep.subr.bf16.mxu0 0
      %738 = vmatpush2.bf16.xpose.msra.mxu0 0
      %739 = vmatprep.subr.bf16.mxu0 0
      %740 = vmatpush2.bf16.xpose.msra.mxu0 0
      %741 = vmatprep.subr.bf16.mxu0 0
      %742 = vmatpush2.bf16.xpose.msra.mxu0 0
      %743 = vmatprep.subr.bf16.mxu0 0
      %744 = vmatpush2.bf16.xpose.msra.mxu0 0
      %745 = vmatprep.mubr.bf16.mxu0 0
      %746 = vmatmul.mubr.bf16.gmra.mxu0 %v708
      %v747 = vpop.f32.mrf.mxu0
      %v748 = vadd.f32 0.0, %v747
      %v749 = vpop.f32.mrf.mxu0
      %v750 = vpop.f32.mrf.mxu0
      %v751 = vadd.f32 0.0, %v750
      %v752 = vpop.f32.mrf.mxu0
      %753 = vdwg.mxu0
      %v754 = vsel %vm582, %v748, -inf
      %755 = vmax.xlane.f32.xlu0 %v754
      %v756 = vpop.xlane.xlu0 %755
      %v757 = vsel %vm582, %v751, -inf
      %758 = vmax.xlane.f32.xlu0 %v757
      %v759 = vpop.xlane.xlu0 %758
      %v760 = vsub.f32 %v748, %v756
      %v761 = vsub.f32 %v751, %v759
      %v762 = vmul.f32 %v760, 1.442695
      %v763 = vpow.pop %v762
      %v764 = vmul.f32 %v761, 1.442695
      %v765 = vpow.pop %v764
      %v766 = vsel %vm582, %v763, 0.0
      %767 = vadd.xlane.f32.xlu0 %v766
      %v768 = vpop.xlane.xlu0 %767
      %v769 = vsel %vm582, %v765, 0.0
      %770 = vadd.xlane.f32.xlu0 %v769
      %v771 = vpop.xlane.xlu0 %770
      %v772 = vrcp.pop %v768
      %v773 = vrcp.pop %v771
      %v774 = vmul.f32 %v763, %v772
      %v775 = vmul.f32 %v765, %v773
      %v776 = vpack.c.bf16 %v775, %v774
      %777 = vrot.lane.b32.xlu0 %v581, 48
      %v778 = vpop.permute.xlu0 %777
      %v781 = vsel %vm582, %v776, 0
      %783 = vmatprep.subr.bf16.mxu0 0
      %784 = vmatpush1.bf16.msra.mxu0 0
      %785 = vmatprep.subr.bf16.mxu0 0
      %786 = vmatpush1.bf16.msra.mxu0 0
      %787 = vmatprep.subr.bf16.mxu0 0
      %788 = vmatpush1.bf16.msra.mxu0 0
      %789 = vmatprep.subr.bf16.mxu0 0
      %790 = vmatpush1.bf16.msra.mxu0 0
      %791 = vmatprep.subr.bf16.mxu0 0
      %792 = vmatpush1.bf16.msra.mxu0 0
      %793 = vmatprep.subr.bf16.mxu0 0
      %794 = vmatpush1.bf16.msra.mxu0 0
      %795 = vmatprep.subr.bf16.mxu0 0
      %796 = vmatpush1.bf16.msra.mxu0 0
      %797 = vmatprep.subr.bf16.mxu0 0
      %798 = vmatpush1.bf16.msra.mxu0 %v778
      %799 = vmatprep.subr.bf16.mxu0 0
      %800 = vmatpush2.bf16.msra.mxu0 0
      %801 = vmatprep.subr.bf16.mxu0 0
      %802 = vmatpush2.bf16.msra.mxu0 0
      %803 = vmatprep.subr.bf16.mxu0 0
      %804 = vmatpush2.bf16.msra.mxu0 0
      %805 = vmatprep.subr.bf16.mxu0 0
      %806 = vmatpush2.bf16.msra.mxu0 0
      %807 = vmatprep.subr.bf16.mxu0 0
      %808 = vmatpush2.bf16.msra.mxu0 0
      %809 = vmatprep.subr.bf16.mxu0 0
      %810 = vmatpush2.bf16.msra.mxu0 0
      %811 = vmatprep.subr.bf16.mxu0 0
      %812 = vmatpush2.bf16.msra.mxu0 0
      %813 = vmatprep.subr.bf16.mxu0 0
      %814 = vmatpush2.bf16.msra.mxu0 0
      %815 = vmatprep.mubr.bf16.mxu0 0
      %816 = vmatmul.mubr.bf16.gmra.mxu0 %v781
      %v817 = vpop.f32.mrf.mxu0
      %v818 = vadd.f32 0.0, %v817
      %v819 = vpop.f32.mrf.mxu0
      %v820 = vpop.f32.mrf.mxu0
      %v821 = vadd.f32 0.0, %v820
      %v822 = vpop.f32.mrf.mxu0
      %823 = vdwg.mxu0
      %v824 = vpack.c.bf16 %v821, %v818
      %v827 = vunpack.c.l.b16 %v572
      %v828 = vunpack.c.l.b16 %v573
      %v829 = vpack.c.b16 %v828, %v827
      %v832 = vsel %vm582, %v824, 0
      %834 = vmatprep.subr.bf16.mxu0 0
      %835 = vmatpush1.bf16.msra.mxu0 0
      %836 = vmatprep.subr.bf16.mxu0 0
      %837 = vmatpush1.bf16.msra.mxu0 0
      %838 = vmatprep.subr.bf16.mxu0 0
      %839 = vmatpush1.bf16.msra.mxu0 0
      %840 = vmatprep.subr.bf16.mxu0 0
      %841 = vmatpush1.bf16.msra.mxu0 0
      %842 = vmatprep.subr.bf16.mxu0 0
      %843 = vmatpush1.bf16.msra.mxu0 0
      %844 = vmatprep.subr.bf16.mxu0 0
      %845 = vmatpush1.bf16.msra.mxu0 0
      %846 = vmatprep.subr.bf16.mxu0 0
      %847 = vmatpush1.bf16.msra.mxu0 0
      %848 = vmatprep.subr.bf16.mxu0 0
      %849 = vmatpush1.bf16.msra.mxu0 %v829
      %850 = vmatprep.subr.bf16.mxu0 0
      %851 = vmatpush2.bf16.msra.mxu0 0
      %852 = vmatprep.subr.bf16.mxu0 0
      %853 = vmatpush2.bf16.msra.mxu0 0
      %854 = vmatprep.subr.bf16.mxu0 0
      %855 = vmatpush2.bf16.msra.mxu0 0
      %856 = vmatprep.subr.bf16.mxu0 0
      %857 = vmatpush2.bf16.msra.mxu0 0
      %858 = vmatprep.subr.bf16.mxu0 0
      %859 = vmatpush2.bf16.msra.mxu0 0
      %860 = vmatprep.subr.bf16.mxu0 0
      %861 = vmatpush2.bf16.msra.mxu0 0
      %862 = vmatprep.subr.bf16.mxu0 0
      %863 = vmatpush2.bf16.msra.mxu0 0
      %864 = vmatprep.subr.bf16.mxu0 0
      %865 = vmatpush2.bf16.msra.mxu0 0
      %866 = vmatprep.mubr.bf16.mxu0 0
      %867 = vmatmul.mubr.bf16.gmra.mxu0 %v832
      %v868 = vpop.f32.mrf.mxu0
      %v869 = vadd.f32 0.0, %v868
      %v870 = vpop.f32.mrf.mxu0
      %v871 = vpop.f32.mrf.mxu0
      %v872 = vadd.f32 0.0, %v871
      %v873 = vpop.f32.mrf.mxu0
      %874 = vdwg.mxu0
      %v877 = vunpack.c.l.b16 %v570
      %v878 = vunpack.c.l.b16 %v571
      %v879 = vpack.c.b16 %v878, %v877
      %v882 = vsel %vm582, %v701, 0
      %884 = vmatprep.subr.bf16.mxu0 0
      %885 = vmatpush1.bf16.msra.mxu0 0
      %886 = vmatprep.subr.bf16.mxu0 0
      %887 = vmatpush1.bf16.msra.mxu0 0
      %888 = vmatprep.subr.bf16.mxu0 0
      %889 = vmatpush1.bf16.msra.mxu0 0
      %890 = vmatprep.subr.bf16.mxu0 0
      %891 = vmatpush1.bf16.msra.mxu0 0
      %892 = vmatprep.subr.bf16.mxu0 0
      %893 = vmatpush1.bf16.msra.mxu0 0
      %894 = vmatprep.subr.bf16.mxu0 0
      %895 = vmatpush1.bf16.msra.mxu0 0
      %896 = vmatprep.subr.bf16.mxu0 0
      %897 = vmatpush1.bf16.msra.mxu0 0
      %898 = vmatprep.subr.bf16.mxu0 0
      %899 = vmatpush1.bf16.msra.mxu0 %v879
      %900 = vmatprep.subr.bf16.mxu0 0
      %901 = vmatpush2.bf16.msra.mxu0 0
      %902 = vmatprep.subr.bf16.mxu0 0
      %903 = vmatpush2.bf16.msra.mxu0 0
      %904 = vmatprep.subr.bf16.mxu0 0
      %905 = vmatpush2.bf16.msra.mxu0 0
      %906 = vmatprep.subr.bf16.mxu0 0
      %907 = vmatpush2.bf16.msra.mxu0 0
      %908 = vmatprep.subr.bf16.mxu0 0
      %909 = vmatpush2.bf16.msra.mxu0 0
      %910 = vmatprep.subr.bf16.mxu0 0
      %911 = vmatpush2.bf16.msra.mxu0 0
      %912 = vmatprep.subr.bf16.mxu0 0
      %913 = vmatpush2.bf16.msra.mxu0 0
      %914 = vmatprep.subr.bf16.mxu0 0
      %915 = vmatpush2.bf16.msra.mxu0 0
      %916 = vmatprep.mubr.bf16.mxu0 0
      %917 = vmatmul.mubr.bf16.gmra.mxu0 %v882
      %v918 = vpop.f32.mrf.mxu0
      %v919 = vadd.f32 %v869, %v918
      %v920 = vpop.f32.mrf.mxu0
      %v921 = vpop.f32.mrf.mxu0
      %v922 = vadd.f32 %v872, %v921
      %v923 = vpop.f32.mrf.mxu0
      %924 = vdwg.mxu0
      %925 = vrot.lane.b32.xlu0 %v580, 96
      %v926 = vpop.permute.xlu0 %925
      %927 = vrot.lane.b32.xlu0 %v581, 96
      %v928 = vpop.permute.xlu0 %927
      %v930 = vsel %vm582, %v926, 0
      %v933 = vsel %vm582, %v928, 0
      %935 = vmatprep.subr.bf16.mxu0 0
      %936 = vmatpush1.bf16.xpose.msra.mxu0 0
      %937 = vmatprep.subr.bf16.mxu0 0
      %938 = vmatpush1.bf16.xpose.msra.mxu0 0
      %939 = vmatprep.subr.bf16.mxu0 0
      %940 = vmatpush1.bf16.xpose.msra.mxu0 0
      %941 = vmatprep.subr.bf16.mxu0 0
      %942 = vmatpush1.bf16.xpose.msra.mxu0 0
      %943 = vmatprep.subr.bf16.mxu0 0
      %944 = vmatpush1.bf16.xpose.msra.mxu0 0
      %945 = vmatprep.subr.bf16.mxu0 0
      %946 = vmatpush1.bf16.xpose.msra.mxu0 0
      %947 = vmatprep.subr.bf16.mxu0 0
      %948 = vmatpush1.bf16.xpose.msra.mxu0 0
      %949 = vmatprep.subr.bf16.mxu0 0
      %950 = vmatpush1.bf16.xpose.msra.mxu0 %v933
      %951 = vmatprep.subr.bf16.mxu0 0
      %952 = vmatpush2.bf16.xpose.msra.mxu0 0
      %953 = vmatprep.subr.bf16.mxu0 0
      %954 = vmatpush2.bf16.xpose.msra.mxu0 0
      %955 = vmatprep.subr.bf16.mxu0 0
      %956 = vmatpush2.bf16.xpose.msra.mxu0 0
      %957 = vmatprep.subr.bf16.mxu0 0
      %958 = vmatpush2.bf16.xpose.msra.mxu0 0
      %959 = vmatprep.subr.bf16.mxu0 0
      %960 = vmatpush2.bf16.xpose.msra.mxu0 0
      %961 = vmatprep.subr.bf16.mxu0 0
      %962 = vmatpush2.bf16.xpose.msra.mxu0 0
      %963 = vmatprep.subr.bf16.mxu0 0
      %964 = vmatpush2.bf16.xpose.msra.mxu0 0
      %965 = vmatprep.subr.bf16.mxu0 0
      %966 = vmatpush2.bf16.xpose.msra.mxu0 0
      %967 = vmatprep.mubr.bf16.mxu0 0
      %968 = vmatmul.mubr.bf16.gmra.mxu0 %v930
      %v969 = vpop.f32.mrf.mxu0
      %v970 = vadd.f32 0.0, %v969
      %v971 = vpop.f32.mrf.mxu0
      %v972 = vpop.f32.mrf.mxu0
      %v973 = vadd.f32 0.0, %v972
      %v974 = vpop.f32.mrf.mxu0
      %975 = vdwg.mxu0
      %v976 = vsel %vm582, %v970, -inf
      %977 = vmax.xlane.f32.xlu0 %v976
      %v978 = vpop.xlane.xlu0 %977
      %v979 = vsel %vm582, %v973, -inf
      %980 = vmax.xlane.f32.xlu0 %v979
      %v981 = vpop.xlane.xlu0 %980
      %v982 = vsub.f32 %v970, %v978
      %v983 = vsub.f32 %v973, %v981
      %v984 = vmul.f32 %v982, 1.442695
      %v985 = vpow.pop %v984
      %v986 = vmul.f32 %v983, 1.442695
      %v987 = vpow.pop %v986
      %v988 = vsel %vm582, %v985, 0.0
      %989 = vadd.xlane.f32.xlu0 %v988
      %v990 = vpop.xlane.xlu0 %989
      %v991 = vsel %vm582, %v987, 0.0
      %992 = vadd.xlane.f32.xlu0 %v991
      %v993 = vpop.xlane.xlu0 %992
      %v994 = vrcp.pop %v990
      %v995 = vrcp.pop %v993
      %v996 = vmul.f32 %v985, %v994
      %v997 = vmul.f32 %v987, %v995
      %v998 = vpack.c.bf16 %v997, %v996
      %999 = vrot.lane.b32.xlu0 %v581, 32
      %v1000 = vpop.permute.xlu0 %999
      %v1003 = vsel %vm582, %v998, 0
      %1005 = vmatprep.subr.bf16.mxu0 0
      %1006 = vmatpush1.bf16.msra.mxu0 0
      %1007 = vmatprep.subr.bf16.mxu0 0
      %1008 = vmatpush1.bf16.msra.mxu0 0
      %1009 = vmatprep.subr.bf16.mxu0 0
      %1010 = vmatpush1.bf16.msra.mxu0 0
      %1011 = vmatprep.subr.bf16.mxu0 0
      %1012 = vmatpush1.bf16.msra.mxu0 0
      %1013 = vmatprep.subr.bf16.mxu0 0
      %1014 = vmatpush1.bf16.msra.mxu0 0
      %1015 = vmatprep.subr.bf16.mxu0 0
      %1016 = vmatpush1.bf16.msra.mxu0 0
      %1017 = vmatprep.subr.bf16.mxu0 0
      %1018 = vmatpush1.bf16.msra.mxu0 0
      %1019 = vmatprep.subr.bf16.mxu0 0
      %1020 = vmatpush1.bf16.msra.mxu0 %v1000
      %1021 = vmatprep.subr.bf16.mxu0 0
      %1022 = vmatpush2.bf16.msra.mxu0 0
      %1023 = vmatprep.subr.bf16.mxu0 0
      %1024 = vmatpush2.bf16.msra.mxu0 0
      %1025 = vmatprep.subr.bf16.mxu0 0
      %1026 = vmatpush2.bf16.msra.mxu0 0
      %1027 = vmatprep.subr.bf16.mxu0 0
      %1028 = vmatpush2.bf16.msra.mxu0 0
      %1029 = vmatprep.subr.bf16.mxu0 0
      %1030 = vmatpush2.bf16.msra.mxu0 0
      %1031 = vmatprep.subr.bf16.mxu0 0
      %1032 = vmatpush2.bf16.msra.mxu0 0
      %1033 = vmatprep.subr.bf16.mxu0 0
      %1034 = vmatpush2.bf16.msra.mxu0 0
      %1035 = vmatprep.subr.bf16.mxu0 0
      %1036 = vmatpush2.bf16.msra.mxu0 0
      %1037 = vmatprep.mubr.bf16.mxu0 0
      %1038 = vmatmul.mubr.bf16.gmra.mxu0 %v1003
      %v1039 = vpop.f32.mrf.mxu0
      %v1040 = vadd.f32 0.0, %v1039
      %v1041 = vpop.f32.mrf.mxu0
      %v1042 = vpop.f32.mrf.mxu0
      %v1043 = vadd.f32 0.0, %v1042
      %v1044 = vpop.f32.mrf.mxu0
      %1045 = vdwg.mxu0
      %v1046 = vpack.c.bf16 %v1043, %v1040
      %v1049 = vunpack.c.l.b16 %v574
      %v1050 = vunpack.c.l.b16 %v575
      %v1051 = vpack.c.b16 %v1050, %v1049
      %v1054 = vsel %vm582, %v1046, 0
      %1056 = vmatprep.subr.bf16.mxu0 0
      %1057 = vmatpush1.bf16.msra.mxu0 0
      %1058 = vmatprep.subr.bf16.mxu0 0
      %1059 = vmatpush1.bf16.msra.mxu0 0
      %1060 = vmatprep.subr.bf16.mxu0 0
      %1061 = vmatpush1.bf16.msra.mxu0 0
      %1062 = vmatprep.subr.bf16.mxu0 0
      %1063 = vmatpush1.bf16.msra.mxu0 0
      %1064 = vmatprep.subr.bf16.mxu0 0
      %1065 = vmatpush1.bf16.msra.mxu0 0
      %1066 = vmatprep.subr.bf16.mxu0 0
      %1067 = vmatpush1.bf16.msra.mxu0 0
      %1068 = vmatprep.subr.bf16.mxu0 0
      %1069 = vmatpush1.bf16.msra.mxu0 0
      %1070 = vmatprep.subr.bf16.mxu0 0
      %1071 = vmatpush1.bf16.msra.mxu0 %v1051
      %1072 = vmatprep.subr.bf16.mxu0 0
      %1073 = vmatpush2.bf16.msra.mxu0 0
      %1074 = vmatprep.subr.bf16.mxu0 0
      %1075 = vmatpush2.bf16.msra.mxu0 0
      %1076 = vmatprep.subr.bf16.mxu0 0
      %1077 = vmatpush2.bf16.msra.mxu0 0
      %1078 = vmatprep.subr.bf16.mxu0 0
      %1079 = vmatpush2.bf16.msra.mxu0 0
      %1080 = vmatprep.subr.bf16.mxu0 0
      %1081 = vmatpush2.bf16.msra.mxu0 0
      %1082 = vmatprep.subr.bf16.mxu0 0
      %1083 = vmatpush2.bf16.msra.mxu0 0
      %1084 = vmatprep.subr.bf16.mxu0 0
      %1085 = vmatpush2.bf16.msra.mxu0 0
      %1086 = vmatprep.subr.bf16.mxu0 0
      %1087 = vmatpush2.bf16.msra.mxu0 0
      %1088 = vmatprep.mubr.bf16.mxu0 0
      %1089 = vmatmul.mubr.bf16.gmra.mxu0 %v1054
      %v1090 = vpop.f32.mrf.mxu0
      %v1091 = vadd.f32 0.0, %v1090
      %v1092 = vpop.f32.mrf.mxu0
      %v1093 = vpop.f32.mrf.mxu0
      %v1094 = vadd.f32 0.0, %v1093
      %v1095 = vpop.f32.mrf.mxu0
      %1096 = vdwg.mxu0
      %v1097 = vadd.f32 %v919, %v1091
      %v1098 = vadd.f32 %v922, %v1094
      %1099 = vrot.lane.b32.xlu0 %v580, 80
      %v1100 = vpop.permute.xlu0 %1099
      %1101 = vrot.lane.b32.xlu0 %v581, 80
      %v1102 = vpop.permute.xlu0 %1101
      %v1104 = vsel %vm582, %v1100, 0
      %v1107 = vsel %vm582, %v1102, 0
      %1109 = vmatprep.subr.bf16.mxu0 0
      %1110 = vmatpush1.bf16.xpose.msra.mxu0 0
      %1111 = vmatprep.subr.bf16.mxu0 0
      %1112 = vmatpush1.bf16.xpose.msra.mxu0 0
      %1113 = vmatprep.subr.bf16.mxu0 0
      %1114 = vmatpush1.bf16.xpose.msra.mxu0 0
      %1115 = vmatprep.subr.bf16.mxu0 0
      %1116 = vmatpush1.bf16.xpose.msra.mxu0 0
      %1117 = vmatprep.subr.bf16.mxu0 0
      %1118 = vmatpush1.bf16.xpose.msra.mxu0 0
      %1119 = vmatprep.subr.bf16.mxu0 0
      %1120 = vmatpush1.bf16.xpose.msra.mxu0 0
      %1121 = vmatprep.subr.bf16.mxu0 0
      %1122 = vmatpush1.bf16.xpose.msra.mxu0 0
      %1123 = vmatprep.subr.bf16.mxu0 0
      %1124 = vmatpush1.bf16.xpose.msra.mxu0 %v1107
      %1125 = vmatprep.subr.bf16.mxu0 0
      %1126 = vmatpush2.bf16.xpose.msra.mxu0 0
      %1127 = vmatprep.subr.bf16.mxu0 0
      %1128 = vmatpush2.bf16.xpose.msra.mxu0 0
      %1129 = vmatprep.subr.bf16.mxu0 0
      %1130 = vmatpush2.bf16.xpose.msra.mxu0 0
      %1131 = vmatprep.subr.bf16.mxu0 0
      %1132 = vmatpush2.bf16.xpose.msra.mxu0 0
      %1133 = vmatprep.subr.bf16.mxu0 0
      %1134 = vmatpush2.bf16.xpose.msra.mxu0 0
      %1135 = vmatprep.subr.bf16.mxu0 0
      %1136 = vmatpush2.bf16.xpose.msra.mxu0 0
      %1137 = vmatprep.subr.bf16.mxu0 0
      %1138 = vmatpush2.bf16.xpose.msra.mxu0 0
      %1139 = vmatprep.subr.bf16.mxu0 0
      %1140 = vmatpush2.bf16.xpose.msra.mxu0 0
      %1141 = vmatprep.mubr.bf16.mxu0 0
      %1142 = vmatmul.mubr.bf16.gmra.mxu0 %v1104
      %v1143 = vpop.f32.mrf.mxu0
      %v1144 = vadd.f32 0.0, %v1143
      %v1145 = vpop.f32.mrf.mxu0
      %v1146 = vpop.f32.mrf.mxu0
      %v1147 = vadd.f32 0.0, %v1146
      %v1148 = vpop.f32.mrf.mxu0
      %1149 = vdwg.mxu0
      %v1150 = vsel %vm582, %v1144, -inf
      %1151 = vmax.xlane.f32.xlu0 %v1150
      %v1152 = vpop.xlane.xlu0 %1151
      %v1153 = vsel %vm582, %v1147, -inf
      %1154 = vmax.xlane.f32.xlu0 %v1153
      %v1155 = vpop.xlane.xlu0 %1154
      %v1156 = vsub.f32 %v1144, %v1152
      %v1157 = vsub.f32 %v1147, %v1155
      %v1158 = vmul.f32 %v1156, 1.442695
      %v1159 = vpow.pop %v1158
      %v1160 = vmul.f32 %v1157, 1.442695
      %v1161 = vpow.pop %v1160
      %v1162 = vsel %vm582, %v1159, 0.0
      %1163 = vadd.xlane.f32.xlu0 %v1162
      %v1164 = vpop.xlane.xlu0 %1163
      %v1165 = vsel %vm582, %v1161, 0.0
      %1166 = vadd.xlane.f32.xlu0 %v1165
      %v1167 = vpop.xlane.xlu0 %1166
      %v1168 = vrcp.pop %v1164
      %v1169 = vrcp.pop %v1167
      %v1170 = vmul.f32 %v1159, %v1168
      %v1171 = vmul.f32 %v1161, %v1169
      %v1172 = vpack.c.bf16 %v1171, %v1170
      %1173 = vrot.lane.b32.xlu0 %v581, 16
      %v1174 = vpop.permute.xlu0 %1173
      %v1177 = vsel %vm582, %v1172, 0
      %1179 = vmatprep.subr.bf16.mxu0 0
      %1180 = vmatpush1.bf16.msra.mxu0 0
      %1181 = vmatprep.subr.bf16.mxu0 0
      %1182 = vmatpush1.bf16.msra.mxu0 0
      %1183 = vmatprep.subr.bf16.mxu0 0
      %1184 = vmatpush1.bf16.msra.mxu0 0
      %1185 = vmatprep.subr.bf16.mxu0 0
      %1186 = vmatpush1.bf16.msra.mxu0 0
      %1187 = vmatprep.subr.bf16.mxu0 0
      %1188 = vmatpush1.bf16.msra.mxu0 0
      %1189 = vmatprep.subr.bf16.mxu0 0
      %1190 = vmatpush1.bf16.msra.mxu0 0
      %1191 = vmatprep.subr.bf16.mxu0 0
      %1192 = vmatpush1.bf16.msra.mxu0 0
      %1193 = vmatprep.subr.bf16.mxu0 0
      %1194 = vmatpush1.bf16.msra.mxu0 %v1174
      %1195 = vmatprep.subr.bf16.mxu0 0
      %1196 = vmatpush2.bf16.msra.mxu0 0
      %1197 = vmatprep.subr.bf16.mxu0 0
      %1198 = vmatpush2.bf16.msra.mxu0 0
      %1199 = vmatprep.subr.bf16.mxu0 0
      %1200 = vmatpush2.bf16.msra.mxu0 0
      %1201 = vmatprep.subr.bf16.mxu0 0
      %1202 = vmatpush2.bf16.msra.mxu0 0
      %1203 = vmatprep.subr.bf16.mxu0 0
      %1204 = vmatpush2.bf16.msra.mxu0 0
      %1205 = vmatprep.subr.bf16.mxu0 0
      %1206 = vmatpush2.bf16.msra.mxu0 0
      %1207 = vmatprep.subr.bf16.mxu0 0
      %1208 = vmatpush2.bf16.msra.mxu0 0
      %1209 = vmatprep.subr.bf16.mxu0 0
      %1210 = vmatpush2.bf16.msra.mxu0 0
      %1211 = vmatprep.mubr.bf16.mxu0 0
      %1212 = vmatmul.mubr.bf16.gmra.mxu0 %v1177
      %v1213 = vpop.f32.mrf.mxu0
      %v1214 = vadd.f32 0.0, %v1213
      %v1215 = vpop.f32.mrf.mxu0
      %v1216 = vpop.f32.mrf.mxu0
      %v1217 = vadd.f32 0.0, %v1216
      %v1218 = vpop.f32.mrf.mxu0
      %1219 = vdwg.mxu0
      %v1220 = vpack.c.bf16 %v1217, %v1214
      %v1223 = vunpack.c.l.b16 %v576
      %v1224 = vunpack.c.l.b16 %v577
      %v1225 = vpack.c.b16 %v1224, %v1223
      %v1228 = vsel %vm582, %v1220, 0
      %1230 = vmatprep.subr.bf16.mxu0 0
      %1231 = vmatpush1.bf16.msra.mxu0 0
      %1232 = vmatprep.subr.bf16.mxu0 0
      %1233 = vmatpush1.bf16.msra.mxu0 0
      %1234 = vmatprep.subr.bf16.mxu0 0
      %1235 = vmatpush1.bf16.msra.mxu0 0
      %1236 = vmatprep.subr.bf16.mxu0 0
      %1237 = vmatpush1.bf16.msra.mxu0 0
      %1238 = vmatprep.subr.bf16.mxu0 0
      %1239 = vmatpush1.bf16.msra.mxu0 0
      %1240 = vmatprep.subr.bf16.mxu0 0
      %1241 = vmatpush1.bf16.msra.mxu0 0
      %1242 = vmatprep.subr.bf16.mxu0 0
      %1243 = vmatpush1.bf16.msra.mxu0 0
      %1244 = vmatprep.subr.bf16.mxu0 0
      %1245 = vmatpush1.bf16.msra.mxu0 %v1225
      %1246 = vmatprep.subr.bf16.mxu0 0
      %1247 = vmatpush2.bf16.msra.mxu0 0
      %1248 = vmatprep.subr.bf16.mxu0 0
      %1249 = vmatpush2.bf16.msra.mxu0 0
      %1250 = vmatprep.subr.bf16.mxu0 0
      %1251 = vmatpush2.bf16.msra.mxu0 0
      %1252 = vmatprep.subr.bf16.mxu0 0
      %1253 = vmatpush2.bf16.msra.mxu0 0
      %1254 = vmatprep.subr.bf16.mxu0 0
      %1255 = vmatpush2.bf16.msra.mxu0 0
      %1256 = vmatprep.subr.bf16.mxu0 0
      %1257 = vmatpush2.bf16.msra.mxu0 0
      %1258 = vmatprep.subr.bf16.mxu0 0
      %1259 = vmatpush2.bf16.msra.mxu0 0
      %1260 = vmatprep.subr.bf16.mxu0 0
      %1261 = vmatpush2.bf16.msra.mxu0 0
      %1262 = vmatprep.mubr.bf16.mxu0 0
      %1263 = vmatmul.mubr.bf16.gmra.mxu0 %v1228
      %v1264 = vpop.f32.mrf.mxu0
      %v1265 = vadd.f32 0.0, %v1264
      %v1266 = vpop.f32.mrf.mxu0
      %v1267 = vpop.f32.mrf.mxu0
      %v1268 = vadd.f32 0.0, %v1267
      %v1269 = vpop.f32.mrf.mxu0
      %1270 = vdwg.mxu0
      %v1271 = vadd.f32 %v1097, %v1265
      %v1272 = vadd.f32 %v1098, %v1268
      %v1273 = vld [vmem:[%s5] sm:$0x1]
      %v1275 = vlaneseq
      %v1276 = vshrl.u32 %v1275, 7
      %v1277 = vsub.s32 0, %v1276
      %v1278 = vrot.slane %v1273, %v1277
      %v1280 = vadd.f32 %v1271, %v1278
      %v1281 = vadd.f32 %v1272, %v1278
      %v1282 = vld [vmem:[%s6] sm:$0xf]
      %v1283 = vld [vmem:[%s6 + $0x4] sm:$0xf]
      %v1284 = vld [vmem:[%s6 + $0x8] sm:$0xf]
      %v1285 = vld [vmem:[%s6 + $0xc] sm:$0xf]
      %v1286 = vld [vmem:[%s7] sm:$0x1]
      %v1288 = vlaneseq
      %v1289 = vshrl.u32 %v1288, 7
      %v1290 = vsub.s32 0, %v1289
      %v1291 = vrot.slane %v1286, %v1290
      %v1297 = vunpack.c.l.b16 %v1282
      %v1298 = vunpack.c.l.b16 %v1283
      %v1299 = vunpack.c.l.b16 %v1284
      %v1300 = vunpack.c.l.b16 %v1285
      %v1301 = vpack.c.b16 %v1298, %v1297
      %v1302 = vpack.c.b16 %v1300, %v1299
      %1305 = vmatprep.subr.bf16.mxu0 0
      %1306 = vmatpush1.bf16.msra.mxu0 0
      %1307 = vmatprep.subr.bf16.mxu0 0
      %1308 = vmatpush1.bf16.msra.mxu0 0
      %1309 = vmatprep.subr.bf16.mxu0 0
      %1310 = vmatpush1.bf16.msra.mxu0 0
      %1311 = vmatprep.subr.bf16.mxu0 0
      %1312 = vmatpush1.bf16.msra.mxu0 0
      %1313 = vmatprep.subr.bf16.mxu0 0
      %1314 = vmatpush1.bf16.msra.mxu0 0
      %1315 = vmatprep.subr.bf16.mxu0 0
      %1316 = vmatpush1.bf16.msra.mxu0 0
      %1317 = vmatprep.subr.bf16.mxu0 0
      %1318 = vmatpush1.bf16.msra.mxu0 %v1302
      %1319 = vmatprep.subr.bf16.mxu0 0
      %1320 = vmatpush1.bf16.msra.mxu0 %v1301
      %1321 = vmatprep.subr.bf16.mxu0 0
      %1322 = vmatpush2.bf16.msra.mxu0 0
      %1323 = vmatprep.subr.bf16.mxu0 0
      %1324 = vmatpush2.bf16.msra.mxu0 0
      %1325 = vmatprep.subr.bf16.mxu0 0
      %1326 = vmatpush2.bf16.msra.mxu0 0
      %1327 = vmatprep.subr.bf16.mxu0 0
      %1328 = vmatpush2.bf16.msra.mxu0 0
      %1329 = vmatprep.subr.bf16.mxu0 0
      %1330 = vmatpush2.bf16.msra.mxu0 0
      %1331 = vmatprep.subr.bf16.mxu0 0
      %1332 = vmatpush2.bf16.msra.mxu0 0
      %1333 = vmatprep.subr.bf16.mxu0 0
      %1334 = vmatpush2.bf16.msra.mxu0 0
      %1335 = vmatprep.subr.bf16.mxu0 0
      %1336 = vmatpush2.bf16.msra.mxu0 0
      %1337 = vmatprep.mubr.bf16.mxu0 0
      %1338 = vmatmul.mubr.bf16.gmra.mxu0 %v527
      %v1339 = vpop.f32.mrf.mxu0
      %v1340 = vadd.f32 %v1291, %v1339
      %v1341 = vpop.f32.mrf.mxu0
      %v1342 = vpop.f32.mrf.mxu0
      %v1343 = vadd.f32 %v1291, %v1342
      %v1344 = vpop.f32.mrf.mxu0
      %1345 = vdwg.mxu0
      %v1346 = vsel %vm460, %v1340, 0.0
      %1347 = vadd.xlane.f32.xlu0 %v1346
      %v1348 = vpop.xlane.xlu0 %1347
      %v1349 = vsel %vm460, %v1343, 0.0
      %1350 = vadd.xlane.f32.xlu0 %v1349
      %v1351 = vpop.xlane.xlu0 %1350
      %v1352 = vrcp.pop 32.0
      %v1353 = vmul.f32 %v1348, %v1352
      %v1354 = vmul.f32 %v1351, %v1352
      %v1355 = vsub.f32 %v1340, %v1353
      %v1356 = vsub.f32 %v1343, %v1354
      %v1357 = vmul.f32 %v1355, %v1355
      %v1358 = vmul.f32 %v1356, %v1356
      %v1359 = vsel %vm460, %v1357, 0.0
      %1360 = vadd.xlane.f32.xlu0 %v1359
      %v1361 = vpop.xlane.xlu0 %1360
      %v1362 = vsel %vm460, %v1358, 0.0
      %1363 = vadd.xlane.f32.xlu0 %v1362
      %v1364 = vpop.xlane.xlu0 %1363
      %v1365 = vmul.f32 %v1361, %v1352
      %v1366 = vmul.f32 %v1364, %v1352
      %v1367 = vadd.f32 %v1365, 1e-05
      %v1368 = vadd.f32 %v1366, 1e-05
      %v1369 = vrsqrt.pop %v1367
      %v1370 = vrsqrt.pop %v1368
      %v1371 = vmul.f32 %v1355, %v1369
      %v1372 = vmul.f32 %v1356, %v1370
      %v1373 = vld [vmem:[%s8] sm:$0x1]
      %v1375 = vlaneseq
      %v1376 = vshrl.u32 %v1375, 7
      %v1377 = vsub.s32 0, %v1376
      %v1378 = vrot.slane %v1373, %v1377
      %v1380 = vmul.f32 %v1371, %v1378
      %v1381 = vmul.f32 %v1372, %v1378
      %v1382 = vld [vmem:[%s9] sm:$0x1]
      %v1384 = vlaneseq
      %v1385 = vshrl.u32 %v1384, 7
      %v1386 = vsub.s32 0, %v1385
      %v1387 = vrot.slane %v1382, %v1386
      %v1389 = vadd.f32 %v1380, %v1387
      %v1390 = vadd.f32 %v1381, %v1387
      %v1391 = vmax.f32 %v1389, 0.0
      %v1392 = vmax.f32 %v1390, 0.0
      %v1393 = vpack.c.bf16 %v1392, %v1391
      %v1394 = vld [vmem:[%s10] sm:$0xf]
      %v1395 = vld [vmem:[%s10 + $0x4] sm:$0xf]
      %v1396 = vld [vmem:[%s10 + $0x8] sm:$0xf]
      %v1397 = vld [vmem:[%s10 + $0xc] sm:$0xf]
      %v1398 = vld [vmem:[%s11] sm:$0x1]
      %v1400 = vlaneseq
      %v1401 = vshrl.u32 %v1400, 7
      %v1402 = vsub.s32 0, %v1401
      %v1403 = vrot.slane %v1398, %v1402
      %v1409 = vunpack.c.l.b16 %v1394
      %v1410 = vunpack.c.l.b16 %v1395
      %v1411 = vunpack.c.l.b16 %v1396
      %v1412 = vunpack.c.l.b16 %v1397
      %v1413 = vpack.c.b16 %v1410, %v1409
      %v1414 = vpack.c.b16 %v1412, %v1411
      %v1418 = vsel %vm460, %v1393, 0
      %1420 = vmatprep.subr.bf16.mxu0 0
      %1421 = vmatpush1.bf16.msra.mxu0 0
      %1422 = vmatprep.subr.bf16.mxu0 0
      %1423 = vmatpush1.bf16.msra.mxu0 0
      %1424 = vmatprep.subr.bf16.mxu0 0
      %1425 = vmatpush1.bf16.msra.mxu0 0
      %1426 = vmatprep.subr.bf16.mxu0 0
      %1427 = vmatpush1.bf16.msra.mxu0 0
      %1428 = vmatprep.subr.bf16.mxu0 0
      %1429 = vmatpush1.bf16.msra.mxu0 0
      %1430 = vmatprep.subr.bf16.mxu0 0
      %1431 = vmatpush1.bf16.msra.mxu0 0
      %1432 = vmatprep.subr.bf16.mxu0 0
      %1433 = vmatpush1.bf16.msra.mxu0 %v1414
      %1434 = vmatprep.subr.bf16.mxu0 0
      %1435 = vmatpush1.bf16.msra.mxu0 %v1413
      %1436 = vmatprep.subr.bf16.mxu0 0
      %1437 = vmatpush2.bf16.msra.mxu0 0
      %1438 = vmatprep.subr.bf16.mxu0 0
      %1439 = vmatpush2.bf16.msra.mxu0 0
      %1440 = vmatprep.subr.bf16.mxu0 0
      %1441 = vmatpush2.bf16.msra.mxu0 0
      %1442 = vmatprep.subr.bf16.mxu0 0
      %1443 = vmatpush2.bf16.msra.mxu0 0
      %1444 = vmatprep.subr.bf16.mxu0 0
      %1445 = vmatpush2.bf16.msra.mxu0 0
      %1446 = vmatprep.subr.bf16.mxu0 0
      %1447 = vmatpush2.bf16.msra.mxu0 0
      %1448 = vmatprep.subr.bf16.mxu0 0
      %1449 = vmatpush2.bf16.msra.mxu0 0
      %1450 = vmatprep.subr.bf16.mxu0 0
      %1451 = vmatpush2.bf16.msra.mxu0 0
      %1452 = vmatprep.mubr.bf16.mxu0 0
      %1453 = vmatmul.mubr.bf16.gmra.mxu0 %v1418
      %v1454 = vpop.f32.mrf.mxu0
      %v1455 = vadd.f32 %v1403, %v1454
      %v1456 = vpop.f32.mrf.mxu0
      %v1457 = vpop.f32.mrf.mxu0
      %v1458 = vadd.f32 %v1403, %v1457
      %v1459 = vpop.f32.mrf.mxu0
      %1460 = vdwg.mxu0
      %v1461 = vadd.f32 %v1280, %v1455
      %v1462 = vadd.f32 %v1281, %v1458
      %1463 = vst.msk [vmem:[%s433] sm:$0xff] %vm460, %v1461
      %1464 = vst.msk [vmem:[%s433 + $0x8] sm:$0xff] %vm460, %v1462
      %p1465 = scmp.lt.s32.totalorder %s23, 1
      %s1466 = scalar_select %p1465, %s23, 1
      %s1467 = smul.addr %s1466, 2
      %s1468 = smul.addr %s1467, 8
      %s1469 = scalar_lea.vmem %s12, %s1468
      // Predicated region
      $region69: #{global_local_attention.3} parent=67 // pred_check
        %p1470 = pneg %p303
      $region70: #{global_local_attention.3} parent=67 // pred_check_branch
        %1472 = sbr.rel (%p1470) target = $region72
      $region71: #{global_local_attention.3} parent=67 // pred_region
        _
      $region72: #{global_local_attention.3} parent=67 // pred_fallthru
        _
    $region68: #{global_local_attention.3} parent=5 // pred_fallthru
      _
    %p1473 = scmp.le.s32.totalorder 2, %s18
    // Predicated region
    $region73: #{global_local_attention.3} parent=5 // pred_check
      %p1474 = pneg %p1473
    $region74: #{global_local_attention.3} parent=5 // pred_check_branch
      %1476 = sbr.rel (%p1474) target = $region76
    $region75: #{global_local_attention.3} parent=5 // pred_region
      %s1477 = ssub.s32 %s18, 2
      // Predicated region
      $region77: #{global_local_attention.3} parent=75 // pred_check
        %p1478 = pneg %p309
      $region78: #{global_local_attention.3} parent=75 // pred_check_branch
        %1480 = sbr.rel (%p1478) target = $region80
      $region79: #{global_local_attention.3} parent=75 // pred_region
        %p1481 = scmp.lt.s32.totalorder %s24, 1
        %s1482 = scalar_select %p1481, %s24, 1
        %s1483 = smul.addr %s1482, 2
        %s1484 = smul.addr %s1483, 8
        %s1485 = scalar_lea.vmem %s12, %s1484
      $region80: #{global_local_attention.3} parent=75 // pred_fallthru
        _
    $region76: #{global_local_attention.3} parent=5 // pred_fallthru
      _
  $region6: #{global_local_attention.3} parent=0 // loop_footer
    %s22 = sadd.s32 1, %s18
  $region7: #{global_local_attention.3} parent=0 // loop_footer_branch
    %17 = sbr.rel target = $region3
  $region8: #{global_local_attention.3} parent=0 // loop_exit
    _

</llo_original>
